<compile_context>
chip_gen: v7x
topology: tpu7x:2x2x1
jax: 0.10.0
libtpu: 0.0.40
codegen_flags: <defaults>
</compile_context>

<pallas_src>
import jax
import jax.numpy as jnp
import numpy as np
from jax.experimental import pallas as pl
from jax.experimental.pallas import tpu as pltpu

_WPAD = 8                          # left/right pad columns in scratch (sublane aligned stores)
_VMEM_LIMIT = 64 * 1024 * 1024     # <= v7x's 64 MiB physical VMEM, safe everywhere


# ---------------------------------------------------------------------------
# Kernel 1: cross attention over image rows (fused 1x1 convs + bmm + softmax)
#   grid step = R image rows; block = (R, W, C).
# ---------------------------------------------------------------------------
def _attn_kernel(u_ref, d_ref, wu_ref, wd_ref, bufd_ref, bufu_ref):
    u = u_ref[...].astype(jnp.float32)            # (R, W, C)
    d = d_ref[...].astype(jnp.float32)
    c = u.shape[-1]

    # Fused 1x1 convs: one (R*W, C) @ (C, 2C) matmul per input.
    u12 = jnp.einsum("rwc,ck->rwk", u, wu_ref[...],
                     preferred_element_type=jnp.float32)      # (R, W, 2C)
    d12 = jnp.einsum("rwc,ck->rwk", d, wd_ref[...],
                     preferred_element_type=jnp.float32)
    u1, u2 = u12[..., :c], u12[..., c:]
    d1, d2 = d12[..., :c], d12[..., c:]

    # Scores: contract directly on the channel axis (no explicit transpose).
    s_ud = jnp.einsum("rwc,rvc->rwv", u1, d2,
                      preferred_element_type=jnp.float32)     # (R, W, W)
    s_du = jnp.einsum("rwc,rvc->rwv", d1, u2,
                      preferred_element_type=jnp.float32)

    def _softmax(s):
        p = jnp.exp(s - jnp.max(s, axis=-1, keepdims=True))
        return p * pl.reciprocal(jnp.sum(p, axis=-1, keepdims=True), approx=True)

    a_ud = _softmax(s_ud)
    a_du = _softmax(s_du)

    # buffer_d = u_d @ d_rows ; buffer_u = d_u @ u_rows
    bufd = jnp.einsum("rwv,rvc->rwc", a_ud, d,
                      preferred_element_type=jnp.float32)
    bufu = jnp.einsum("rwv,rvc->rwc", a_du, u,
                      preferred_element_type=jnp.float32)
    # TODO(synk): packing the result into a lane-dense (R, W*C) slab requires a
    # minor-dim-merging relayout that Mosaic may reject at small C; keep the
    # natural dot layout (R, W, C) instead.
    bufd_ref[...] = bufd.astype(bufd_ref.dtype)
    bufu_ref[...] = bufu.astype(bufu_ref.dtype)


def _choose_rows_per_step(total_rows, w):
    # Batch rows so the matmul M dim (R*W) reaches a few hundred and the
    # ~0.35us/step grid overhead is amortised; R must divide B*H.
    target = max(1, min(32, 256 // max(w, 1)))
    for cand in range(min(target, total_rows), 0, -1):
        if total_rows % cand == 0:
            return cand
    return 1


def iam_attention(u_nhwc, d_nhwc, wu, wd):
    b, h, w, c = u_nhwc.shape
    rows = b * h
    u_rows = u_nhwc.reshape(rows, w, c)
    d_rows = d_nhwc.reshape(rows, w, c)

    r = _choose_rows_per_step(rows, w)
    row_spec = pl.BlockSpec((r, w, c), lambda i: (i, 0, 0))
    w_spec = pl.BlockSpec((c, 2 * c), lambda i: (0, 0))

    bufd, bufu = pl.pallas_call(
        _attn_kernel,
        out_shape=(jax.ShapeDtypeStruct((rows, w, c), u_nhwc.dtype),
                   jax.ShapeDtypeStruct((rows, w, c), u_nhwc.dtype)),
        grid=(rows // r,),
        in_specs=[row_spec, row_spec, w_spec, w_spec],
        out_specs=(row_spec, row_spec),
        compiler_params=pltpu.CompilerParams(
            dimension_semantics=("parallel",),
            vmem_limit_bytes=_VMEM_LIMIT),
    )(u_rows, d_rows, wu, wd)
    return bufd.reshape(b, h, w, c), bufu.reshape(b, h, w, c)


# ---------------------------------------------------------------------------
# Kernel 2: fused  conv3x3(relu(conv3x3(concat([x, y], C), w1)), w2)
#   grid = (batch, H-tiles); the intermediate and all padding live in VMEM.
# ---------------------------------------------------------------------------
def _fused_conv_kernel(x_ref, xt_ref, xb_ref, y_ref, yt_ref, yb_ref,
                       w1x_ref, w1y_ref, w2_ref, out_ref,
                       xp_ref, yp_ref, h1p_ref):
    t = pl.program_id(1)
    n_t = pl.num_programs(1)
    th, w, cin = x_ref.shape[1], x_ref.shape[2], x_ref.shape[3]
    cmid = w2_ref.shape[2]
    cout = w2_ref.shape[3]
    p0 = _WPAD

    # ---- build zero-padded input tiles in VMEM (no host pad / HBM concat) ---
    xp_ref[...] = jnp.zeros_like(xp_ref)
    yp_ref[...] = jnp.zeros_like(yp_ref)

    xp_ref[2:2 + th, p0:p0 + w, :] = x_ref[0].astype(jnp.float32)
    yp_ref[2:2 + th, p0:p0 + w, :] = y_ref[0].astype(jnp.float32)

    @pl.when(t > 0)                       # 2-row halo above the tile
    def _():
        xp_ref[0:2, p0:p0 + w, :] = xt_ref[0].astype(jnp.float32)
        yp_ref[0:2, p0:p0 + w, :] = yt_ref[0].astype(jnp.float32)

    @pl.when(t + 1 < n_t)                 # 2-row halo below the tile
    def _():
        xp_ref[th + 2:th + 4, p0:p0 + w, :] = xb_ref[0].astype(jnp.float32)
        yp_ref[th + 2:th + 4, p0:p0 + w, :] = yb_ref[0].astype(jnp.float32)

    xp = xp_ref[...]
    yp = yp_ref[...]

    # ---- conv1 on concat([x, y], C) with split weights, fused ReLU ----------
    # NOTE: taps are accumulated as 9+9 dots; a single im2col matmul would need
    # a minor-dim concatenation that Mosaic may reject at small C.
    m1 = (th + 2) * w                     # tile rows + one halo row each side
    acc1 = jnp.zeros((m1, cmid), jnp.float32)
    for dy in range(3):
        for dx in range(3):
            col = p0 - 1 + dx
            px = xp[dy:dy + th + 2, col:col + w, :].reshape(m1, cin)
            py = yp[dy:dy + th + 2, col:col + w, :].reshape(m1, cin)
            acc1 = acc1 + jnp.dot(px, w1x_ref[dy, dx],
                                  preferred_element_type=jnp.float32)
            acc1 = acc1 + jnp.dot(py, w1y_ref[dy, dx],
                                  preferred_element_type=jnp.float32)
    h1 = jnp.maximum(acc1, 0.0).reshape(th + 2, w, cmid)

    # h1 halo rows outside the image are conv2's zero padding -> mask them.
    grow = (jax.lax.broadcasted_iota(jnp.int32, (th + 2, w, cmid), 0)
            + t * th - 1)
    h1 = jnp.where((grow >= 0) & (grow < n_t * th), h1, 0.0)

    h1p_ref[...] = jnp.zeros_like(h1p_ref)
    h1p_ref[:, p0:p0 + w, :] = h1
    h1p = h1p_ref[...]

    # ---- conv2 (intermediate never leaves VMEM) ------------------------------
    m2 = th * w
    acc2 = jnp.zeros((m2, cout), jnp.float32)
    for dy in range(3):
        for dx in range(3):
            col = p0 - 1 + dx
            patch = h1p[dy:dy + th, col:col + w, :].reshape(m2, cmid)
            acc2 = acc2 + jnp.dot(patch, w2_ref[dy, dx],
                                  preferred_element_type=jnp.float32)
    out_ref[0] = acc2.astype(out_ref.dtype)


def _choose_tile_h(h, w):
    # Largest even divisor of H (<= 64 rows) whose output block stays
    # sublane-aligned; bounds the fused working set for v7x's 64 MiB VMEM
    # while amortising per-step overhead.
    for cand in range(min(h, 64), 1, -1):
        if h % cand == 0 and cand % 2 == 0 and (cand * w) % 8 == 0:
            return cand
    return h


def fused_double_conv3x3(x_nhwc, y_nhwc, w1x, w1y, w2):
    """conv3x3(relu(conv3x3(concat([x, y], C), w1)), w2), 'same' padding.

    w1 arrives pre-split (w1x acts on x's channels, w1y on y's), so the channel
    concat never materialises in HBM.
    """
    b, h, w, cin = x_nhwc.shape
    assert h % 2 == 0, "fused conv kernel expects an even image height"
    cmid = w1x.shape[3]
    cout = w2.shape[3]

    th = _choose_tile_h(h, w)
    n_t = h // th
    half = th // 2
    hb = h // 2                           # number of 2-row halo blocks along H

    main_spec = pl.BlockSpec((1, th, w, cin), lambda bi, ti: (bi, ti, 0, 0))
    top_spec = pl.BlockSpec(
        (1, 2, w, cin),
        lambda bi, ti: (bi, jnp.maximum(ti * half - 1, 0), 0, 0))
    bot_spec = pl.BlockSpec(
        (1, 2, w, cin),
        lambda bi, ti: (bi, jnp.minimum((ti + 1) * half, hb - 1), 0, 0))
    w1_spec = pl.BlockSpec((3, 3, cin, cmid), lambda bi, ti: (0, 0, 0, 0))
    w2_spec = pl.BlockSpec((3, 3, cmid, cout), lambda bi, ti: (0, 0, 0, 0))
    out_spec = pl.BlockSpec((1, th * w, cout), lambda bi, ti: (bi, ti, 0))

    out = pl.pallas_call(
        _fused_conv_kernel,
        out_shape=jax.ShapeDtypeStruct((b, h * w, cout), x_nhwc.dtype),
        grid=(b, n_t),
        in_specs=[main_spec, top_spec, bot_spec,
                  main_spec, top_spec, bot_spec,
                  w1_spec, w1_spec, w2_spec],
        out_specs=out_spec,
        scratch_shapes=[
            pltpu.VMEM((th + 4, w + 2 * _WPAD, cin), jnp.float32),   # padded x
            pltpu.VMEM((th + 4, w + 2 * _WPAD, cin), jnp.float32),   # padded y
            pltpu.VMEM((th + 2, w + 2 * _WPAD, cmid), jnp.float32),  # padded h1
        ],
        compiler_params=pltpu.CompilerParams(
            dimension_semantics=("parallel", "parallel"),
            vmem_limit_bytes=_VMEM_LIMIT),
    )(x_nhwc, x_nhwc, x_nhwc, y_nhwc, y_nhwc, y_nhwc, w1x, w1y, w2)
    return out.reshape(b, h, w, cout)


# ---------------------------------------------------------------------------
# Full IAM forward (NCHW in / NCHW out, matching the PyTorch module)
# ---------------------------------------------------------------------------
def iam_forward(u_nchw, d_nchw, params):
    u = jnp.transpose(u_nchw, (0, 2, 3, 1))   # NHWC
    d = jnp.transpose(d_nchw, (0, 2, 3, 1))

    buffer_d, buffer_u = iam_attention(u, d, params["wu"], params["wd"])

    out_u = fused_double_conv3x3(u, buffer_d, params["out1_w1x"],
                                 params["out1_w1y"], params["out1_w2"])
    out_d = fused_double_conv3x3(d, buffer_u, params["out2_w1x"],
                                 params["out2_w1y"], params["out2_w2"])

    return (jnp.transpose(out_u, (0, 3, 1, 2)),
            jnp.transpose(out_d, (0, 3, 1, 2)))


# ---------------------------------------------------------------------------
# Deterministic parameter init (PyTorch weight layouts, converted for kernels)
# ---------------------------------------------------------------------------
def init_params(key, c):
    ks = jax.random.split(key, 8)
    s = 0.1
    raw = {  # PyTorch (OIHW) layouts
        "wu1": jax.random.normal(ks[0], (c, c, 1, 1), jnp.float32) * s,
        "wu2": jax.random.normal(ks[1], (c, c, 1, 1), jnp.float32) * s,
        "wd1": jax.random.normal(ks[2], (c, c, 1, 1), jnp.float32) * s,
        "wd2": jax.random.normal(ks[3], (c, c, 1, 1), jnp.float32) * s,
        "out1_w1": jax.random.normal(ks[4], (c, 2 * c, 3, 3), jnp.float32) * s,
        "out1_w2": jax.random.normal(ks[5], (c, c, 3, 3), jnp.float32) * s,
        "out2_w1": jax.random.normal(ks[6], (c, 2 * c, 3, 3), jnp.float32) * s,
        "out2_w2": jax.random.normal(ks[7], (c, c, 3, 3), jnp.float32) * s,
    }

    def mat1x1(w_):   # (O, I, 1, 1) -> (I, O) matmul weight
        return jnp.transpose(w_[:, :, 0, 0], (1, 0))

    def hwio(w_):     # (O, I, 3, 3) -> (3, 3, I, O)
        return jnp.transpose(w_, (2, 3, 1, 0))

    o1 = hwio(raw["out1_w1"])   # (3, 3, 2C, C)
    o2 = hwio(raw["out2_w1"])
    params = {
        # fused (C, 2C) 1x1-conv weights: [w?1 | w?2]
        "wu": jnp.concatenate([mat1x1(raw["wu1"]), mat1x1(raw["wu2"])], axis=1),
        "wd": jnp.concatenate([mat1x1(raw["wd1"]), mat1x1(raw["wd2"])], axis=1),
        # first 3x3 conv split by which half of the channel concat it reads
        "out1_w1x": o1[:, :, :c, :],
        "out1_w1y": o1[:, :, c:, :],
        "out1_w2": hwio(raw["out1_w2"]),
        "out2_w1x": o2[:, :, :c, :],
        "out2_w1y": o2[:, :, c:, :],
        "out2_w2": hwio(raw["out2_w2"]),
    }
    return params, raw


# ---------------------------------------------------------------------------
# Pure-JAX reference (mirrors the PyTorch code) for correctness checking
# ---------------------------------------------------------------------------
def ref_forward(u, d, raw):
    def conv(x, w, pad):
        return jax.lax.conv_general_dilated(
            x, w, (1, 1), [(pad, pad), (pad, pad)],
            dimension_numbers=("NCHW", "OIHW", "NCHW"))

    b, c, h, w = u.shape
    u1 = jnp.transpose(conv(u, raw["wu1"], 0), (0, 2, 3, 1)).reshape(-1, w, c)
    u2 = jnp.transpose(conv(u, raw["wu2"], 0), (0, 2, 1, 3)).reshape(-1, c, w)
    d1 = jnp.transpose(conv(d, raw["wd1"], 0), (0, 2, 3, 1)).reshape(-1, w, c)
    d2 = jnp.transpose(conv(d, raw["wd2"], 0), (0, 2, 1, 3)).reshape(-1, c, w)

    u_d = jax.nn.softmax(jnp.einsum("bwc,bcv->bwv", u1, d2), axis=-1)
    d_u = jax.nn.softmax(jnp.einsum("bwc,bcv->bwv", d1, u2), axis=-1)

    buf_d = jnp.einsum("bwv,bvc->bwc", u_d,
                       jnp.transpose(d, (0, 2, 3, 1)).reshape(-1, w, c))
    buf_d = jnp.transpose(buf_d.reshape(b, h, w, c), (0, 3, 1, 2))
    buf_u = jnp.einsum("bwv,bvc->bwc", d_u,
                       jnp.transpose(u, (0, 2, 3, 1)).reshape(-1, w, c))
    buf_u = jnp.transpose(buf_u.reshape(b, h, w, c), (0, 3, 1, 2))

    out_u = conv(jnp.maximum(conv(jnp.concatenate([u, buf_d], 1),
                                  raw["out1_w1"], 1), 0.0), raw["out1_w2"], 1)
    out_d = conv(jnp.maximum(conv(jnp.concatenate([d, buf_u], 1),
                                  raw["out2_w1"], 1), 0.0), raw["out2_w2"], 1)
    return out_u, out_d


if __name__ == "__main__":
    B, C, H, W = 2, 4, 8, 8
    key = jax.random.PRNGKey(0)
    ku, kd, kp = jax.random.split(key, 3)
    u = jax.random.normal(ku, (B, C, H, W), jnp.float32)
    d = jax.random.normal(kd, (B, C, H, W), jnp.float32)
    params, raw = init_params(kp, C)

    out_u, out_d = jax.block_until_ready(iam_forward(u, d, params))

    ref_u, ref_d = jax.block_until_ready(ref_forward(u, d, raw))
    # Slightly loose tolerance: the softmax uses the EUP approximate reciprocal.
    np.testing.assert_allclose(np.asarray(out_u), np.asarray(ref_u),
                               rtol=5e-3, atol=5e-3)
    np.testing.assert_allclose(np.asarray(out_d), np.asarray(ref_d),
                               rtol=5e-3, atol=5e-3)
    print("KERNEL_OK")
</pallas_src>

<mosaic_0001>
module attributes {stable_mosaic.version = 11 : i64} {
  func.func @_attn_kernel(%arg0: i32, %arg1: memref<16x8x4xf32, #tpu.memory_space<vmem>>, %arg2: memref<16x8x4xf32, #tpu.memory_space<vmem>>, %arg3: memref<4x8xf32, #tpu.memory_space<vmem>>, %arg4: memref<4x8xf32, #tpu.memory_space<vmem>>, %arg5: memref<16x8x4xf32, #tpu.memory_space<vmem>>, %arg6: memref<16x8x4xf32, #tpu.memory_space<vmem>>) attributes {dimension_semantics = [#tpu.dimension_semantics<parallel>], iteration_bounds = array<i64: 1>, scalar_prefetch = 0 : i64, scratch_operands = 0 : i64, tpu.core_type = #tpu.core_type<tc>, window_params = [{transform_indices = @transform_0, window_bounds = array<i64: 16, 8, 4>}, {transform_indices = @transform_1, window_bounds = array<i64: 16, 8, 4>}, {pipeline_mode = #tpu.pipeline_mode<synchronous>, transform_indices = @transform_2, window_bounds = array<i64: 4, 8>}, {pipeline_mode = #tpu.pipeline_mode<synchronous>, transform_indices = @transform_3, window_bounds = array<i64: 4, 8>}, {transform_indices = @transform_4, window_bounds = array<i64: 16, 8, 4>}, {transform_indices = @transform_5, window_bounds = array<i64: 16, 8, 4>}]} {
    %c0 = arith.constant 0 : index
    %c0_0 = arith.constant 0 : index
    %c0_1 = arith.constant 0 : index
    %0 = vector.load %arg1[%c0, %c0_0, %c0_1] : memref<16x8x4xf32, #tpu.memory_space<vmem>>, vector<16x8x4xf32>
    %c0_2 = arith.constant 0 : index
    %c0_3 = arith.constant 0 : index
    %c0_4 = arith.constant 0 : index
    %1 = vector.load %arg2[%c0_2, %c0_3, %c0_4] : memref<16x8x4xf32, #tpu.memory_space<vmem>>, vector<16x8x4xf32>
    %c0_5 = arith.constant 0 : index
    %c0_6 = arith.constant 0 : index
    %2 = vector.load %arg3[%c0_5, %c0_6] : memref<4x8xf32, #tpu.memory_space<vmem>>, vector<4x8xf32>
    "tpu.trace_start"() <{level = 10 : i32, message = "rwc,ck->rwk"}> : () -> ()
    %cst = arith.constant dense<0.000000e+00> : vector<16x8x8xf32>
    %3 = tpu.matmul %0, %2, %cst {dimension_numbers = #tpu.dot_dimension_numbers<[2], [0], [0, 1], [1], [0, 0, 0, 1, 1, 1], [], []>} : vector<16x8x4xf32>, vector<4x8xf32>, vector<16x8x8xf32> -> vector<16x8x8xf32>
    "tpu.trace_stop"() : () -> ()
    %c0_7 = arith.constant 0 : index
    %c0_8 = arith.constant 0 : index
    %4 = vector.load %arg4[%c0_7, %c0_8] : memref<4x8xf32, #tpu.memory_space<vmem>>, vector<4x8xf32>
    "tpu.trace_start"() <{level = 10 : i32, message = "rwc,ck->rwk"}> : () -> ()
    %cst_9 = arith.constant dense<0.000000e+00> : vector<16x8x8xf32>
    %5 = tpu.matmul %1, %4, %cst_9 {dimension_numbers = #tpu.dot_dimension_numbers<[2], [0], [0, 1], [1], [0, 0, 0, 1, 1, 1], [], []>} : vector<16x8x4xf32>, vector<4x8xf32>, vector<16x8x8xf32> -> vector<16x8x8xf32>
    "tpu.trace_stop"() : () -> ()
    %6 = vector.extract_strided_slice %3 {offsets = [0, 0, 0], sizes = [16, 8, 4], strides = [1, 1, 1]} : vector<16x8x8xf32> to vector<16x8x4xf32>
    %7 = vector.extract_strided_slice %3 {offsets = [0, 0, 4], sizes = [16, 8, 4], strides = [1, 1, 1]} : vector<16x8x8xf32> to vector<16x8x4xf32>
    %8 = vector.extract_strided_slice %5 {offsets = [0, 0, 0], sizes = [16, 8, 4], strides = [1, 1, 1]} : vector<16x8x8xf32> to vector<16x8x4xf32>
    %9 = vector.extract_strided_slice %5 {offsets = [0, 0, 4], sizes = [16, 8, 4], strides = [1, 1, 1]} : vector<16x8x8xf32> to vector<16x8x4xf32>
    "tpu.trace_start"() <{level = 10 : i32, message = "rwc,rvc->rwv"}> : () -> ()
    %cst_10 = arith.constant dense<0.000000e+00> : vector<16x8x8xf32>
    %10 = tpu.matmul %6, %9, %cst_10 {dimension_numbers = #tpu.dot_dimension_numbers<[2], [2], [1], [1], [0, 0, 0, 1, 1, 1], [0], [0]>} : vector<16x8x4xf32>, vector<16x8x4xf32>, vector<16x8x8xf32> -> vector<16x8x8xf32>
    %cst_11 = arith.constant dense<0.000000e+00> : vector<16x8x8xf32>
    %11 = tpu.matmul %8, %7, %cst_11 {dimension_numbers = #tpu.dot_dimension_numbers<[2], [2], [1], [1], [0, 0, 0, 1, 1, 1], [0], [0]>} : vector<16x8x4xf32>, vector<16x8x4xf32>, vector<16x8x8xf32> -> vector<16x8x8xf32>
    "tpu.trace_stop"() : () -> ()
    %cst_12 = arith.constant dense<0xFF800000> : vector<16x8xf32>
    %12 = vector.multi_reduction <maximumf>, %10, %cst_12 [2] : vector<16x8x8xf32> to vector<16x8xf32>
    %13 = vector.shape_cast %12 : vector<16x8xf32> to vector<16x8x1xf32>
    %14 = vector.broadcast %13 : vector<16x8x1xf32> to vector<16x8x8xf32>
    %15 = arith.subf %10, %14 : vector<16x8x8xf32>
    %16 = math.exp %15 : vector<16x8x8xf32>
    %cst_13 = arith.constant dense<0.000000e+00> : vector<16x8xf32>
    %17 = vector.multi_reduction <add>, %16, %cst_13 [2] : vector<16x8x8xf32> to vector<16x8xf32>
    %18 = vector.shape_cast %17 : vector<16x8xf32> to vector<16x8x1xf32>
    %19 = tpu.reciprocal %18 {approx = true} : vector<16x8x1xf32> -> vector<16x8x1xf32>
    %20 = vector.broadcast %19 : vector<16x8x1xf32> to vector<16x8x8xf32>
    %21 = arith.mulf %16, %20 : vector<16x8x8xf32>
    %cst_14 = arith.constant dense<0xFF800000> : vector<16x8xf32>
    %22 = vector.multi_reduction <maximumf>, %11, %cst_14 [2] : vector<16x8x8xf32> to vector<16x8xf32>
    %23 = vector.shape_cast %22 : vector<16x8xf32> to vector<16x8x1xf32>
    %24 = vector.broadcast %23 : vector<16x8x1xf32> to vector<16x8x8xf32>
    %25 = arith.subf %11, %24 : vector<16x8x8xf32>
    %26 = math.exp %25 : vector<16x8x8xf32>
    %cst_15 = arith.constant dense<0.000000e+00> : vector<16x8xf32>
    %27 = vector.multi_reduction <add>, %26, %cst_15 [2] : vector<16x8x8xf32> to vector<16x8xf32>
    %28 = vector.shape_cast %27 : vector<16x8xf32> to vector<16x8x1xf32>
    %29 = tpu.reciprocal %28 {approx = true} : vector<16x8x1xf32> -> vector<16x8x1xf32>
    %30 = vector.broadcast %29 : vector<16x8x1xf32> to vector<16x8x8xf32>
    %31 = arith.mulf %26, %30 : vector<16x8x8xf32>
    "tpu.trace_start"() <{level = 10 : i32, message = "rwv,rvc->rwc"}> : () -> ()
    %cst_16 = arith.constant dense<0.000000e+00> : vector<16x8x4xf32>
    %32 = tpu.matmul %21, %1, %cst_16 {dimension_numbers = #tpu.dot_dimension_numbers<[2], [1], [1], [2], [0, 0, 0, 1, 1, 2], [0], [0]>} : vector<16x8x8xf32>, vector<16x8x4xf32>, vector<16x8x4xf32> -> vector<16x8x4xf32>
    %cst_17 = arith.constant dense<0.000000e+00> : vector<16x8x4xf32>
    %33 = tpu.matmul %31, %0, %cst_17 {dimension_numbers = #tpu.dot_dimension_numbers<[2], [1], [1], [2], [0, 0, 0, 1, 1, 2], [0], [0]>} : vector<16x8x8xf32>, vector<16x8x4xf32>, vector<16x8x4xf32> -> vector<16x8x4xf32>
    "tpu.trace_stop"() : () -> ()
    %c0_18 = arith.constant 0 : index
    %c0_19 = arith.constant 0 : index
    %c0_20 = arith.constant 0 : index
    %34 = vector.load %arg5[%c0_18, %c0_19, %c0_20] : memref<16x8x4xf32, #tpu.memory_space<vmem>>, vector<16x8x4xf32>
    tpu.vector_store %arg5[%c0_18, %c0_19, %c0_20], %32 {strides = array<i32>} : memref<16x8x4xf32, #tpu.memory_space<vmem>>, vector<16x8x4xf32>,
    %c0_21 = arith.constant 0 : index
    %c0_22 = arith.constant 0 : index
    %c0_23 = arith.constant 0 : index
    %35 = vector.load %arg6[%c0_21, %c0_22, %c0_23] : memref<16x8x4xf32, #tpu.memory_space<vmem>>, vector<16x8x4xf32>
    tpu.vector_store %arg6[%c0_21, %c0_22, %c0_23], %33 {strides = array<i32>} : memref<16x8x4xf32, #tpu.memory_space<vmem>>, vector<16x8x4xf32>,
    return
  }
  func.func @transform_0(%arg0: i32) -> (i32, i32, i32) {
    %c0_i32 = arith.constant 0 : i32
    %c0_i32_0 = arith.constant 0 : i32
    %c0_i32_1 = arith.constant 0 : i32
    return %arg0, %c0_i32, %c0_i32_0 : i32, i32, i32
  }
  func.func @transform_1(%arg0: i32) -> (i32, i32, i32) {
    %c0_i32 = arith.constant 0 : i32
    %c0_i32_0 = arith.constant 0 : i32
    %c0_i32_1 = arith.constant 0 : i32
    return %arg0, %c0_i32, %c0_i32_0 : i32, i32, i32
  }
  func.func @transform_2(%arg0: i32) -> (i32, i32) {
    %c0_i32 = arith.constant 0 : i32
    %c0_i32_0 = arith.constant 0 : i32
    %c0_i32_1 = arith.constant 0 : i32
    return %c0_i32, %c0_i32_0 : i32, i32
  }
  func.func @transform_3(%arg0: i32) -> (i32, i32) {
    %c0_i32 = arith.constant 0 : i32
    %c0_i32_0 = arith.constant 0 : i32
    %c0_i32_1 = arith.constant 0 : i32
    return %c0_i32, %c0_i32_0 : i32, i32
  }
  func.func @transform_4(%arg0: i32) -> (i32, i32, i32) {
    %c0_i32 = arith.constant 0 : i32
    %c0_i32_0 = arith.constant 0 : i32
    %c0_i32_1 = arith.constant 0 : i32
    return %arg0, %c0_i32, %c0_i32_0 : i32, i32, i32
  }
  func.func @transform_5(%arg0: i32) -> (i32, i32, i32) {
    %c0_i32 = arith.constant 0 : i32
    %c0_i32_0 = arith.constant 0 : i32
    %c0_i32_1 = arith.constant 0 : i32
    return %arg0, %c0_i32, %c0_i32_0 : i32, i32, i32
  }
}

</mosaic_0001>

<llo_original>
// kernel: tpu_custom_call.1
$region0: #{tpu_custom_call.1}
  #allocation0 [shape = 'u32[]', space=smem, size = 0x4, offset = 0x4, fixed_abs, tag = 'smem constant byte address 0x4 - core index']
  #allocation1 [shape = 'u32[144,128]{1,0:T(1,128)}', space=vmem, size = 0x12000, scoped, tag = 'internal scratch']
  %s0 = inlined_call_operand.hbm [shape: f32[16,8,4], index: 0, kind: input, shape index: {}]
  %s1 = inlined_call_operand.hbm [shape: f32[16,8,4], index: 1, kind: input, shape index: {}]
  %s2 = inlined_call_operand.hbm [shape: f32[4,8], index: 2, kind: input, shape index: {}]
  %s3 = inlined_call_operand.hbm [shape: f32[4,8], index: 3, kind: input, shape index: {}]
  %s4 = inlined_call_operand.hbm [shape: f32[16,8,4], index: 4, kind: output, shape index: {0}]
  %s5 = inlined_call_operand.hbm [shape: f32[16,8,4], index: 5, kind: output, shape index: {1}]
  %6 = xla_tuple %s4, %s5
  %s7 = sld [smem:[#allocation0]]
  $region50: #{tpu_custom_call.1} parent=0
    _
  %s9 = ssub.s32 1, %s7
  %s10 = scalar_select 0, %s9, %s7
  $region1: #{tpu_custom_call.1} parent=0
    #allocation2 [shape = 'u8[65536]{0}', space=vmem, size = 0x10000, scoped, tag = 'input window, operand 0, single buffered']
    #allocation3 [shape = 's32[1]{0}', space=sflag, size = 0x4, scoped, tag = 'scoped memory for tpu_custom_call.1']
    #allocation4 [shape = 's32[1]{0}', space=sflag, size = 0x4, scoped, tag = 'scoped memory for tpu_custom_call.1']
    #allocation5 [shape = 'u8[65536]{0}', space=vmem, size = 0x10000, scoped, tag = 'input window, operand 1, single buffered']
    #allocation6 [shape = 's32[1]{0}', space=sflag, size = 0x4, scoped, tag = 'scoped memory for tpu_custom_call.1']
    #allocation7 [shape = 'u8[2048]{0}', space=vmem, size = 0x800, scoped, tag = 'input window, operand 2, single buffered']
    #allocation8 [shape = 'u8[2048]{0}', space=vmem, size = 0x800, scoped, tag = 'input window, operand 3, single buffered']
    #allocation9 [shape = 's32[1]{0}', space=sflag, size = 0x4, scoped, tag = 'scoped memory for tpu_custom_call.1']
    #allocation10 [shape = 'u8[65536]{0}', space=vmem, size = 0x10000, scoped, tag = 'output window, operand 0, single buffered']
    #allocation11 [shape = 'u8[65536]{0}', space=vmem, size = 0x10000, scoped, tag = 'output window, operand 1, single buffered']
    #allocation12 [shape = 's32[1]{0}', space=sflag, size = 0x4, scoped, tag = 'scoped memory for tpu_custom_call.1']
    %11 = vsyncpa [#allocation3], 0
    %12 = vsyncpa [#allocation6], 0
    %13 = vsyncpa [#allocation9], 0
    %14 = vsyncpa [#allocation4], 0
    %15 = vsyncpa [#allocation12], 0
    // Predicated region
    $region2: #{tpu_custom_call.1} parent=1 // pred_check
      _
    $region3: #{tpu_custom_call.1} parent=1 // pred_check_branch
      %17 = sbr.rel (0) target = $region5
    $region4: #{tpu_custom_call.1} parent=1 // pred_region
      %s19 = ssub.s32 2048, 2048
      %20 = vsyncadd [#allocation3], %s19
      %s21 = sshll.u32 [#allocation2], 4
      %s22 = int_to_ptr.vmem [resolvable:$true] %s21
      %27 = dma.hbm_to_vmem [thread:$0]  %s0, 2048, %s22, [#allocation3], 128, 128, 8
    $region5: #{tpu_custom_call.1} parent=1 // pred_fallthru
      _
    // Predicated region
    $region6: #{tpu_custom_call.1} parent=1 // pred_check
      _
    $region7: #{tpu_custom_call.1} parent=1 // pred_check_branch
      %29 = sbr.rel (0) target = $region9
    $region8: #{tpu_custom_call.1} parent=1 // pred_region
      %s31 = ssub.s32 2048, 2048
      %32 = vsyncadd [#allocation6], %s31
      %s33 = sshll.u32 [#allocation5], 4
      %s34 = int_to_ptr.vmem [resolvable:$true] %s33
      %39 = dma.hbm_to_vmem [thread:$0]  %s1, 2048, %s34, [#allocation6], 128, 128, 8
    $region9: #{tpu_custom_call.1} parent=1 // pred_fallthru
      _
    // Predicated region
    $region10: #{tpu_custom_call.1} parent=1 // pred_check
      _
    $region11: #{tpu_custom_call.1} parent=1 // pred_check_branch
      %41 = sbr.rel (0) target = $region13
    $region12: #{tpu_custom_call.1} parent=1 // pred_region
      %s43 = ssub.s32 64, 64
      %44 = vsyncadd [#allocation6], %s43
      %s46 = sshll.u32 [#allocation7], 4
      %s47 = int_to_ptr.vmem [resolvable:$true] %s46
      %49 = dma.hbm_to_vmem [thread:$0]  %s2, 64, %s47, [#allocation6]
    $region13: #{tpu_custom_call.1} parent=1 // pred_fallthru
      _
    // Predicated region
    $region14: #{tpu_custom_call.1} parent=1 // pred_check
      _
    $region15: #{tpu_custom_call.1} parent=1 // pred_check_branch
      %51 = sbr.rel (0) target = $region17
    $region16: #{tpu_custom_call.1} parent=1 // pred_region
      %s53 = ssub.s32 64, 64
      %54 = vsyncadd [#allocation9], %s53
      %s56 = sshll.u32 [#allocation8], 4
      %s57 = int_to_ptr.vmem [resolvable:$true] %s56
      %59 = dma.hbm_to_vmem [thread:$0]  %s3, 64, %s57, [#allocation9]
    $region17: #{tpu_custom_call.1} parent=1 // pred_fallthru
      _
    // Predicated region
    $region18: #{tpu_custom_call.1} parent=1 // pred_check
      _
    $region19: #{tpu_custom_call.1} parent=1 // pred_check_branch
      %61 = sbr.rel (0) target = $region21
    $region20: #{tpu_custom_call.1} parent=1 // pred_region
      %62 = dma.done [#allocation3], 2048
    $region21: #{tpu_custom_call.1} parent=1 // pred_fallthru
      _
    // Predicated region
    $region22: #{tpu_custom_call.1} parent=1 // pred_check
      _
    $region23: #{tpu_custom_call.1} parent=1 // pred_check_branch
      %64 = sbr.rel (0) target = $region25
    $region24: #{tpu_custom_call.1} parent=1 // pred_region
      %65 = dma.done [#allocation6], 2048
    $region25: #{tpu_custom_call.1} parent=1 // pred_fallthru
      _
    // Predicated region
    $region26: #{tpu_custom_call.1} parent=1 // pred_check
      _
    $region27: #{tpu_custom_call.1} parent=1 // pred_check_branch
      %67 = sbr.rel (0) target = $region29
    $region28: #{tpu_custom_call.1} parent=1 // pred_region
      %68 = dma.done [#allocation6], 64
    $region29: #{tpu_custom_call.1} parent=1 // pred_fallthru
      _
    // Predicated region
    $region30: #{tpu_custom_call.1} parent=1 // pred_check
      _
    $region31: #{tpu_custom_call.1} parent=1 // pred_check_branch
      %70 = sbr.rel (0) target = $region33
    $region32: #{tpu_custom_call.1} parent=1 // pred_region
      %71 = dma.done [#allocation9], 64
    $region33: #{tpu_custom_call.1} parent=1 // pred_fallthru
      _
    %v72 = vld [vmem:[#allocation2] sm:$0xff]
    %v73 = vld [vmem:[#allocation2 + $0x8] sm:$0xff]
    %v74 = vld [vmem:[#allocation2 + $0x10] sm:$0xff]
    %v75 = vld [vmem:[#allocation2 + $0x18] sm:$0xff]
    %v76 = vld [vmem:[#allocation2 + $0x20] sm:$0xff]
    %v77 = vld [vmem:[#allocation2 + $0x28] sm:$0xff]
    %v78 = vld [vmem:[#allocation2 + $0x30] sm:$0xff]
    %v79 = vld [vmem:[#allocation2 + $0x38] sm:$0xff]
    %v80 = vld [vmem:[#allocation2 + $0x40] sm:$0xff]
    %v81 = vld [vmem:[#allocation2 + $0x48] sm:$0xff]
    %v82 = vld [vmem:[#allocation2 + $0x50] sm:$0xff]
    %v83 = vld [vmem:[#allocation2 + $0x58] sm:$0xff]
    %v84 = vld [vmem:[#allocation2 + $0x60] sm:$0xff]
    %v85 = vld [vmem:[#allocation2 + $0x68] sm:$0xff]
    %v86 = vld [vmem:[#allocation2 + $0x70] sm:$0xff]
    %v87 = vld [vmem:[#allocation2 + $0x78] sm:$0xff]
    %v88 = vld [vmem:[#allocation5] sm:$0xff]
    %v89 = vld [vmem:[#allocation5 + $0x8] sm:$0xff]
    %v90 = vld [vmem:[#allocation5 + $0x10] sm:$0xff]
    %v91 = vld [vmem:[#allocation5 + $0x18] sm:$0xff]
    %v92 = vld [vmem:[#allocation5 + $0x20] sm:$0xff]
    %v93 = vld [vmem:[#allocation5 + $0x28] sm:$0xff]
    %v94 = vld [vmem:[#allocation5 + $0x30] sm:$0xff]
    %v95 = vld [vmem:[#allocation5 + $0x38] sm:$0xff]
    %v96 = vld [vmem:[#allocation5 + $0x40] sm:$0xff]
    %v97 = vld [vmem:[#allocation5 + $0x48] sm:$0xff]
    %v98 = vld [vmem:[#allocation5 + $0x50] sm:$0xff]
    %v99 = vld [vmem:[#allocation5 + $0x58] sm:$0xff]
    %v100 = vld [vmem:[#allocation5 + $0x60] sm:$0xff]
    %v101 = vld [vmem:[#allocation5 + $0x68] sm:$0xff]
    %v102 = vld [vmem:[#allocation5 + $0x70] sm:$0xff]
    %v103 = vld [vmem:[#allocation5 + $0x78] sm:$0xff]
    %v104 = vld [vmem:[#allocation7] sm:$0xf]
    %vm105 = vcmask 31744
    %v107 = vsel %vm105, %v72, 0
    %v110 = vsel %vm105, %v73, 0
    %v113 = vsel %vm105, %v74, 0
    %v116 = vsel %vm105, %v75, 0
    %v119 = vsel %vm105, %v76, 0
    %v122 = vsel %vm105, %v77, 0
    %v125 = vsel %vm105, %v78, 0
    %v128 = vsel %vm105, %v79, 0
    %v131 = vsel %vm105, %v80, 0
    %v134 = vsel %vm105, %v81, 0
    %v137 = vsel %vm105, %v82, 0
    %v140 = vsel %vm105, %v83, 0
    %v143 = vsel %vm105, %v84, 0
    %v146 = vsel %vm105, %v85, 0
    %v149 = vsel %vm105, %v86, 0
    %v152 = vsel %vm105, %v87, 0
    %vm154 = vcmask 1043456
    %v156 = vsel %vm154, %v104, 0
    %158 = vmatprep.subr.mxu0 0.0
    %159 = vmatpush1.msra.mxu0 %v156
    %160 = vmatprep.subr.mxu0 0.0
    %161 = vmatpush1.msra.mxu0 0.0
    %162 = vmatprep.subr.mxu0 0.0
    %163 = vmatpush1.msra.mxu0 0.0
    %164 = vmatprep.subr.mxu0 0.0
    %165 = vmatpush1.msra.mxu0 0.0
    %166 = vmatprep.subr.mxu0 0.0
    %167 = vmatpush1.msra.mxu0 0.0
    %168 = vmatprep.subr.mxu0 0.0
    %169 = vmatpush1.msra.mxu0 0.0
    %170 = vmatprep.subr.mxu0 0.0
    %171 = vmatpush1.msra.mxu0 0.0
    %172 = vmatprep.subr.mxu0 0.0
    %173 = vmatpush1.msra.mxu0 0.0
    %174 = vmatprep.subr.mxu0 0.0
    %175 = vmatpush1.msra.mxu0 0.0
    %176 = vmatprep.subr.mxu0 0.0
    %177 = vmatpush1.msra.mxu0 0.0
    %178 = vmatprep.subr.mxu0 0.0
    %179 = vmatpush1.msra.mxu0 0.0
    %180 = vmatprep.subr.mxu0 0.0
    %181 = vmatpush1.msra.mxu0 0.0
    %182 = vmatprep.subr.mxu0 0.0
    %183 = vmatpush1.msra.mxu0 0.0
    %184 = vmatprep.subr.mxu0 0.0
    %185 = vmatpush1.msra.mxu0 0.0
    %186 = vmatprep.subr.mxu0 0.0
    %187 = vmatpush1.msra.mxu0 0.0
    %188 = vmatprep.subr.mxu0 0.0
    %189 = vmatpush1.msra.mxu0 0.0
    %190 = vmatprep.subr.mxu0 0.0
    %191 = vmatpush1.msra.mxu0 0.0
    %192 = vmatprep.subr.mxu0 0.0
    %193 = vmatpush1.msra.mxu0 0.0
    %194 = vmatprep.subr.mxu0 0.0
    %195 = vmatpush1.msra.mxu0 0.0
    %196 = vmatprep.subr.mxu0 0.0
    %197 = vmatpush1.msra.mxu0 0.0
    %198 = vmatprep.subr.mxu0 0.0
    %199 = vmatpush1.msra.mxu0 0.0
    %200 = vmatprep.subr.mxu0 0.0
    %201 = vmatpush1.msra.mxu0 0.0
    %202 = vmatprep.subr.mxu0 0.0
    %203 = vmatpush1.msra.mxu0 0.0
    %204 = vmatprep.subr.mxu0 0.0
    %205 = vmatpush1.msra.mxu0 0.0
    %206 = vmatprep.subr.mxu0 0.0
    %207 = vmatpush1.msra.mxu0 0.0
    %208 = vmatprep.subr.mxu0 0.0
    %209 = vmatpush1.msra.mxu0 0.0
    %210 = vmatprep.subr.mxu0 0.0
    %211 = vmatpush1.msra.mxu0 0.0
    %212 = vmatprep.subr.mxu0 0.0
    %213 = vmatpush1.msra.mxu0 0.0
    %214 = vmatprep.subr.mxu0 0.0
    %215 = vmatpush1.msra.mxu0 0.0
    %216 = vmatprep.subr.mxu0 0.0
    %217 = vmatpush1.msra.mxu0 0.0
    %218 = vmatprep.subr.mxu0 0.0
    %219 = vmatpush1.msra.mxu0 0.0
    %220 = vmatprep.subr.mxu0 0.0
    %221 = vmatpush1.msra.mxu0 0.0
    %222 = vmatprep.mubr.f32.mxu0 0.0
    %223 = vmatmul.mubr.f32.gmra.mrb[0].mxu0 %v107
    %v224 = vpop.f32.mrb[0].mxu0
    %v225 = vadd.f32 0.0, %v224
    %v226 = vpop.f32.mrb[0].mxu0
    %227 = vmatprep.mubr.f32.mxu0 0.0
    %228 = vmatmul.mubr.f32.gmra.mrb[0].mxu0 %v110
    %v229 = vpop.f32.mrb[0].mxu0
    %v230 = vadd.f32 0.0, %v229
    %v231 = vpop.f32.mrb[0].mxu0
    %232 = vmatprep.mubr.f32.mxu0 0.0
    %233 = vmatmul.mubr.f32.gmra.mrb[0].mxu0 %v113
    %v234 = vpop.f32.mrb[0].mxu0
    %v235 = vadd.f32 0.0, %v234
    %v236 = vpop.f32.mrb[0].mxu0
    %237 = vmatprep.mubr.f32.mxu0 0.0
    %238 = vmatmul.mubr.f32.gmra.mrb[0].mxu0 %v116
    %v239 = vpop.f32.mrb[0].mxu0
    %v240 = vadd.f32 0.0, %v239
    %v241 = vpop.f32.mrb[0].mxu0
    %242 = vmatprep.mubr.f32.mxu0 0.0
    %243 = vmatmul.mubr.f32.gmra.mrb[0].mxu0 %v119
    %v244 = vpop.f32.mrb[0].mxu0
    %v245 = vadd.f32 0.0, %v244
    %v246 = vpop.f32.mrb[0].mxu0
    %247 = vmatprep.mubr.f32.mxu0 0.0
    %248 = vmatmul.mubr.f32.gmra.mrb[0].mxu0 %v122
    %v249 = vpop.f32.mrb[0].mxu0
    %v250 = vadd.f32 0.0, %v249
    %v251 = vpop.f32.mrb[0].mxu0
    %252 = vmatprep.mubr.f32.mxu0 0.0
    %253 = vmatmul.mubr.f32.gmra.mrb[0].mxu0 %v125
    %v254 = vpop.f32.mrb[0].mxu0
    %v255 = vadd.f32 0.0, %v254
    %v256 = vpop.f32.mrb[0].mxu0
    %257 = vmatprep.mubr.f32.mxu0 0.0
    %258 = vmatmul.mubr.f32.gmra.mrb[0].mxu0 %v128
    %v259 = vpop.f32.mrb[0].mxu0
    %v260 = vadd.f32 0.0, %v259
    %v261 = vpop.f32.mrb[0].mxu0
    %262 = vmatprep.mubr.f32.mxu0 0.0
    %263 = vmatmul.mubr.f32.gmra.mrb[0].mxu0 %v131
    %v264 = vpop.f32.mrb[0].mxu0
    %v265 = vadd.f32 0.0, %v264
    %v266 = vpop.f32.mrb[0].mxu0
    %267 = vmatprep.mubr.f32.mxu0 0.0
    %268 = vmatmul.mubr.f32.gmra.mrb[0].mxu0 %v134
    %v269 = vpop.f32.mrb[0].mxu0
    %v270 = vadd.f32 0.0, %v269
    %v271 = vpop.f32.mrb[0].mxu0
    %272 = vmatprep.mubr.f32.mxu0 0.0
    %273 = vmatmul.mubr.f32.gmra.mrb[0].mxu0 %v137
    %v274 = vpop.f32.mrb[0].mxu0
    %v275 = vadd.f32 0.0, %v274
    %v276 = vpop.f32.mrb[0].mxu0
    %277 = vmatprep.mubr.f32.mxu0 0.0
    %278 = vmatmul.mubr.f32.gmra.mrb[0].mxu0 %v140
    %v279 = vpop.f32.mrb[0].mxu0
    %v280 = vadd.f32 0.0, %v279
    %v281 = vpop.f32.mrb[0].mxu0
    %282 = vmatprep.mubr.f32.mxu0 0.0
    %283 = vmatmul.mubr.f32.gmra.mrb[0].mxu0 %v143
    %v284 = vpop.f32.mrb[0].mxu0
    %v285 = vadd.f32 0.0, %v284
    %v286 = vpop.f32.mrb[0].mxu0
    %287 = vmatprep.mubr.f32.mxu0 0.0
    %288 = vmatmul.mubr.f32.gmra.mrb[0].mxu0 %v146
    %v289 = vpop.f32.mrb[0].mxu0
    %v290 = vadd.f32 0.0, %v289
    %v291 = vpop.f32.mrb[0].mxu0
    %292 = vmatprep.mubr.f32.mxu0 0.0
    %293 = vmatmul.mubr.f32.gmra.mrb[0].mxu0 %v149
    %v294 = vpop.f32.mrb[0].mxu0
    %v295 = vadd.f32 0.0, %v294
    %v296 = vpop.f32.mrb[0].mxu0
    %297 = vmatprep.mubr.f32.mxu0 0.0
    %298 = vmatmul.mubr.f32.gmra.mrb[0].mxu0 %v152
    %v299 = vpop.f32.mrb[0].mxu0
    %v300 = vadd.f32 0.0, %v299
    %v301 = vpop.f32.mrb[0].mxu0
    %302 = vdwg.mxu0
    %v303 = vld [vmem:[#allocation8] sm:$0xf]
    %v305 = vsel %vm105, %v88, 0
    %v308 = vsel %vm105, %v89, 0
    %v311 = vsel %vm105, %v90, 0
    %v314 = vsel %vm105, %v91, 0
    %v317 = vsel %vm105, %v92, 0
    %v320 = vsel %vm105, %v93, 0
    %v323 = vsel %vm105, %v94, 0
    %v326 = vsel %vm105, %v95, 0
    %v329 = vsel %vm105, %v96, 0
    %v332 = vsel %vm105, %v97, 0
    %v335 = vsel %vm105, %v98, 0
    %v338 = vsel %vm105, %v99, 0
    %v341 = vsel %vm105, %v100, 0
    %v344 = vsel %vm105, %v101, 0
    %v347 = vsel %vm105, %v102, 0
    %v350 = vsel %vm105, %v103, 0
    %v353 = vsel %vm154, %v303, 0
    %355 = vmatprep.subr.mxu0 0.0
    %356 = vmatpush1.msra.mxu0 %v353
    %357 = vmatprep.subr.mxu0 0.0
    %358 = vmatpush1.msra.mxu0 0.0
    %359 = vmatprep.subr.mxu0 0.0
    %360 = vmatpush1.msra.mxu0 0.0
    %361 = vmatprep.subr.mxu0 0.0
    %362 = vmatpush1.msra.mxu0 0.0
    %363 = vmatprep.subr.mxu0 0.0
    %364 = vmatpush1.msra.mxu0 0.0
    %365 = vmatprep.subr.mxu0 0.0
    %366 = vmatpush1.msra.mxu0 0.0
    %367 = vmatprep.subr.mxu0 0.0
    %368 = vmatpush1.msra.mxu0 0.0
    %369 = vmatprep.subr.mxu0 0.0
    %370 = vmatpush1.msra.mxu0 0.0
    %371 = vmatprep.subr.mxu0 0.0
    %372 = vmatpush1.msra.mxu0 0.0
    %373 = vmatprep.subr.mxu0 0.0
    %374 = vmatpush1.msra.mxu0 0.0
    %375 = vmatprep.subr.mxu0 0.0
    %376 = vmatpush1.msra.mxu0 0.0
    %377 = vmatprep.subr.mxu0 0.0
    %378 = vmatpush1.msra.mxu0 0.0
    %379 = vmatprep.subr.mxu0 0.0
    %380 = vmatpush1.msra.mxu0 0.0
    %381 = vmatprep.subr.mxu0 0.0
    %382 = vmatpush1.msra.mxu0 0.0
    %383 = vmatprep.subr.mxu0 0.0
    %384 = vmatpush1.msra.mxu0 0.0
    %385 = vmatprep.subr.mxu0 0.0
    %386 = vmatpush1.msra.mxu0 0.0
    %387 = vmatprep.subr.mxu0 0.0
    %388 = vmatpush1.msra.mxu0 0.0
    %389 = vmatprep.subr.mxu0 0.0
    %390 = vmatpush1.msra.mxu0 0.0
    %391 = vmatprep.subr.mxu0 0.0
    %392 = vmatpush1.msra.mxu0 0.0
    %393 = vmatprep.subr.mxu0 0.0
    %394 = vmatpush1.msra.mxu0 0.0
    %395 = vmatprep.subr.mxu0 0.0
    %396 = vmatpush1.msra.mxu0 0.0
    %397 = vmatprep.subr.mxu0 0.0
    %398 = vmatpush1.msra.mxu0 0.0
    %399 = vmatprep.subr.mxu0 0.0
    %400 = vmatpush1.msra.mxu0 0.0
    %401 = vmatprep.subr.mxu0 0.0
    %402 = vmatpush1.msra.mxu0 0.0
    %403 = vmatprep.subr.mxu0 0.0
    %404 = vmatpush1.msra.mxu0 0.0
    %405 = vmatprep.subr.mxu0 0.0
    %406 = vmatpush1.msra.mxu0 0.0
    %407 = vmatprep.subr.mxu0 0.0
    %408 = vmatpush1.msra.mxu0 0.0
    %409 = vmatprep.subr.mxu0 0.0
    %410 = vmatpush1.msra.mxu0 0.0
    %411 = vmatprep.subr.mxu0 0.0
    %412 = vmatpush1.msra.mxu0 0.0
    %413 = vmatprep.subr.mxu0 0.0
    %414 = vmatpush1.msra.mxu0 0.0
    %415 = vmatprep.subr.mxu0 0.0
    %416 = vmatpush1.msra.mxu0 0.0
    %417 = vmatprep.subr.mxu0 0.0
    %418 = vmatpush1.msra.mxu0 0.0
    %419 = vmatprep.mubr.f32.mxu0 0.0
    %420 = vmatmul.mubr.f32.gmra.mrb[0].mxu0 %v305
    %v421 = vpop.f32.mrb[0].mxu0
    %v422 = vadd.f32 0.0, %v421
    %v423 = vpop.f32.mrb[0].mxu0
    %424 = vmatprep.mubr.f32.mxu0 0.0
    %425 = vmatmul.mubr.f32.gmra.mrb[0].mxu0 %v308
    %v426 = vpop.f32.mrb[0].mxu0
    %v427 = vadd.f32 0.0, %v426
    %v428 = vpop.f32.mrb[0].mxu0
    %429 = vmatprep.mubr.f32.mxu0 0.0
    %430 = vmatmul.mubr.f32.gmra.mrb[0].mxu0 %v311
    %v431 = vpop.f32.mrb[0].mxu0
    %v432 = vadd.f32 0.0, %v431
    %v433 = vpop.f32.mrb[0].mxu0
    %434 = vmatprep.mubr.f32.mxu0 0.0
    %435 = vmatmul.mubr.f32.gmra.mrb[0].mxu0 %v314
    %v436 = vpop.f32.mrb[0].mxu0
    %v437 = vadd.f32 0.0, %v436
    %v438 = vpop.f32.mrb[0].mxu0
    %439 = vmatprep.mubr.f32.mxu0 0.0
    %440 = vmatmul.mubr.f32.gmra.mrb[0].mxu0 %v317
    %v441 = vpop.f32.mrb[0].mxu0
    %v442 = vadd.f32 0.0, %v441
    %v443 = vpop.f32.mrb[0].mxu0
    %444 = vmatprep.mubr.f32.mxu0 0.0
    %445 = vmatmul.mubr.f32.gmra.mrb[0].mxu0 %v320
    %v446 = vpop.f32.mrb[0].mxu0
    %v447 = vadd.f32 0.0, %v446
    %v448 = vpop.f32.mrb[0].mxu0
    %449 = vmatprep.mubr.f32.mxu0 0.0
    %450 = vmatmul.mubr.f32.gmra.mrb[0].mxu0 %v323
    %v451 = vpop.f32.mrb[0].mxu0
    %v452 = vadd.f32 0.0, %v451
    %v453 = vpop.f32.mrb[0].mxu0
    %454 = vmatprep.mubr.f32.mxu0 0.0
    %455 = vmatmul.mubr.f32.gmra.mrb[0].mxu0 %v326
    %v456 = vpop.f32.mrb[0].mxu0
    %v457 = vadd.f32 0.0, %v456
    %v458 = vpop.f32.mrb[0].mxu0
    %459 = vmatprep.mubr.f32.mxu0 0.0
    %460 = vmatmul.mubr.f32.gmra.mrb[0].mxu0 %v329
    %v461 = vpop.f32.mrb[0].mxu0
    %v462 = vadd.f32 0.0, %v461
    %v463 = vpop.f32.mrb[0].mxu0
    %464 = vmatprep.mubr.f32.mxu0 0.0
    %465 = vmatmul.mubr.f32.gmra.mrb[0].mxu0 %v332
    %v466 = vpop.f32.mrb[0].mxu0
    %v467 = vadd.f32 0.0, %v466
    %v468 = vpop.f32.mrb[0].mxu0
    %469 = vmatprep.mubr.f32.mxu0 0.0
    %470 = vmatmul.mubr.f32.gmra.mrb[0].mxu0 %v335
    %v471 = vpop.f32.mrb[0].mxu0
    %v472 = vadd.f32 0.0, %v471
    %v473 = vpop.f32.mrb[0].mxu0
    %474 = vmatprep.mubr.f32.mxu0 0.0
    %475 = vmatmul.mubr.f32.gmra.mrb[0].mxu0 %v338
    %v476 = vpop.f32.mrb[0].mxu0
    %v477 = vadd.f32 0.0, %v476
    %v478 = vpop.f32.mrb[0].mxu0
    %479 = vmatprep.mubr.f32.mxu0 0.0
    %480 = vmatmul.mubr.f32.gmra.mrb[0].mxu0 %v341
    %v481 = vpop.f32.mrb[0].mxu0
    %v482 = vadd.f32 0.0, %v481
    %v483 = vpop.f32.mrb[0].mxu0
    %484 = vmatprep.mubr.f32.mxu0 0.0
    %485 = vmatmul.mubr.f32.gmra.mrb[0].mxu0 %v344
    %v486 = vpop.f32.mrb[0].mxu0
    %v487 = vadd.f32 0.0, %v486
    %v488 = vpop.f32.mrb[0].mxu0
    %489 = vmatprep.mubr.f32.mxu0 0.0
    %490 = vmatmul.mubr.f32.gmra.mrb[0].mxu0 %v347
    %v491 = vpop.f32.mrb[0].mxu0
    %v492 = vadd.f32 0.0, %v491
    %v493 = vpop.f32.mrb[0].mxu0
    %494 = vmatprep.mubr.f32.mxu0 0.0
    %495 = vmatmul.mubr.f32.gmra.mrb[0].mxu0 %v350
    %v496 = vpop.f32.mrb[0].mxu0
    %v497 = vadd.f32 0.0, %v496
    %v498 = vpop.f32.mrb[0].mxu0
    %499 = vdwg.mxu0
    %501 = vrot.lane.b32.xlu0 %v422, 124
    %v502 = vpop.permute.xlu0 %501
    %v504 = vsel %vm105, %v225, 0
    %v506 = vsel %vm105, %v502, 0
    %508 = vmatprep.subr.mxu0 0.0
    %509 = vmatpush1.xpose.msra.mxu0 %v506
    %510 = vmatprep.subr.mxu0 0.0
    %511 = vmatpush1.xpose.msra.mxu0 0.0
    %512 = vmatprep.subr.mxu0 0.0
    %513 = vmatpush1.xpose.msra.mxu0 0.0
    %514 = vmatprep.subr.mxu0 0.0
    %515 = vmatpush1.xpose.msra.mxu0 0.0
    %516 = vmatprep.subr.mxu0 0.0
    %517 = vmatpush1.xpose.msra.mxu0 0.0
    %518 = vmatprep.subr.mxu0 0.0
    %519 = vmatpush1.xpose.msra.mxu0 0.0
    %520 = vmatprep.subr.mxu0 0.0
    %521 = vmatpush1.xpose.msra.mxu0 0.0
    %522 = vmatprep.subr.mxu0 0.0
    %523 = vmatpush1.xpose.msra.mxu0 0.0
    %524 = vmatprep.subr.mxu0 0.0
    %525 = vmatpush1.xpose.msra.mxu0 0.0
    %526 = vmatprep.subr.mxu0 0.0
    %527 = vmatpush1.xpose.msra.mxu0 0.0
    %528 = vmatprep.subr.mxu0 0.0
    %529 = vmatpush1.xpose.msra.mxu0 0.0
    %530 = vmatprep.subr.mxu0 0.0
    %531 = vmatpush1.xpose.msra.mxu0 0.0
    %532 = vmatprep.subr.mxu0 0.0
    %533 = vmatpush1.xpose.msra.mxu0 0.0
    %534 = vmatprep.subr.mxu0 0.0
    %535 = vmatpush1.xpose.msra.mxu0 0.0
    %536 = vmatprep.subr.mxu0 0.0
    %537 = vmatpush1.xpose.msra.mxu0 0.0
    %538 = vmatprep.subr.mxu0 0.0
    %539 = vmatpush1.xpose.msra.mxu0 0.0
    %540 = vmatprep.subr.mxu0 0.0
    %541 = vmatpush1.xpose.msra.mxu0 0.0
    %542 = vmatprep.subr.mxu0 0.0
    %543 = vmatpush1.xpose.msra.mxu0 0.0
    %544 = vmatprep.subr.mxu0 0.0
    %545 = vmatpush1.xpose.msra.mxu0 0.0
    %546 = vmatprep.subr.mxu0 0.0
    %547 = vmatpush1.xpose.msra.mxu0 0.0
    %548 = vmatprep.subr.mxu0 0.0
    %549 = vmatpush1.xpose.msra.mxu0 0.0
    %550 = vmatprep.subr.mxu0 0.0
    %551 = vmatpush1.xpose.msra.mxu0 0.0
    %552 = vmatprep.subr.mxu0 0.0
    %553 = vmatpush1.xpose.msra.mxu0 0.0
    %554 = vmatprep.subr.mxu0 0.0
    %555 = vmatpush1.xpose.msra.mxu0 0.0
    %556 = vmatprep.subr.mxu0 0.0
    %557 = vmatpush1.xpose.msra.mxu0 0.0
    %558 = vmatprep.subr.mxu0 0.0
    %559 = vmatpush1.xpose.msra.mxu0 0.0
    %560 = vmatprep.subr.mxu0 0.0
    %561 = vmatpush1.xpose.msra.mxu0 0.0
    %562 = vmatprep.subr.mxu0 0.0
    %563 = vmatpush1.xpose.msra.mxu0 0.0
    %564 = vmatprep.subr.mxu0 0.0
    %565 = vmatpush1.xpose.msra.mxu0 0.0
    %566 = vmatprep.subr.mxu0 0.0
    %567 = vmatpush1.xpose.msra.mxu0 0.0
    %568 = vmatprep.subr.mxu0 0.0
    %569 = vmatpush1.xpose.msra.mxu0 0.0
    %570 = vmatprep.subr.mxu0 0.0
    %571 = vmatpush1.xpose.msra.mxu0 0.0
    %572 = vmatprep.mubr.f32.mxu0 0.0
    %573 = vmatmul.mubr.f32.gmra.mrb[0].mxu0 %v504
    %v574 = vpop.f32.mrb[0].mxu0
    %v575 = vadd.f32 0.0, %v574
    %v576 = vpop.f32.mrb[0].mxu0
    %577 = vdwg.mxu0
    %579 = vrot.lane.b32.xlu0 %v427, 124
    %v580 = vpop.permute.xlu0 %579
    %v582 = vsel %vm105, %v230, 0
    %v584 = vsel %vm105, %v580, 0
    %586 = vmatprep.subr.mxu0 0.0
    %587 = vmatpush1.xpose.msra.mxu0 %v584
    %588 = vmatprep.subr.mxu0 0.0
    %589 = vmatpush1.xpose.msra.mxu0 0.0
    %590 = vmatprep.subr.mxu0 0.0
    %591 = vmatpush1.xpose.msra.mxu0 0.0
    %592 = vmatprep.subr.mxu0 0.0
    %593 = vmatpush1.xpose.msra.mxu0 0.0
    %594 = vmatprep.subr.mxu0 0.0
    %595 = vmatpush1.xpose.msra.mxu0 0.0
    %596 = vmatprep.subr.mxu0 0.0
    %597 = vmatpush1.xpose.msra.mxu0 0.0
    %598 = vmatprep.subr.mxu0 0.0
    %599 = vmatpush1.xpose.msra.mxu0 0.0
    %600 = vmatprep.subr.mxu0 0.0
    %601 = vmatpush1.xpose.msra.mxu0 0.0
    %602 = vmatprep.subr.mxu0 0.0
    %603 = vmatpush1.xpose.msra.mxu0 0.0
    %604 = vmatprep.subr.mxu0 0.0
    %605 = vmatpush1.xpose.msra.mxu0 0.0
    %606 = vmatprep.subr.mxu0 0.0
    %607 = vmatpush1.xpose.msra.mxu0 0.0
    %608 = vmatprep.subr.mxu0 0.0
    %609 = vmatpush1.xpose.msra.mxu0 0.0
    %610 = vmatprep.subr.mxu0 0.0
    %611 = vmatpush1.xpose.msra.mxu0 0.0
    %612 = vmatprep.subr.mxu0 0.0
    %613 = vmatpush1.xpose.msra.mxu0 0.0
    %614 = vmatprep.subr.mxu0 0.0
    %615 = vmatpush1.xpose.msra.mxu0 0.0
    %616 = vmatprep.subr.mxu0 0.0
    %617 = vmatpush1.xpose.msra.mxu0 0.0
    %618 = vmatprep.subr.mxu0 0.0
    %619 = vmatpush1.xpose.msra.mxu0 0.0
    %620 = vmatprep.subr.mxu0 0.0
    %621 = vmatpush1.xpose.msra.mxu0 0.0
    %622 = vmatprep.subr.mxu0 0.0
    %623 = vmatpush1.xpose.msra.mxu0 0.0
    %624 = vmatprep.subr.mxu0 0.0
    %625 = vmatpush1.xpose.msra.mxu0 0.0
    %626 = vmatprep.subr.mxu0 0.0
    %627 = vmatpush1.xpose.msra.mxu0 0.0
    %628 = vmatprep.subr.mxu0 0.0
    %629 = vmatpush1.xpose.msra.mxu0 0.0
    %630 = vmatprep.subr.mxu0 0.0
    %631 = vmatpush1.xpose.msra.mxu0 0.0
    %632 = vmatprep.subr.mxu0 0.0
    %633 = vmatpush1.xpose.msra.mxu0 0.0
    %634 = vmatprep.subr.mxu0 0.0
    %635 = vmatpush1.xpose.msra.mxu0 0.0
    %636 = vmatprep.subr.mxu0 0.0
    %637 = vmatpush1.xpose.msra.mxu0 0.0
    %638 = vmatprep.subr.mxu0 0.0
    %639 = vmatpush1.xpose.msra.mxu0 0.0
    %640 = vmatprep.subr.mxu0 0.0
    %641 = vmatpush1.xpose.msra.mxu0 0.0
    %642 = vmatprep.subr.mxu0 0.0
    %643 = vmatpush1.xpose.msra.mxu0 0.0
    %644 = vmatprep.subr.mxu0 0.0
    %645 = vmatpush1.xpose.msra.mxu0 0.0
    %646 = vmatprep.subr.mxu0 0.0
    %647 = vmatpush1.xpose.msra.mxu0 0.0
    %648 = vmatprep.subr.mxu0 0.0
    %649 = vmatpush1.xpose.msra.mxu0 0.0
    %650 = vmatprep.mubr.f32.mxu0 0.0
    %651 = vmatmul.mubr.f32.gmra.mrb[0].mxu0 %v582
    %v652 = vpop.f32.mrb[0].mxu0
    %v653 = vadd.f32 0.0, %v652
    %v654 = vpop.f32.mrb[0].mxu0
    %655 = vdwg.mxu0
    %657 = vrot.lane.b32.xlu0 %v432, 124
    %v658 = vpop.permute.xlu0 %657
    %v660 = vsel %vm105, %v235, 0
    %v662 = vsel %vm105, %v658, 0
    %664 = vmatprep.subr.mxu0 0.0
    %665 = vmatpush1.xpose.msra.mxu0 %v662
    %666 = vmatprep.subr.mxu0 0.0
    %667 = vmatpush1.xpose.msra.mxu0 0.0
    %668 = vmatprep.subr.mxu0 0.0
    %669 = vmatpush1.xpose.msra.mxu0 0.0
    %670 = vmatprep.subr.mxu0 0.0
    %671 = vmatpush1.xpose.msra.mxu0 0.0
    %672 = vmatprep.subr.mxu0 0.0
    %673 = vmatpush1.xpose.msra.mxu0 0.0
    %674 = vmatprep.subr.mxu0 0.0
    %675 = vmatpush1.xpose.msra.mxu0 0.0
    %676 = vmatprep.subr.mxu0 0.0
    %677 = vmatpush1.xpose.msra.mxu0 0.0
    %678 = vmatprep.subr.mxu0 0.0
    %679 = vmatpush1.xpose.msra.mxu0 0.0
    %680 = vmatprep.subr.mxu0 0.0
    %681 = vmatpush1.xpose.msra.mxu0 0.0
    %682 = vmatprep.subr.mxu0 0.0
    %683 = vmatpush1.xpose.msra.mxu0 0.0
    %684 = vmatprep.subr.mxu0 0.0
    %685 = vmatpush1.xpose.msra.mxu0 0.0
    %686 = vmatprep.subr.mxu0 0.0
    %687 = vmatpush1.xpose.msra.mxu0 0.0
    %688 = vmatprep.subr.mxu0 0.0
    %689 = vmatpush1.xpose.msra.mxu0 0.0
    %690 = vmatprep.subr.mxu0 0.0
    %691 = vmatpush1.xpose.msra.mxu0 0.0
    %692 = vmatprep.subr.mxu0 0.0
    %693 = vmatpush1.xpose.msra.mxu0 0.0
    %694 = vmatprep.subr.mxu0 0.0
    %695 = vmatpush1.xpose.msra.mxu0 0.0
    %696 = vmatprep.subr.mxu0 0.0
    %697 = vmatpush1.xpose.msra.mxu0 0.0
    %698 = vmatprep.subr.mxu0 0.0
    %699 = vmatpush1.xpose.msra.mxu0 0.0
    %700 = vmatprep.subr.mxu0 0.0
    %701 = vmatpush1.xpose.msra.mxu0 0.0
    %702 = vmatprep.subr.mxu0 0.0
    %703 = vmatpush1.xpose.msra.mxu0 0.0
    %704 = vmatprep.subr.mxu0 0.0
    %705 = vmatpush1.xpose.msra.mxu0 0.0
    %706 = vmatprep.subr.mxu0 0.0
    %707 = vmatpush1.xpose.msra.mxu0 0.0
    %708 = vmatprep.subr.mxu0 0.0
    %709 = vmatpush1.xpose.msra.mxu0 0.0
    %710 = vmatprep.subr.mxu0 0.0
    %711 = vmatpush1.xpose.msra.mxu0 0.0
    %712 = vmatprep.subr.mxu0 0.0
    %713 = vmatpush1.xpose.msra.mxu0 0.0
    %714 = vmatprep.subr.mxu0 0.0
    %715 = vmatpush1.xpose.msra.mxu0 0.0
    %716 = vmatprep.subr.mxu0 0.0
    %717 = vmatpush1.xpose.msra.mxu0 0.0
    %718 = vmatprep.subr.mxu0 0.0
    %719 = vmatpush1.xpose.msra.mxu0 0.0
    %720 = vmatprep.subr.mxu0 0.0
    %721 = vmatpush1.xpose.msra.mxu0 0.0
    %722 = vmatprep.subr.mxu0 0.0
    %723 = vmatpush1.xpose.msra.mxu0 0.0
    %724 = vmatprep.subr.mxu0 0.0
    %725 = vmatpush1.xpose.msra.mxu0 0.0
    %726 = vmatprep.subr.mxu0 0.0
    %727 = vmatpush1.xpose.msra.mxu0 0.0
    %728 = vmatprep.mubr.f32.mxu0 0.0
    %729 = vmatmul.mubr.f32.gmra.mrb[0].mxu0 %v660
    %v730 = vpop.f32.mrb[0].mxu0
    %v731 = vadd.f32 0.0, %v730
    %v732 = vpop.f32.mrb[0].mxu0
    %733 = vdwg.mxu0
    %735 = vrot.lane.b32.xlu0 %v437, 124
    %v736 = vpop.permute.xlu0 %735
    %v738 = vsel %vm105, %v240, 0
    %v740 = vsel %vm105, %v736, 0
    %742 = vmatprep.subr.mxu0 0.0
    %743 = vmatpush1.xpose.msra.mxu0 %v740
    %744 = vmatprep.subr.mxu0 0.0
    %745 = vmatpush1.xpose.msra.mxu0 0.0
    %746 = vmatprep.subr.mxu0 0.0
    %747 = vmatpush1.xpose.msra.mxu0 0.0
    %748 = vmatprep.subr.mxu0 0.0
    %749 = vmatpush1.xpose.msra.mxu0 0.0
    %750 = vmatprep.subr.mxu0 0.0
    %751 = vmatpush1.xpose.msra.mxu0 0.0
    %752 = vmatprep.subr.mxu0 0.0
    %753 = vmatpush1.xpose.msra.mxu0 0.0
    %754 = vmatprep.subr.mxu0 0.0
    %755 = vmatpush1.xpose.msra.mxu0 0.0
    %756 = vmatprep.subr.mxu0 0.0
    %757 = vmatpush1.xpose.msra.mxu0 0.0
    %758 = vmatprep.subr.mxu0 0.0
    %759 = vmatpush1.xpose.msra.mxu0 0.0
    %760 = vmatprep.subr.mxu0 0.0
    %761 = vmatpush1.xpose.msra.mxu0 0.0
    %762 = vmatprep.subr.mxu0 0.0
    %763 = vmatpush1.xpose.msra.mxu0 0.0
    %764 = vmatprep.subr.mxu0 0.0
    %765 = vmatpush1.xpose.msra.mxu0 0.0
    %766 = vmatprep.subr.mxu0 0.0
    %767 = vmatpush1.xpose.msra.mxu0 0.0
    %768 = vmatprep.subr.mxu0 0.0
    %769 = vmatpush1.xpose.msra.mxu0 0.0
    %770 = vmatprep.subr.mxu0 0.0
    %771 = vmatpush1.xpose.msra.mxu0 0.0
    %772 = vmatprep.subr.mxu0 0.0
    %773 = vmatpush1.xpose.msra.mxu0 0.0
    %774 = vmatprep.subr.mxu0 0.0
    %775 = vmatpush1.xpose.msra.mxu0 0.0
    %776 = vmatprep.subr.mxu0 0.0
    %777 = vmatpush1.xpose.msra.mxu0 0.0
    %778 = vmatprep.subr.mxu0 0.0
    %779 = vmatpush1.xpose.msra.mxu0 0.0
    %780 = vmatprep.subr.mxu0 0.0
    %781 = vmatpush1.xpose.msra.mxu0 0.0
    %782 = vmatprep.subr.mxu0 0.0
    %783 = vmatpush1.xpose.msra.mxu0 0.0
    %784 = vmatprep.subr.mxu0 0.0
    %785 = vmatpush1.xpose.msra.mxu0 0.0
    %786 = vmatprep.subr.mxu0 0.0
    %787 = vmatpush1.xpose.msra.mxu0 0.0
    %788 = vmatprep.subr.mxu0 0.0
    %789 = vmatpush1.xpose.msra.mxu0 0.0
    %790 = vmatprep.subr.mxu0 0.0
    %791 = vmatpush1.xpose.msra.mxu0 0.0
    %792 = vmatprep.subr.mxu0 0.0
    %793 = vmatpush1.xpose.msra.mxu0 0.0
    %794 = vmatprep.subr.mxu0 0.0
    %795 = vmatpush1.xpose.msra.mxu0 0.0
    %796 = vmatprep.subr.mxu0 0.0
    %797 = vmatpush1.xpose.msra.mxu0 0.0
    %798 = vmatprep.subr.mxu0 0.0
    %799 = vmatpush1.xpose.msra.mxu0 0.0
    %800 = vmatprep.subr.mxu0 0.0
    %801 = vmatpush1.xpose.msra.mxu0 0.0
    %802 = vmatprep.subr.mxu0 0.0
    %803 = vmatpush1.xpose.msra.mxu0 0.0
    %804 = vmatprep.subr.mxu0 0.0
    %805 = vmatpush1.xpose.msra.mxu0 0.0
    %806 = vmatprep.mubr.f32.mxu0 0.0
    %807 = vmatmul.mubr.f32.gmra.mrb[0].mxu0 %v738
    %v808 = vpop.f32.mrb[0].mxu0
    %v809 = vadd.f32 0.0, %v808
    %v810 = vpop.f32.mrb[0].mxu0
    %811 = vdwg.mxu0
    %813 = vrot.lane.b32.xlu0 %v442, 124
    %v814 = vpop.permute.xlu0 %813
    %v816 = vsel %vm105, %v245, 0
    %v818 = vsel %vm105, %v814, 0
    %820 = vmatprep.subr.mxu0 0.0
    %821 = vmatpush1.xpose.msra.mxu0 %v818
    %822 = vmatprep.subr.mxu0 0.0
    %823 = vmatpush1.xpose.msra.mxu0 0.0
    %824 = vmatprep.subr.mxu0 0.0
    %825 = vmatpush1.xpose.msra.mxu0 0.0
    %826 = vmatprep.subr.mxu0 0.0
    %827 = vmatpush1.xpose.msra.mxu0 0.0
    %828 = vmatprep.subr.mxu0 0.0
    %829 = vmatpush1.xpose.msra.mxu0 0.0
    %830 = vmatprep.subr.mxu0 0.0
    %831 = vmatpush1.xpose.msra.mxu0 0.0
    %832 = vmatprep.subr.mxu0 0.0
    %833 = vmatpush1.xpose.msra.mxu0 0.0
    %834 = vmatprep.subr.mxu0 0.0
    %835 = vmatpush1.xpose.msra.mxu0 0.0
    %836 = vmatprep.subr.mxu0 0.0
    %837 = vmatpush1.xpose.msra.mxu0 0.0
    %838 = vmatprep.subr.mxu0 0.0
    %839 = vmatpush1.xpose.msra.mxu0 0.0
    %840 = vmatprep.subr.mxu0 0.0
    %841 = vmatpush1.xpose.msra.mxu0 0.0
    %842 = vmatprep.subr.mxu0 0.0
    %843 = vmatpush1.xpose.msra.mxu0 0.0
    %844 = vmatprep.subr.mxu0 0.0
    %845 = vmatpush1.xpose.msra.mxu0 0.0
    %846 = vmatprep.subr.mxu0 0.0
    %847 = vmatpush1.xpose.msra.mxu0 0.0
    %848 = vmatprep.subr.mxu0 0.0
    %849 = vmatpush1.xpose.msra.mxu0 0.0
    %850 = vmatprep.subr.mxu0 0.0
    %851 = vmatpush1.xpose.msra.mxu0 0.0
    %852 = vmatprep.subr.mxu0 0.0
    %853 = vmatpush1.xpose.msra.mxu0 0.0
    %854 = vmatprep.subr.mxu0 0.0
    %855 = vmatpush1.xpose.msra.mxu0 0.0
    %856 = vmatprep.subr.mxu0 0.0
    %857 = vmatpush1.xpose.msra.mxu0 0.0
    %858 = vmatprep.subr.mxu0 0.0
    %859 = vmatpush1.xpose.msra.mxu0 0.0
    %860 = vmatprep.subr.mxu0 0.0
    %861 = vmatpush1.xpose.msra.mxu0 0.0
    %862 = vmatprep.subr.mxu0 0.0
    %863 = vmatpush1.xpose.msra.mxu0 0.0
    %864 = vmatprep.subr.mxu0 0.0
    %865 = vmatpush1.xpose.msra.mxu0 0.0
    %866 = vmatprep.subr.mxu0 0.0
    %867 = vmatpush1.xpose.msra.mxu0 0.0
    %868 = vmatprep.subr.mxu0 0.0
    %869 = vmatpush1.xpose.msra.mxu0 0.0
    %870 = vmatprep.subr.mxu0 0.0
    %871 = vmatpush1.xpose.msra.mxu0 0.0
    %872 = vmatprep.subr.mxu0 0.0
    %873 = vmatpush1.xpose.msra.mxu0 0.0
    %874 = vmatprep.subr.mxu0 0.0
    %875 = vmatpush1.xpose.msra.mxu0 0.0
    %876 = vmatprep.subr.mxu0 0.0
    %877 = vmatpush1.xpose.msra.mxu0 0.0
    %878 = vmatprep.subr.mxu0 0.0
    %879 = vmatpush1.xpose.msra.mxu0 0.0
    %880 = vmatprep.subr.mxu0 0.0
    %881 = vmatpush1.xpose.msra.mxu0 0.0
    %882 = vmatprep.subr.mxu0 0.0
    %883 = vmatpush1.xpose.msra.mxu0 0.0
    %884 = vmatprep.mubr.f32.mxu0 0.0
    %885 = vmatmul.mubr.f32.gmra.mrb[0].mxu0 %v816
    %v886 = vpop.f32.mrb[0].mxu0
    %v887 = vadd.f32 0.0, %v886
    %v888 = vpop.f32.mrb[0].mxu0
    %889 = vdwg.mxu0
    %891 = vrot.lane.b32.xlu0 %v447, 124
    %v892 = vpop.permute.xlu0 %891
    %v894 = vsel %vm105, %v250, 0
    %v896 = vsel %vm105, %v892, 0
    %898 = vmatprep.subr.mxu0 0.0
    %899 = vmatpush1.xpose.msra.mxu0 %v896
    %900 = vmatprep.subr.mxu0 0.0
    %901 = vmatpush1.xpose.msra.mxu0 0.0
    %902 = vmatprep.subr.mxu0 0.0
    %903 = vmatpush1.xpose.msra.mxu0 0.0
    %904 = vmatprep.subr.mxu0 0.0
    %905 = vmatpush1.xpose.msra.mxu0 0.0
    %906 = vmatprep.subr.mxu0 0.0
    %907 = vmatpush1.xpose.msra.mxu0 0.0
    %908 = vmatprep.subr.mxu0 0.0
    %909 = vmatpush1.xpose.msra.mxu0 0.0
    %910 = vmatprep.subr.mxu0 0.0
    %911 = vmatpush1.xpose.msra.mxu0 0.0
    %912 = vmatprep.subr.mxu0 0.0
    %913 = vmatpush1.xpose.msra.mxu0 0.0
    %914 = vmatprep.subr.mxu0 0.0
    %915 = vmatpush1.xpose.msra.mxu0 0.0
    %916 = vmatprep.subr.mxu0 0.0
    %917 = vmatpush1.xpose.msra.mxu0 0.0
    %918 = vmatprep.subr.mxu0 0.0
    %919 = vmatpush1.xpose.msra.mxu0 0.0
    %920 = vmatprep.subr.mxu0 0.0
    %921 = vmatpush1.xpose.msra.mxu0 0.0
    %922 = vmatprep.subr.mxu0 0.0
    %923 = vmatpush1.xpose.msra.mxu0 0.0
    %924 = vmatprep.subr.mxu0 0.0
    %925 = vmatpush1.xpose.msra.mxu0 0.0
    %926 = vmatprep.subr.mxu0 0.0
    %927 = vmatpush1.xpose.msra.mxu0 0.0
    %928 = vmatprep.subr.mxu0 0.0
    %929 = vmatpush1.xpose.msra.mxu0 0.0
    %930 = vmatprep.subr.mxu0 0.0
    %931 = vmatpush1.xpose.msra.mxu0 0.0
    %932 = vmatprep.subr.mxu0 0.0
    %933 = vmatpush1.xpose.msra.mxu0 0.0
    %934 = vmatprep.subr.mxu0 0.0
    %935 = vmatpush1.xpose.msra.mxu0 0.0
    %936 = vmatprep.subr.mxu0 0.0
    %937 = vmatpush1.xpose.msra.mxu0 0.0
    %938 = vmatprep.subr.mxu0 0.0
    %939 = vmatpush1.xpose.msra.mxu0 0.0
    %940 = vmatprep.subr.mxu0 0.0
    %941 = vmatpush1.xpose.msra.mxu0 0.0
    %942 = vmatprep.subr.mxu0 0.0
    %943 = vmatpush1.xpose.msra.mxu0 0.0
    %944 = vmatprep.subr.mxu0 0.0
    %945 = vmatpush1.xpose.msra.mxu0 0.0
    %946 = vmatprep.subr.mxu0 0.0
    %947 = vmatpush1.xpose.msra.mxu0 0.0
    %948 = vmatprep.subr.mxu0 0.0
    %949 = vmatpush1.xpose.msra.mxu0 0.0
    %950 = vmatprep.subr.mxu0 0.0
    %951 = vmatpush1.xpose.msra.mxu0 0.0
    %952 = vmatprep.subr.mxu0 0.0
    %953 = vmatpush1.xpose.msra.mxu0 0.0
    %954 = vmatprep.subr.mxu0 0.0
    %955 = vmatpush1.xpose.msra.mxu0 0.0
    %956 = vmatprep.subr.mxu0 0.0
    %957 = vmatpush1.xpose.msra.mxu0 0.0
    %958 = vmatprep.subr.mxu0 0.0
    %959 = vmatpush1.xpose.msra.mxu0 0.0
    %960 = vmatprep.subr.mxu0 0.0
    %961 = vmatpush1.xpose.msra.mxu0 0.0
    %962 = vmatprep.mubr.f32.mxu0 0.0
    %963 = vmatmul.mubr.f32.gmra.mrb[0].mxu0 %v894
    %v964 = vpop.f32.mrb[0].mxu0
    %v965 = vadd.f32 0.0, %v964
    %v966 = vpop.f32.mrb[0].mxu0
    %967 = vdwg.mxu0
    %969 = vrot.lane.b32.xlu0 %v452, 124
    %v970 = vpop.permute.xlu0 %969
    %v972 = vsel %vm105, %v255, 0
    %v974 = vsel %vm105, %v970, 0
    %976 = vmatprep.subr.mxu0 0.0
    %977 = vmatpush1.xpose.msra.mxu0 %v974
    %978 = vmatprep.subr.mxu0 0.0
    %979 = vmatpush1.xpose.msra.mxu0 0.0
    %980 = vmatprep.subr.mxu0 0.0
    %981 = vmatpush1.xpose.msra.mxu0 0.0
    %982 = vmatprep.subr.mxu0 0.0
    %983 = vmatpush1.xpose.msra.mxu0 0.0
    %984 = vmatprep.subr.mxu0 0.0
    %985 = vmatpush1.xpose.msra.mxu0 0.0
    %986 = vmatprep.subr.mxu0 0.0
    %987 = vmatpush1.xpose.msra.mxu0 0.0
    %988 = vmatprep.subr.mxu0 0.0
    %989 = vmatpush1.xpose.msra.mxu0 0.0
    %990 = vmatprep.subr.mxu0 0.0
    %991 = vmatpush1.xpose.msra.mxu0 0.0
    %992 = vmatprep.subr.mxu0 0.0
    %993 = vmatpush1.xpose.msra.mxu0 0.0
    %994 = vmatprep.subr.mxu0 0.0
    %995 = vmatpush1.xpose.msra.mxu0 0.0
    %996 = vmatprep.subr.mxu0 0.0
    %997 = vmatpush1.xpose.msra.mxu0 0.0
    %998 = vmatprep.subr.mxu0 0.0
    %999 = vmatpush1.xpose.msra.mxu0 0.0
    %1000 = vmatprep.subr.mxu0 0.0
    %1001 = vmatpush1.xpose.msra.mxu0 0.0
    %1002 = vmatprep.subr.mxu0 0.0
    %1003 = vmatpush1.xpose.msra.mxu0 0.0
    %1004 = vmatprep.subr.mxu0 0.0
    %1005 = vmatpush1.xpose.msra.mxu0 0.0
    %1006 = vmatprep.subr.mxu0 0.0
    %1007 = vmatpush1.xpose.msra.mxu0 0.0
    %1008 = vmatprep.subr.mxu0 0.0
    %1009 = vmatpush1.xpose.msra.mxu0 0.0
    %1010 = vmatprep.subr.mxu0 0.0
    %1011 = vmatpush1.xpose.msra.mxu0 0.0
    %1012 = vmatprep.subr.mxu0 0.0
    %1013 = vmatpush1.xpose.msra.mxu0 0.0
    %1014 = vmatprep.subr.mxu0 0.0
    %1015 = vmatpush1.xpose.msra.mxu0 0.0
    %1016 = vmatprep.subr.mxu0 0.0
    %1017 = vmatpush1.xpose.msra.mxu0 0.0
    %1018 = vmatprep.subr.mxu0 0.0
    %1019 = vmatpush1.xpose.msra.mxu0 0.0
    %1020 = vmatprep.subr.mxu0 0.0
    %1021 = vmatpush1.xpose.msra.mxu0 0.0
    %1022 = vmatprep.subr.mxu0 0.0
    %1023 = vmatpush1.xpose.msra.mxu0 0.0
    %1024 = vmatprep.subr.mxu0 0.0
    %1025 = vmatpush1.xpose.msra.mxu0 0.0
    %1026 = vmatprep.subr.mxu0 0.0
    %1027 = vmatpush1.xpose.msra.mxu0 0.0
    %1028 = vmatprep.subr.mxu0 0.0
    %1029 = vmatpush1.xpose.msra.mxu0 0.0
    %1030 = vmatprep.subr.mxu0 0.0
    %1031 = vmatpush1.xpose.msra.mxu0 0.0
    %1032 = vmatprep.subr.mxu0 0.0
    %1033 = vmatpush1.xpose.msra.mxu0 0.0
    %1034 = vmatprep.subr.mxu0 0.0
    %1035 = vmatpush1.xpose.msra.mxu0 0.0
    %1036 = vmatprep.subr.mxu0 0.0
    %1037 = vmatpush1.xpose.msra.mxu0 0.0
    %1038 = vmatprep.subr.mxu0 0.0
    %1039 = vmatpush1.xpose.msra.mxu0 0.0
    %1040 = vmatprep.mubr.f32.mxu0 0.0
    %1041 = vmatmul.mubr.f32.gmra.mrb[0].mxu0 %v972
    %v1042 = vpop.f32.mrb[0].mxu0
    %v1043 = vadd.f32 0.0, %v1042
    %v1044 = vpop.f32.mrb[0].mxu0
    %1045 = vdwg.mxu0
    %1047 = vrot.lane.b32.xlu0 %v457, 124
    %v1048 = vpop.permute.xlu0 %1047
    %v1050 = vsel %vm105, %v260, 0
    %v1052 = vsel %vm105, %v1048, 0
    %1054 = vmatprep.subr.mxu0 0.0
    %1055 = vmatpush1.xpose.msra.mxu0 %v1052
    %1056 = vmatprep.subr.mxu0 0.0
    %1057 = vmatpush1.xpose.msra.mxu0 0.0
    %1058 = vmatprep.subr.mxu0 0.0
    %1059 = vmatpush1.xpose.msra.mxu0 0.0
    %1060 = vmatprep.subr.mxu0 0.0
    %1061 = vmatpush1.xpose.msra.mxu0 0.0
    %1062 = vmatprep.subr.mxu0 0.0
    %1063 = vmatpush1.xpose.msra.mxu0 0.0
    %1064 = vmatprep.subr.mxu0 0.0
    %1065 = vmatpush1.xpose.msra.mxu0 0.0
    %1066 = vmatprep.subr.mxu0 0.0
    %1067 = vmatpush1.xpose.msra.mxu0 0.0
    %1068 = vmatprep.subr.mxu0 0.0
    %1069 = vmatpush1.xpose.msra.mxu0 0.0
    %1070 = vmatprep.subr.mxu0 0.0
    %1071 = vmatpush1.xpose.msra.mxu0 0.0
    %1072 = vmatprep.subr.mxu0 0.0
    %1073 = vmatpush1.xpose.msra.mxu0 0.0
    %1074 = vmatprep.subr.mxu0 0.0
    %1075 = vmatpush1.xpose.msra.mxu0 0.0
    %1076 = vmatprep.subr.mxu0 0.0
    %1077 = vmatpush1.xpose.msra.mxu0 0.0
    %1078 = vmatprep.subr.mxu0 0.0
    %1079 = vmatpush1.xpose.msra.mxu0 0.0
    %1080 = vmatprep.subr.mxu0 0.0
    %1081 = vmatpush1.xpose.msra.mxu0 0.0
    %1082 = vmatprep.subr.mxu0 0.0
    %1083 = vmatpush1.xpose.msra.mxu0 0.0
    %1084 = vmatprep.subr.mxu0 0.0
    %1085 = vmatpush1.xpose.msra.mxu0 0.0
    %1086 = vmatprep.subr.mxu0 0.0
    %1087 = vmatpush1.xpose.msra.mxu0 0.0
    %1088 = vmatprep.subr.mxu0 0.0
    %1089 = vmatpush1.xpose.msra.mxu0 0.0
    %1090 = vmatprep.subr.mxu0 0.0
    %1091 = vmatpush1.xpose.msra.mxu0 0.0
    %1092 = vmatprep.subr.mxu0 0.0
    %1093 = vmatpush1.xpose.msra.mxu0 0.0
    %1094 = vmatprep.subr.mxu0 0.0
    %1095 = vmatpush1.xpose.msra.mxu0 0.0
    %1096 = vmatprep.subr.mxu0 0.0
    %1097 = vmatpush1.xpose.msra.mxu0 0.0
    %1098 = vmatprep.subr.mxu0 0.0
    %1099 = vmatpush1.xpose.msra.mxu0 0.0
    %1100 = vmatprep.subr.mxu0 0.0
    %1101 = vmatpush1.xpose.msra.mxu0 0.0
    %1102 = vmatprep.subr.mxu0 0.0
    %1103 = vmatpush1.xpose.msra.mxu0 0.0
    %1104 = vmatprep.subr.mxu0 0.0
    %1105 = vmatpush1.xpose.msra.mxu0 0.0
    %1106 = vmatprep.subr.mxu0 0.0
    %1107 = vmatpush1.xpose.msra.mxu0 0.0
    %1108 = vmatprep.subr.mxu0 0.0
    %1109 = vmatpush1.xpose.msra.mxu0 0.0
    %1110 = vmatprep.subr.mxu0 0.0
    %1111 = vmatpush1.xpose.msra.mxu0 0.0
    %1112 = vmatprep.subr.mxu0 0.0
    %1113 = vmatpush1.xpose.msra.mxu0 0.0
    %1114 = vmatprep.subr.mxu0 0.0
    %1115 = vmatpush1.xpose.msra.mxu0 0.0
    %1116 = vmatprep.subr.mxu0 0.0
    %1117 = vmatpush1.xpose.msra.mxu0 0.0
    %1118 = vmatprep.mubr.f32.mxu0 0.0
    %1119 = vmatmul.mubr.f32.gmra.mrb[0].mxu0 %v1050
    %v1120 = vpop.f32.mrb[0].mxu0
    %v1121 = vadd.f32 0.0, %v1120
    %v1122 = vpop.f32.mrb[0].mxu0
    %1123 = vdwg.mxu0
    %1125 = vrot.lane.b32.xlu0 %v462, 124
    %v1126 = vpop.permute.xlu0 %1125
    %v1128 = vsel %vm105, %v265, 0
    %v1130 = vsel %vm105, %v1126, 0
    %1132 = vmatprep.subr.mxu0 0.0
    %1133 = vmatpush1.xpose.msra.mxu0 %v1130
    %1134 = vmatprep.subr.mxu0 0.0
    %1135 = vmatpush1.xpose.msra.mxu0 0.0
    %1136 = vmatprep.subr.mxu0 0.0
    %1137 = vmatpush1.xpose.msra.mxu0 0.0
    %1138 = vmatprep.subr.mxu0 0.0
    %1139 = vmatpush1.xpose.msra.mxu0 0.0
    %1140 = vmatprep.subr.mxu0 0.0
    %1141 = vmatpush1.xpose.msra.mxu0 0.0
    %1142 = vmatprep.subr.mxu0 0.0
    %1143 = vmatpush1.xpose.msra.mxu0 0.0
    %1144 = vmatprep.subr.mxu0 0.0
    %1145 = vmatpush1.xpose.msra.mxu0 0.0
    %1146 = vmatprep.subr.mxu0 0.0
    %1147 = vmatpush1.xpose.msra.mxu0 0.0
    %1148 = vmatprep.subr.mxu0 0.0
    %1149 = vmatpush1.xpose.msra.mxu0 0.0
    %1150 = vmatprep.subr.mxu0 0.0
    %1151 = vmatpush1.xpose.msra.mxu0 0.0
    %1152 = vmatprep.subr.mxu0 0.0
    %1153 = vmatpush1.xpose.msra.mxu0 0.0
    %1154 = vmatprep.subr.mxu0 0.0
    %1155 = vmatpush1.xpose.msra.mxu0 0.0
    %1156 = vmatprep.subr.mxu0 0.0
    %1157 = vmatpush1.xpose.msra.mxu0 0.0
    %1158 = vmatprep.subr.mxu0 0.0
    %1159 = vmatpush1.xpose.msra.mxu0 0.0
    %1160 = vmatprep.subr.mxu0 0.0
    %1161 = vmatpush1.xpose.msra.mxu0 0.0
    %1162 = vmatprep.subr.mxu0 0.0
    %1163 = vmatpush1.xpose.msra.mxu0 0.0
    %1164 = vmatprep.subr.mxu0 0.0
    %1165 = vmatpush1.xpose.msra.mxu0 0.0
    %1166 = vmatprep.subr.mxu0 0.0
    %1167 = vmatpush1.xpose.msra.mxu0 0.0
    %1168 = vmatprep.subr.mxu0 0.0
    %1169 = vmatpush1.xpose.msra.mxu0 0.0
    %1170 = vmatprep.subr.mxu0 0.0
    %1171 = vmatpush1.xpose.msra.mxu0 0.0
    %1172 = vmatprep.subr.mxu0 0.0
    %1173 = vmatpush1.xpose.msra.mxu0 0.0
    %1174 = vmatprep.subr.mxu0 0.0
    %1175 = vmatpush1.xpose.msra.mxu0 0.0
    %1176 = vmatprep.subr.mxu0 0.0
    %1177 = vmatpush1.xpose.msra.mxu0 0.0
    %1178 = vmatprep.subr.mxu0 0.0
    %1179 = vmatpush1.xpose.msra.mxu0 0.0
    %1180 = vmatprep.subr.mxu0 0.0
    %1181 = vmatpush1.xpose.msra.mxu0 0.0
    %1182 = vmatprep.subr.mxu0 0.0
    %1183 = vmatpush1.xpose.msra.mxu0 0.0
    %1184 = vmatprep.subr.mxu0 0.0
    %1185 = vmatpush1.xpose.msra.mxu0 0.0
    %1186 = vmatprep.subr.mxu0 0.0
    %1187 = vmatpush1.xpose.msra.mxu0 0.0
    %1188 = vmatprep.subr.mxu0 0.0
    %1189 = vmatpush1.xpose.msra.mxu0 0.0
    %1190 = vmatprep.subr.mxu0 0.0
    %1191 = vmatpush1.xpose.msra.mxu0 0.0
    %1192 = vmatprep.subr.mxu0 0.0
    %1193 = vmatpush1.xpose.msra.mxu0 0.0
    %1194 = vmatprep.subr.mxu0 0.0
    %1195 = vmatpush1.xpose.msra.mxu0 0.0
    %1196 = vmatprep.mubr.f32.mxu0 0.0
    %1197 = vmatmul.mubr.f32.gmra.mrb[0].mxu0 %v1128
    %v1198 = vpop.f32.mrb[0].mxu0
    %v1199 = vadd.f32 0.0, %v1198
    %v1200 = vpop.f32.mrb[0].mxu0
    %1201 = vdwg.mxu0
    %1203 = vrot.lane.b32.xlu0 %v467, 124
    %v1204 = vpop.permute.xlu0 %1203
    %v1206 = vsel %vm105, %v270, 0
    %v1208 = vsel %vm105, %v1204, 0
    %1210 = vmatprep.subr.mxu0 0.0
    %1211 = vmatpush1.xpose.msra.mxu0 %v1208
    %1212 = vmatprep.subr.mxu0 0.0
    %1213 = vmatpush1.xpose.msra.mxu0 0.0
    %1214 = vmatprep.subr.mxu0 0.0
    %1215 = vmatpush1.xpose.msra.mxu0 0.0
    %1216 = vmatprep.subr.mxu0 0.0
    %1217 = vmatpush1.xpose.msra.mxu0 0.0
    %1218 = vmatprep.subr.mxu0 0.0
    %1219 = vmatpush1.xpose.msra.mxu0 0.0
    %1220 = vmatprep.subr.mxu0 0.0
    %1221 = vmatpush1.xpose.msra.mxu0 0.0
    %1222 = vmatprep.subr.mxu0 0.0
    %1223 = vmatpush1.xpose.msra.mxu0 0.0
    %1224 = vmatprep.subr.mxu0 0.0
    %1225 = vmatpush1.xpose.msra.mxu0 0.0
    %1226 = vmatprep.subr.mxu0 0.0
    %1227 = vmatpush1.xpose.msra.mxu0 0.0
    %1228 = vmatprep.subr.mxu0 0.0
    %1229 = vmatpush1.xpose.msra.mxu0 0.0
    %1230 = vmatprep.subr.mxu0 0.0
    %1231 = vmatpush1.xpose.msra.mxu0 0.0
    %1232 = vmatprep.subr.mxu0 0.0
    %1233 = vmatpush1.xpose.msra.mxu0 0.0
    %1234 = vmatprep.subr.mxu0 0.0
    %1235 = vmatpush1.xpose.msra.mxu0 0.0
    %1236 = vmatprep.subr.mxu0 0.0
    %1237 = vmatpush1.xpose.msra.mxu0 0.0
    %1238 = vmatprep.subr.mxu0 0.0
    %1239 = vmatpush1.xpose.msra.mxu0 0.0
    %1240 = vmatprep.subr.mxu0 0.0
    %1241 = vmatpush1.xpose.msra.mxu0 0.0
    %1242 = vmatprep.subr.mxu0 0.0
    %1243 = vmatpush1.xpose.msra.mxu0 0.0
    %1244 = vmatprep.subr.mxu0 0.0
    %1245 = vmatpush1.xpose.msra.mxu0 0.0
    %1246 = vmatprep.subr.mxu0 0.0
    %1247 = vmatpush1.xpose.msra.mxu0 0.0
    %1248 = vmatprep.subr.mxu0 0.0
    %1249 = vmatpush1.xpose.msra.mxu0 0.0
    %1250 = vmatprep.subr.mxu0 0.0
    %1251 = vmatpush1.xpose.msra.mxu0 0.0
    %1252 = vmatprep.subr.mxu0 0.0
    %1253 = vmatpush1.xpose.msra.mxu0 0.0
    %1254 = vmatprep.subr.mxu0 0.0
    %1255 = vmatpush1.xpose.msra.mxu0 0.0
    %1256 = vmatprep.subr.mxu0 0.0
    %1257 = vmatpush1.xpose.msra.mxu0 0.0
    %1258 = vmatprep.subr.mxu0 0.0
    %1259 = vmatpush1.xpose.msra.mxu0 0.0
    %1260 = vmatprep.subr.mxu0 0.0
    %1261 = vmatpush1.xpose.msra.mxu0 0.0
    %1262 = vmatprep.subr.mxu0 0.0
    %1263 = vmatpush1.xpose.msra.mxu0 0.0
    %1264 = vmatprep.subr.mxu0 0.0
    %1265 = vmatpush1.xpose.msra.mxu0 0.0
    %1266 = vmatprep.subr.mxu0 0.0
    %1267 = vmatpush1.xpose.msra.mxu0 0.0
    %1268 = vmatprep.subr.mxu0 0.0
    %1269 = vmatpush1.xpose.msra.mxu0 0.0
    %1270 = vmatprep.subr.mxu0 0.0
    %1271 = vmatpush1.xpose.msra.mxu0 0.0
    %1272 = vmatprep.subr.mxu0 0.0
    %1273 = vmatpush1.xpose.msra.mxu0 0.0
    %1274 = vmatprep.mubr.f32.mxu0 0.0
    %1275 = vmatmul.mubr.f32.gmra.mrb[0].mxu0 %v1206
    %v1276 = vpop.f32.mrb[0].mxu0
    %v1277 = vadd.f32 0.0, %v1276
    %v1278 = vpop.f32.mrb[0].mxu0
    %1279 = vdwg.mxu0
    %1281 = vrot.lane.b32.xlu0 %v472, 124
    %v1282 = vpop.permute.xlu0 %1281
    %v1284 = vsel %vm105, %v275, 0
    %v1286 = vsel %vm105, %v1282, 0
    %1288 = vmatprep.subr.mxu0 0.0
    %1289 = vmatpush1.xpose.msra.mxu0 %v1286
    %1290 = vmatprep.subr.mxu0 0.0
    %1291 = vmatpush1.xpose.msra.mxu0 0.0
    %1292 = vmatprep.subr.mxu0 0.0
    %1293 = vmatpush1.xpose.msra.mxu0 0.0
    %1294 = vmatprep.subr.mxu0 0.0
    %1295 = vmatpush1.xpose.msra.mxu0 0.0
    %1296 = vmatprep.subr.mxu0 0.0
    %1297 = vmatpush1.xpose.msra.mxu0 0.0
    %1298 = vmatprep.subr.mxu0 0.0
    %1299 = vmatpush1.xpose.msra.mxu0 0.0
    %1300 = vmatprep.subr.mxu0 0.0
    %1301 = vmatpush1.xpose.msra.mxu0 0.0
    %1302 = vmatprep.subr.mxu0 0.0
    %1303 = vmatpush1.xpose.msra.mxu0 0.0
    %1304 = vmatprep.subr.mxu0 0.0
    %1305 = vmatpush1.xpose.msra.mxu0 0.0
    %1306 = vmatprep.subr.mxu0 0.0
    %1307 = vmatpush1.xpose.msra.mxu0 0.0
    %1308 = vmatprep.subr.mxu0 0.0
    %1309 = vmatpush1.xpose.msra.mxu0 0.0
    %1310 = vmatprep.subr.mxu0 0.0
    %1311 = vmatpush1.xpose.msra.mxu0 0.0
    %1312 = vmatprep.subr.mxu0 0.0
    %1313 = vmatpush1.xpose.msra.mxu0 0.0
    %1314 = vmatprep.subr.mxu0 0.0
    %1315 = vmatpush1.xpose.msra.mxu0 0.0
    %1316 = vmatprep.subr.mxu0 0.0
    %1317 = vmatpush1.xpose.msra.mxu0 0.0
    %1318 = vmatprep.subr.mxu0 0.0
    %1319 = vmatpush1.xpose.msra.mxu0 0.0
    %1320 = vmatprep.subr.mxu0 0.0
    %1321 = vmatpush1.xpose.msra.mxu0 0.0
    %1322 = vmatprep.subr.mxu0 0.0
    %1323 = vmatpush1.xpose.msra.mxu0 0.0
    %1324 = vmatprep.subr.mxu0 0.0
    %1325 = vmatpush1.xpose.msra.mxu0 0.0
    %1326 = vmatprep.subr.mxu0 0.0
    %1327 = vmatpush1.xpose.msra.mxu0 0.0
    %1328 = vmatprep.subr.mxu0 0.0
    %1329 = vmatpush1.xpose.msra.mxu0 0.0
    %1330 = vmatprep.subr.mxu0 0.0
    %1331 = vmatpush1.xpose.msra.mxu0 0.0
    %1332 = vmatprep.subr.mxu0 0.0
    %1333 = vmatpush1.xpose.msra.mxu0 0.0
    %1334 = vmatprep.subr.mxu0 0.0
    %1335 = vmatpush1.xpose.msra.mxu0 0.0
    %1336 = vmatprep.subr.mxu0 0.0
    %1337 = vmatpush1.xpose.msra.mxu0 0.0
    %1338 = vmatprep.subr.mxu0 0.0
    %1339 = vmatpush1.xpose.msra.mxu0 0.0
    %1340 = vmatprep.subr.mxu0 0.0
    %1341 = vmatpush1.xpose.msra.mxu0 0.0
    %1342 = vmatprep.subr.mxu0 0.0
    %1343 = vmatpush1.xpose.msra.mxu0 0.0
    %1344 = vmatprep.subr.mxu0 0.0
    %1345 = vmatpush1.xpose.msra.mxu0 0.0
    %1346 = vmatprep.subr.mxu0 0.0
    %1347 = vmatpush1.xpose.msra.mxu0 0.0
    %1348 = vmatprep.subr.mxu0 0.0
    %1349 = vmatpush1.xpose.msra.mxu0 0.0
    %1350 = vmatprep.subr.mxu0 0.0
    %1351 = vmatpush1.xpose.msra.mxu0 0.0
    %1352 = vmatprep.mubr.f32.mxu0 0.0
    %1353 = vmatmul.mubr.f32.gmra.mrb[0].mxu0 %v1284
    %v1354 = vpop.f32.mrb[0].mxu0
    %v1355 = vadd.f32 0.0, %v1354
    %v1356 = vpop.f32.mrb[0].mxu0
    %1357 = vdwg.mxu0
    %1359 = vrot.lane.b32.xlu0 %v477, 124
    %v1360 = vpop.permute.xlu0 %1359
    %v1362 = vsel %vm105, %v280, 0
    %v1364 = vsel %vm105, %v1360, 0
    %1366 = vmatprep.subr.mxu0 0.0
    %1367 = vmatpush1.xpose.msra.mxu0 %v1364
    %1368 = vmatprep.subr.mxu0 0.0
    %1369 = vmatpush1.xpose.msra.mxu0 0.0
    %1370 = vmatprep.subr.mxu0 0.0
    %1371 = vmatpush1.xpose.msra.mxu0 0.0
    %1372 = vmatprep.subr.mxu0 0.0
    %1373 = vmatpush1.xpose.msra.mxu0 0.0
    %1374 = vmatprep.subr.mxu0 0.0
    %1375 = vmatpush1.xpose.msra.mxu0 0.0
    %1376 = vmatprep.subr.mxu0 0.0
    %1377 = vmatpush1.xpose.msra.mxu0 0.0
    %1378 = vmatprep.subr.mxu0 0.0
    %1379 = vmatpush1.xpose.msra.mxu0 0.0
    %1380 = vmatprep.subr.mxu0 0.0
    %1381 = vmatpush1.xpose.msra.mxu0 0.0
    %1382 = vmatprep.subr.mxu0 0.0
    %1383 = vmatpush1.xpose.msra.mxu0 0.0
    %1384 = vmatprep.subr.mxu0 0.0
    %1385 = vmatpush1.xpose.msra.mxu0 0.0
    %1386 = vmatprep.subr.mxu0 0.0
    %1387 = vmatpush1.xpose.msra.mxu0 0.0
    %1388 = vmatprep.subr.mxu0 0.0
    %1389 = vmatpush1.xpose.msra.mxu0 0.0
    %1390 = vmatprep.subr.mxu0 0.0
    %1391 = vmatpush1.xpose.msra.mxu0 0.0
    %1392 = vmatprep.subr.mxu0 0.0
    %1393 = vmatpush1.xpose.msra.mxu0 0.0
    %1394 = vmatprep.subr.mxu0 0.0
    %1395 = vmatpush1.xpose.msra.mxu0 0.0
    %1396 = vmatprep.subr.mxu0 0.0
    %1397 = vmatpush1.xpose.msra.mxu0 0.0
    %1398 = vmatprep.subr.mxu0 0.0
    %1399 = vmatpush1.xpose.msra.mxu0 0.0
    %1400 = vmatprep.subr.mxu0 0.0
    %1401 = vmatpush1.xpose.msra.mxu0 0.0
    %1402 = vmatprep.subr.mxu0 0.0
    %1403 = vmatpush1.xpose.msra.mxu0 0.0
    %1404 = vmatprep.subr.mxu0 0.0
    %1405 = vmatpush1.xpose.msra.mxu0 0.0
    %1406 = vmatprep.subr.mxu0 0.0
    %1407 = vmatpush1.xpose.msra.mxu0 0.0
    %1408 = vmatprep.subr.mxu0 0.0
    %1409 = vmatpush1.xpose.msra.mxu0 0.0
    %1410 = vmatprep.subr.mxu0 0.0
    %1411 = vmatpush1.xpose.msra.mxu0 0.0
    %1412 = vmatprep.subr.mxu0 0.0
    %1413 = vmatpush1.xpose.msra.mxu0 0.0
    %1414 = vmatprep.subr.mxu0 0.0
    %1415 = vmatpush1.xpose.msra.mxu0 0.0
    %1416 = vmatprep.subr.mxu0 0.0
    %1417 = vmatpush1.xpose.msra.mxu0 0.0
    %1418 = vmatprep.subr.mxu0 0.0
    %1419 = vmatpush1.xpose.msra.mxu0 0.0
    %1420 = vmatprep.subr.mxu0 0.0
    %1421 = vmatpush1.xpose.msra.mxu0 0.0
    %1422 = vmatprep.subr.mxu0 0.0
    %1423 = vmatpush1.xpose.msra.mxu0 0.0
    %1424 = vmatprep.subr.mxu0 0.0
    %1425 = vmatpush1.xpose.msra.mxu0 0.0
    %1426 = vmatprep.subr.mxu0 0.0
    %1427 = vmatpush1.xpose.msra.mxu0 0.0
    %1428 = vmatprep.subr.mxu0 0.0
    %1429 = vmatpush1.xpose.msra.mxu0 0.0
    %1430 = vmatprep.mubr.f32.mxu0 0.0
    %1431 = vmatmul.mubr.f32.gmra.mrb[0].mxu0 %v1362
    %v1432 = vpop.f32.mrb[0].mxu0
    %v1433 = vadd.f32 0.0, %v1432
    %v1434 = vpop.f32.mrb[0].mxu0
    %1435 = vdwg.mxu0
    %1437 = vrot.lane.b32.xlu0 %v482, 124
    %v1438 = vpop.permute.xlu0 %1437
    %v1440 = vsel %vm105, %v285, 0
    %v1442 = vsel %vm105, %v1438, 0
    %1444 = vmatprep.subr.mxu0 0.0
    %1445 = vmatpush1.xpose.msra.mxu0 %v1442
    %1446 = vmatprep.subr.mxu0 0.0
    %1447 = vmatpush1.xpose.msra.mxu0 0.0
    %1448 = vmatprep.subr.mxu0 0.0
    %1449 = vmatpush1.xpose.msra.mxu0 0.0
    %1450 = vmatprep.subr.mxu0 0.0
    %1451 = vmatpush1.xpose.msra.mxu0 0.0
    %1452 = vmatprep.subr.mxu0 0.0
    %1453 = vmatpush1.xpose.msra.mxu0 0.0
    %1454 = vmatprep.subr.mxu0 0.0
    %1455 = vmatpush1.xpose.msra.mxu0 0.0
    %1456 = vmatprep.subr.mxu0 0.0
    %1457 = vmatpush1.xpose.msra.mxu0 0.0
    %1458 = vmatprep.subr.mxu0 0.0
    %1459 = vmatpush1.xpose.msra.mxu0 0.0
    %1460 = vmatprep.subr.mxu0 0.0
    %1461 = vmatpush1.xpose.msra.mxu0 0.0
    %1462 = vmatprep.subr.mxu0 0.0
    %1463 = vmatpush1.xpose.msra.mxu0 0.0
    %1464 = vmatprep.subr.mxu0 0.0
    %1465 = vmatpush1.xpose.msra.mxu0 0.0
    %1466 = vmatprep.subr.mxu0 0.0
    %1467 = vmatpush1.xpose.msra.mxu0 0.0
    %1468 = vmatprep.subr.mxu0 0.0
    %1469 = vmatpush1.xpose.msra.mxu0 0.0
    %1470 = vmatprep.subr.mxu0 0.0
    %1471 = vmatpush1.xpose.msra.mxu0 0.0
    %1472 = vmatprep.subr.mxu0 0.0
    %1473 = vmatpush1.xpose.msra.mxu0 0.0
    %1474 = vmatprep.subr.mxu0 0.0
    %1475 = vmatpush1.xpose.msra.mxu0 0.0
    %1476 = vmatprep.subr.mxu0 0.0
    %1477 = vmatpush1.xpose.msra.mxu0 0.0
    %1478 = vmatprep.subr.mxu0 0.0
    %1479 = vmatpush1.xpose.msra.mxu0 0.0
    %1480 = vmatprep.subr.mxu0 0.0
    %1481 = vmatpush1.xpose.msra.mxu0 0.0
    %1482 = vmatprep.subr.mxu0 0.0
    %1483 = vmatpush1.xpose.msra.mxu0 0.0
    %1484 = vmatprep.subr.mxu0 0.0
    %1485 = vmatpush1.xpose.msra.mxu0 0.0
    %1486 = vmatprep.subr.mxu0 0.0
    %1487 = vmatpush1.xpose.msra.mxu0 0.0
    %1488 = vmatprep.subr.mxu0 0.0
    %1489 = vmatpush1.xpose.msra.mxu0 0.0
    %1490 = vmatprep.subr.mxu0 0.0
    %1491 = vmatpush1.xpose.msra.mxu0 0.0
    %1492 = vmatprep.subr.mxu0 0.0
    %1493 = vmatpush1.xpose.msra.mxu0 0.0
    %1494 = vmatprep.subr.mxu0 0.0
    %1495 = vmatpush1.xpose.msra.mxu0 0.0
    %1496 = vmatprep.subr.mxu0 0.0
    %1497 = vmatpush1.xpose.msra.mxu0 0.0
    %1498 = vmatprep.subr.mxu0 0.0
    %1499 = vmatpush1.xpose.msra.mxu0 0.0
    %1500 = vmatprep.subr.mxu0 0.0
    %1501 = vmatpush1.xpose.msra.mxu0 0.0
    %1502 = vmatprep.subr.mxu0 0.0
    %1503 = vmatpush1.xpose.msra.mxu0 0.0
    %1504 = vmatprep.subr.mxu0 0.0
    %1505 = vmatpush1.xpose.msra.mxu0 0.0
    %1506 = vmatprep.subr.mxu0 0.0
    %1507 = vmatpush1.xpose.msra.mxu0 0.0
    %1508 = vmatprep.mubr.f32.mxu0 0.0
    %1509 = vmatmul.mubr.f32.gmra.mrb[0].mxu0 %v1440
    %v1510 = vpop.f32.mrb[0].mxu0
    %v1511 = vadd.f32 0.0, %v1510
    %v1512 = vpop.f32.mrb[0].mxu0
    %1513 = vdwg.mxu0
    %1515 = vrot.lane.b32.xlu0 %v487, 124
    %v1516 = vpop.permute.xlu0 %1515
    %v1518 = vsel %vm105, %v290, 0
    %v1520 = vsel %vm105, %v1516, 0
    %1522 = vmatprep.subr.mxu0 0.0
    %1523 = vmatpush1.xpose.msra.mxu0 %v1520
    %1524 = vmatprep.subr.mxu0 0.0
    %1525 = vmatpush1.xpose.msra.mxu0 0.0
    %1526 = vmatprep.subr.mxu0 0.0
    %1527 = vmatpush1.xpose.msra.mxu0 0.0
    %1528 = vmatprep.subr.mxu0 0.0
    %1529 = vmatpush1.xpose.msra.mxu0 0.0
    %1530 = vmatprep.subr.mxu0 0.0
    %1531 = vmatpush1.xpose.msra.mxu0 0.0
    %1532 = vmatprep.subr.mxu0 0.0
    %1533 = vmatpush1.xpose.msra.mxu0 0.0
    %1534 = vmatprep.subr.mxu0 0.0
    %1535 = vmatpush1.xpose.msra.mxu0 0.0
    %1536 = vmatprep.subr.mxu0 0.0
    %1537 = vmatpush1.xpose.msra.mxu0 0.0
    %1538 = vmatprep.subr.mxu0 0.0
    %1539 = vmatpush1.xpose.msra.mxu0 0.0
    %1540 = vmatprep.subr.mxu0 0.0
    %1541 = vmatpush1.xpose.msra.mxu0 0.0
    %1542 = vmatprep.subr.mxu0 0.0
    %1543 = vmatpush1.xpose.msra.mxu0 0.0
    %1544 = vmatprep.subr.mxu0 0.0
    %1545 = vmatpush1.xpose.msra.mxu0 0.0
    %1546 = vmatprep.subr.mxu0 0.0
    %1547 = vmatpush1.xpose.msra.mxu0 0.0
    %1548 = vmatprep.subr.mxu0 0.0
    %1549 = vmatpush1.xpose.msra.mxu0 0.0
    %1550 = vmatprep.subr.mxu0 0.0
    %1551 = vmatpush1.xpose.msra.mxu0 0.0
    %1552 = vmatprep.subr.mxu0 0.0
    %1553 = vmatpush1.xpose.msra.mxu0 0.0
    %1554 = vmatprep.subr.mxu0 0.0
    %1555 = vmatpush1.xpose.msra.mxu0 0.0
    %1556 = vmatprep.subr.mxu0 0.0
    %1557 = vmatpush1.xpose.msra.mxu0 0.0
    %1558 = vmatprep.subr.mxu0 0.0
    %1559 = vmatpush1.xpose.msra.mxu0 0.0
    %1560 = vmatprep.subr.mxu0 0.0
    %1561 = vmatpush1.xpose.msra.mxu0 0.0
    %1562 = vmatprep.subr.mxu0 0.0
    %1563 = vmatpush1.xpose.msra.mxu0 0.0
    %1564 = vmatprep.subr.mxu0 0.0
    %1565 = vmatpush1.xpose.msra.mxu0 0.0
    %1566 = vmatprep.subr.mxu0 0.0
    %1567 = vmatpush1.xpose.msra.mxu0 0.0
    %1568 = vmatprep.subr.mxu0 0.0
    %1569 = vmatpush1.xpose.msra.mxu0 0.0
    %1570 = vmatprep.subr.mxu0 0.0
    %1571 = vmatpush1.xpose.msra.mxu0 0.0
    %1572 = vmatprep.subr.mxu0 0.0
    %1573 = vmatpush1.xpose.msra.mxu0 0.0
    %1574 = vmatprep.subr.mxu0 0.0
    %1575 = vmatpush1.xpose.msra.mxu0 0.0
    %1576 = vmatprep.subr.mxu0 0.0
    %1577 = vmatpush1.xpose.msra.mxu0 0.0
    %1578 = vmatprep.subr.mxu0 0.0
    %1579 = vmatpush1.xpose.msra.mxu0 0.0
    %1580 = vmatprep.subr.mxu0 0.0
    %1581 = vmatpush1.xpose.msra.mxu0 0.0
    %1582 = vmatprep.subr.mxu0 0.0
    %1583 = vmatpush1.xpose.msra.mxu0 0.0
    %1584 = vmatprep.subr.mxu0 0.0
    %1585 = vmatpush1.xpose.msra.mxu0 0.0
    %1586 = vmatprep.mubr.f32.mxu0 0.0
    %1587 = vmatmul.mubr.f32.gmra.mrb[0].mxu0 %v1518
    %v1588 = vpop.f32.mrb[0].mxu0
    %v1589 = vadd.f32 0.0, %v1588
    %v1590 = vpop.f32.mrb[0].mxu0
    %1591 = vdwg.mxu0
    %1593 = vrot.lane.b32.xlu0 %v492, 124
    %v1594 = vpop.permute.xlu0 %1593
    %v1596 = vsel %vm105, %v295, 0
    %v1598 = vsel %vm105, %v1594, 0
    %1600 = vmatprep.subr.mxu0 0.0
    %1601 = vmatpush1.xpose.msra.mxu0 %v1598
    %1602 = vmatprep.subr.mxu0 0.0
    %1603 = vmatpush1.xpose.msra.mxu0 0.0
    %1604 = vmatprep.subr.mxu0 0.0
    %1605 = vmatpush1.xpose.msra.mxu0 0.0
    %1606 = vmatprep.subr.mxu0 0.0
    %1607 = vmatpush1.xpose.msra.mxu0 0.0
    %1608 = vmatprep.subr.mxu0 0.0
    %1609 = vmatpush1.xpose.msra.mxu0 0.0
    %1610 = vmatprep.subr.mxu0 0.0
    %1611 = vmatpush1.xpose.msra.mxu0 0.0
    %1612 = vmatprep.subr.mxu0 0.0
    %1613 = vmatpush1.xpose.msra.mxu0 0.0
    %1614 = vmatprep.subr.mxu0 0.0
    %1615 = vmatpush1.xpose.msra.mxu0 0.0
    %1616 = vmatprep.subr.mxu0 0.0
    %1617 = vmatpush1.xpose.msra.mxu0 0.0
    %1618 = vmatprep.subr.mxu0 0.0
    %1619 = vmatpush1.xpose.msra.mxu0 0.0
    %1620 = vmatprep.subr.mxu0 0.0
    %1621 = vmatpush1.xpose.msra.mxu0 0.0
    %1622 = vmatprep.subr.mxu0 0.0
    %1623 = vmatpush1.xpose.msra.mxu0 0.0
    %1624 = vmatprep.subr.mxu0 0.0
    %1625 = vmatpush1.xpose.msra.mxu0 0.0
    %1626 = vmatprep.subr.mxu0 0.0
    %1627 = vmatpush1.xpose.msra.mxu0 0.0
    %1628 = vmatprep.subr.mxu0 0.0
    %1629 = vmatpush1.xpose.msra.mxu0 0.0
    %1630 = vmatprep.subr.mxu0 0.0
    %1631 = vmatpush1.xpose.msra.mxu0 0.0
    %1632 = vmatprep.subr.mxu0 0.0
    %1633 = vmatpush1.xpose.msra.mxu0 0.0
    %1634 = vmatprep.subr.mxu0 0.0
    %1635 = vmatpush1.xpose.msra.mxu0 0.0
    %1636 = vmatprep.subr.mxu0 0.0
    %1637 = vmatpush1.xpose.msra.mxu0 0.0
    %1638 = vmatprep.subr.mxu0 0.0
    %1639 = vmatpush1.xpose.msra.mxu0 0.0
    %1640 = vmatprep.subr.mxu0 0.0
    %1641 = vmatpush1.xpose.msra.mxu0 0.0
    %1642 = vmatprep.subr.mxu0 0.0
    %1643 = vmatpush1.xpose.msra.mxu0 0.0
    %1644 = vmatprep.subr.mxu0 0.0
    %1645 = vmatpush1.xpose.msra.mxu0 0.0
    %1646 = vmatprep.subr.mxu0 0.0
    %1647 = vmatpush1.xpose.msra.mxu0 0.0
    %1648 = vmatprep.subr.mxu0 0.0
    %1649 = vmatpush1.xpose.msra.mxu0 0.0
    %1650 = vmatprep.subr.mxu0 0.0
    %1651 = vmatpush1.xpose.msra.mxu0 0.0
    %1652 = vmatprep.subr.mxu0 0.0
    %1653 = vmatpush1.xpose.msra.mxu0 0.0
    %1654 = vmatprep.subr.mxu0 0.0
    %1655 = vmatpush1.xpose.msra.mxu0 0.0
    %1656 = vmatprep.subr.mxu0 0.0
    %1657 = vmatpush1.xpose.msra.mxu0 0.0
    %1658 = vmatprep.subr.mxu0 0.0
    %1659 = vmatpush1.xpose.msra.mxu0 0.0
    %1660 = vmatprep.subr.mxu0 0.0
    %1661 = vmatpush1.xpose.msra.mxu0 0.0
    %1662 = vmatprep.subr.mxu0 0.0
    %1663 = vmatpush1.xpose.msra.mxu0 0.0
    %1664 = vmatprep.mubr.f32.mxu0 0.0
    %1665 = vmatmul.mubr.f32.gmra.mrb[0].mxu0 %v1596
    %v1666 = vpop.f32.mrb[0].mxu0
    %v1667 = vadd.f32 0.0, %v1666
    %v1668 = vpop.f32.mrb[0].mxu0
    %1669 = vdwg.mxu0
    %1671 = vrot.lane.b32.xlu0 %v497, 124
    %v1672 = vpop.permute.xlu0 %1671
    %v1674 = vsel %vm105, %v300, 0
    %v1676 = vsel %vm105, %v1672, 0
    %1678 = vmatprep.subr.mxu0 0.0
    %1679 = vmatpush1.xpose.msra.mxu0 %v1676
    %1680 = vmatprep.subr.mxu0 0.0
    %1681 = vmatpush1.xpose.msra.mxu0 0.0
    %1682 = vmatprep.subr.mxu0 0.0
    %1683 = vmatpush1.xpose.msra.mxu0 0.0
    %1684 = vmatprep.subr.mxu0 0.0
    %1685 = vmatpush1.xpose.msra.mxu0 0.0
    %1686 = vmatprep.subr.mxu0 0.0
    %1687 = vmatpush1.xpose.msra.mxu0 0.0
    %1688 = vmatprep.subr.mxu0 0.0
    %1689 = vmatpush1.xpose.msra.mxu0 0.0
    %1690 = vmatprep.subr.mxu0 0.0
    %1691 = vmatpush1.xpose.msra.mxu0 0.0
    %1692 = vmatprep.subr.mxu0 0.0
    %1693 = vmatpush1.xpose.msra.mxu0 0.0
    %1694 = vmatprep.subr.mxu0 0.0
    %1695 = vmatpush1.xpose.msra.mxu0 0.0
    %1696 = vmatprep.subr.mxu0 0.0
    %1697 = vmatpush1.xpose.msra.mxu0 0.0
    %1698 = vmatprep.subr.mxu0 0.0
    %1699 = vmatpush1.xpose.msra.mxu0 0.0
    %1700 = vmatprep.subr.mxu0 0.0
    %1701 = vmatpush1.xpose.msra.mxu0 0.0
    %1702 = vmatprep.subr.mxu0 0.0
    %1703 = vmatpush1.xpose.msra.mxu0 0.0
    %1704 = vmatprep.subr.mxu0 0.0
    %1705 = vmatpush1.xpose.msra.mxu0 0.0
    %1706 = vmatprep.subr.mxu0 0.0
    %1707 = vmatpush1.xpose.msra.mxu0 0.0
    %1708 = vmatprep.subr.mxu0 0.0
    %1709 = vmatpush1.xpose.msra.mxu0 0.0
    %1710 = vmatprep.subr.mxu0 0.0
    %1711 = vmatpush1.xpose.msra.mxu0 0.0
    %1712 = vmatprep.subr.mxu0 0.0
    %1713 = vmatpush1.xpose.msra.mxu0 0.0
    %1714 = vmatprep.subr.mxu0 0.0
    %1715 = vmatpush1.xpose.msra.mxu0 0.0
    %1716 = vmatprep.subr.mxu0 0.0
    %1717 = vmatpush1.xpose.msra.mxu0 0.0
    %1718 = vmatprep.subr.mxu0 0.0
    %1719 = vmatpush1.xpose.msra.mxu0 0.0
    %1720 = vmatprep.subr.mxu0 0.0
    %1721 = vmatpush1.xpose.msra.mxu0 0.0
    %1722 = vmatprep.subr.mxu0 0.0
    %1723 = vmatpush1.xpose.msra.mxu0 0.0
    %1724 = vmatprep.subr.mxu0 0.0
    %1725 = vmatpush1.xpose.msra.mxu0 0.0
    %1726 = vmatprep.subr.mxu0 0.0
    %1727 = vmatpush1.xpose.msra.mxu0 0.0
    %1728 = vmatprep.subr.mxu0 0.0
    %1729 = vmatpush1.xpose.msra.mxu0 0.0
    %1730 = vmatprep.subr.mxu0 0.0
    %1731 = vmatpush1.xpose.msra.mxu0 0.0
    %1732 = vmatprep.subr.mxu0 0.0
    %1733 = vmatpush1.xpose.msra.mxu0 0.0
    %1734 = vmatprep.subr.mxu0 0.0
    %1735 = vmatpush1.xpose.msra.mxu0 0.0
    %1736 = vmatprep.subr.mxu0 0.0
    %1737 = vmatpush1.xpose.msra.mxu0 0.0
    %1738 = vmatprep.subr.mxu0 0.0
    %1739 = vmatpush1.xpose.msra.mxu0 0.0
    %1740 = vmatprep.subr.mxu0 0.0
    %1741 = vmatpush1.xpose.msra.mxu0 0.0
    %1742 = vmatprep.mubr.f32.mxu0 0.0
    %1743 = vmatmul.mubr.f32.gmra.mrb[0].mxu0 %v1674
    %v1744 = vpop.f32.mrb[0].mxu0
    %v1745 = vadd.f32 0.0, %v1744
    %v1746 = vpop.f32.mrb[0].mxu0
    %1747 = vdwg.mxu0
    %1748 = vrot.lane.b32.xlu0 %v225, 124
    %v1749 = vpop.permute.xlu0 %1748
    %v1750 = vsel %vm105, %v422, 0
    %v1752 = vsel %vm105, %v1749, 0
    %1754 = vmatprep.subr.mxu0 0.0
    %1755 = vmatpush1.xpose.msra.mxu0 %v1752
    %1756 = vmatprep.subr.mxu0 0.0
    %1757 = vmatpush1.xpose.msra.mxu0 0.0
    %1758 = vmatprep.subr.mxu0 0.0
    %1759 = vmatpush1.xpose.msra.mxu0 0.0
    %1760 = vmatprep.subr.mxu0 0.0
    %1761 = vmatpush1.xpose.msra.mxu0 0.0
    %1762 = vmatprep.subr.mxu0 0.0
    %1763 = vmatpush1.xpose.msra.mxu0 0.0
    %1764 = vmatprep.subr.mxu0 0.0
    %1765 = vmatpush1.xpose.msra.mxu0 0.0
    %1766 = vmatprep.subr.mxu0 0.0
    %1767 = vmatpush1.xpose.msra.mxu0 0.0
    %1768 = vmatprep.subr.mxu0 0.0
    %1769 = vmatpush1.xpose.msra.mxu0 0.0
    %1770 = vmatprep.subr.mxu0 0.0
    %1771 = vmatpush1.xpose.msra.mxu0 0.0
    %1772 = vmatprep.subr.mxu0 0.0
    %1773 = vmatpush1.xpose.msra.mxu0 0.0
    %1774 = vmatprep.subr.mxu0 0.0
    %1775 = vmatpush1.xpose.msra.mxu0 0.0
    %1776 = vmatprep.subr.mxu0 0.0
    %1777 = vmatpush1.xpose.msra.mxu0 0.0
    %1778 = vmatprep.subr.mxu0 0.0
    %1779 = vmatpush1.xpose.msra.mxu0 0.0
    %1780 = vmatprep.subr.mxu0 0.0
    %1781 = vmatpush1.xpose.msra.mxu0 0.0
    %1782 = vmatprep.subr.mxu0 0.0
    %1783 = vmatpush1.xpose.msra.mxu0 0.0
    %1784 = vmatprep.subr.mxu0 0.0
    %1785 = vmatpush1.xpose.msra.mxu0 0.0
    %1786 = vmatprep.subr.mxu0 0.0
    %1787 = vmatpush1.xpose.msra.mxu0 0.0
    %1788 = vmatprep.subr.mxu0 0.0
    %1789 = vmatpush1.xpose.msra.mxu0 0.0
    %1790 = vmatprep.subr.mxu0 0.0
    %1791 = vmatpush1.xpose.msra.mxu0 0.0
    %1792 = vmatprep.subr.mxu0 0.0
    %1793 = vmatpush1.xpose.msra.mxu0 0.0
    %1794 = vmatprep.subr.mxu0 0.0
    %1795 = vmatpush1.xpose.msra.mxu0 0.0
    %1796 = vmatprep.subr.mxu0 0.0
    %1797 = vmatpush1.xpose.msra.mxu0 0.0
    %1798 = vmatprep.subr.mxu0 0.0
    %1799 = vmatpush1.xpose.msra.mxu0 0.0
    %1800 = vmatprep.subr.mxu0 0.0
    %1801 = vmatpush1.xpose.msra.mxu0 0.0
    %1802 = vmatprep.subr.mxu0 0.0
    %1803 = vmatpush1.xpose.msra.mxu0 0.0
    %1804 = vmatprep.subr.mxu0 0.0
    %1805 = vmatpush1.xpose.msra.mxu0 0.0
    %1806 = vmatprep.subr.mxu0 0.0
    %1807 = vmatpush1.xpose.msra.mxu0 0.0
    %1808 = vmatprep.subr.mxu0 0.0
    %1809 = vmatpush1.xpose.msra.mxu0 0.0
    %1810 = vmatprep.subr.mxu0 0.0
    %1811 = vmatpush1.xpose.msra.mxu0 0.0
    %1812 = vmatprep.subr.mxu0 0.0
    %1813 = vmatpush1.xpose.msra.mxu0 0.0
    %1814 = vmatprep.subr.mxu0 0.0
    %1815 = vmatpush1.xpose.msra.mxu0 0.0
    %1816 = vmatprep.subr.mxu0 0.0
    %1817 = vmatpush1.xpose.msra.mxu0 0.0
    %1818 = vmatprep.mubr.f32.mxu0 0.0
    %1819 = vmatmul.mubr.f32.gmra.mrb[0].mxu0 %v1750
    %v1820 = vpop.f32.mrb[0].mxu0
    %v1821 = vadd.f32 0.0, %v1820
    %v1822 = vpop.f32.mrb[0].mxu0
    %1823 = vdwg.mxu0
    %1824 = vrot.lane.b32.xlu0 %v230, 124
    %v1825 = vpop.permute.xlu0 %1824
    %v1826 = vsel %vm105, %v427, 0
    %v1828 = vsel %vm105, %v1825, 0
    %1830 = vmatprep.subr.mxu0 0.0
    %1831 = vmatpush1.xpose.msra.mxu0 %v1828
    %1832 = vmatprep.subr.mxu0 0.0
    %1833 = vmatpush1.xpose.msra.mxu0 0.0
    %1834 = vmatprep.subr.mxu0 0.0
    %1835 = vmatpush1.xpose.msra.mxu0 0.0
    %1836 = vmatprep.subr.mxu0 0.0
    %1837 = vmatpush1.xpose.msra.mxu0 0.0
    %1838 = vmatprep.subr.mxu0 0.0
    %1839 = vmatpush1.xpose.msra.mxu0 0.0
    %1840 = vmatprep.subr.mxu0 0.0
    %1841 = vmatpush1.xpose.msra.mxu0 0.0
    %1842 = vmatprep.subr.mxu0 0.0
    %1843 = vmatpush1.xpose.msra.mxu0 0.0
    %1844 = vmatprep.subr.mxu0 0.0
    %1845 = vmatpush1.xpose.msra.mxu0 0.0
    %1846 = vmatprep.subr.mxu0 0.0
    %1847 = vmatpush1.xpose.msra.mxu0 0.0
    %1848 = vmatprep.subr.mxu0 0.0
    %1849 = vmatpush1.xpose.msra.mxu0 0.0
    %1850 = vmatprep.subr.mxu0 0.0
    %1851 = vmatpush1.xpose.msra.mxu0 0.0
    %1852 = vmatprep.subr.mxu0 0.0
    %1853 = vmatpush1.xpose.msra.mxu0 0.0
    %1854 = vmatprep.subr.mxu0 0.0
    %1855 = vmatpush1.xpose.msra.mxu0 0.0
    %1856 = vmatprep.subr.mxu0 0.0
    %1857 = vmatpush1.xpose.msra.mxu0 0.0
    %1858 = vmatprep.subr.mxu0 0.0
    %1859 = vmatpush1.xpose.msra.mxu0 0.0
    %1860 = vmatprep.subr.mxu0 0.0
    %1861 = vmatpush1.xpose.msra.mxu0 0.0
    %1862 = vmatprep.subr.mxu0 0.0
    %1863 = vmatpush1.xpose.msra.mxu0 0.0
    %1864 = vmatprep.subr.mxu0 0.0
    %1865 = vmatpush1.xpose.msra.mxu0 0.0
    %1866 = vmatprep.subr.mxu0 0.0
    %1867 = vmatpush1.xpose.msra.mxu0 0.0
    %1868 = vmatprep.subr.mxu0 0.0
    %1869 = vmatpush1.xpose.msra.mxu0 0.0
    %1870 = vmatprep.subr.mxu0 0.0
    %1871 = vmatpush1.xpose.msra.mxu0 0.0
    %1872 = vmatprep.subr.mxu0 0.0
    %1873 = vmatpush1.xpose.msra.mxu0 0.0
    %1874 = vmatprep.subr.mxu0 0.0
    %1875 = vmatpush1.xpose.msra.mxu0 0.0
    %1876 = vmatprep.subr.mxu0 0.0
    %1877 = vmatpush1.xpose.msra.mxu0 0.0
    %1878 = vmatprep.subr.mxu0 0.0
    %1879 = vmatpush1.xpose.msra.mxu0 0.0
    %1880 = vmatprep.subr.mxu0 0.0
    %1881 = vmatpush1.xpose.msra.mxu0 0.0
    %1882 = vmatprep.subr.mxu0 0.0
    %1883 = vmatpush1.xpose.msra.mxu0 0.0
    %1884 = vmatprep.subr.mxu0 0.0
    %1885 = vmatpush1.xpose.msra.mxu0 0.0
    %1886 = vmatprep.subr.mxu0 0.0
    %1887 = vmatpush1.xpose.msra.mxu0 0.0
    %1888 = vmatprep.subr.mxu0 0.0
    %1889 = vmatpush1.xpose.msra.mxu0 0.0
    %1890 = vmatprep.subr.mxu0 0.0
    %1891 = vmatpush1.xpose.msra.mxu0 0.0
    %1892 = vmatprep.subr.mxu0 0.0
    %1893 = vmatpush1.xpose.msra.mxu0 0.0
    %1894 = vmatprep.mubr.f32.mxu0 0.0
    %1895 = vmatmul.mubr.f32.gmra.mrb[0].mxu0 %v1826
    %v1896 = vpop.f32.mrb[0].mxu0
    %v1897 = vadd.f32 0.0, %v1896
    %v1898 = vpop.f32.mrb[0].mxu0
    %1899 = vdwg.mxu0
    %1900 = vrot.lane.b32.xlu0 %v235, 124
    %v1901 = vpop.permute.xlu0 %1900
    %v1902 = vsel %vm105, %v432, 0
    %v1904 = vsel %vm105, %v1901, 0
    %1906 = vmatprep.subr.mxu0 0.0
    %1907 = vmatpush1.xpose.msra.mxu0 %v1904
    %1908 = vmatprep.subr.mxu0 0.0
    %1909 = vmatpush1.xpose.msra.mxu0 0.0
    %1910 = vmatprep.subr.mxu0 0.0
    %1911 = vmatpush1.xpose.msra.mxu0 0.0
    %1912 = vmatprep.subr.mxu0 0.0
    %1913 = vmatpush1.xpose.msra.mxu0 0.0
    %1914 = vmatprep.subr.mxu0 0.0
    %1915 = vmatpush1.xpose.msra.mxu0 0.0
    %1916 = vmatprep.subr.mxu0 0.0
    %1917 = vmatpush1.xpose.msra.mxu0 0.0
    %1918 = vmatprep.subr.mxu0 0.0
    %1919 = vmatpush1.xpose.msra.mxu0 0.0
    %1920 = vmatprep.subr.mxu0 0.0
    %1921 = vmatpush1.xpose.msra.mxu0 0.0
    %1922 = vmatprep.subr.mxu0 0.0
    %1923 = vmatpush1.xpose.msra.mxu0 0.0
    %1924 = vmatprep.subr.mxu0 0.0
    %1925 = vmatpush1.xpose.msra.mxu0 0.0
    %1926 = vmatprep.subr.mxu0 0.0
    %1927 = vmatpush1.xpose.msra.mxu0 0.0
    %1928 = vmatprep.subr.mxu0 0.0
    %1929 = vmatpush1.xpose.msra.mxu0 0.0
    %1930 = vmatprep.subr.mxu0 0.0
    %1931 = vmatpush1.xpose.msra.mxu0 0.0
    %1932 = vmatprep.subr.mxu0 0.0
    %1933 = vmatpush1.xpose.msra.mxu0 0.0
    %1934 = vmatprep.subr.mxu0 0.0
    %1935 = vmatpush1.xpose.msra.mxu0 0.0
    %1936 = vmatprep.subr.mxu0 0.0
    %1937 = vmatpush1.xpose.msra.mxu0 0.0
    %1938 = vmatprep.subr.mxu0 0.0
    %1939 = vmatpush1.xpose.msra.mxu0 0.0
    %1940 = vmatprep.subr.mxu0 0.0
    %1941 = vmatpush1.xpose.msra.mxu0 0.0
    %1942 = vmatprep.subr.mxu0 0.0
    %1943 = vmatpush1.xpose.msra.mxu0 0.0
    %1944 = vmatprep.subr.mxu0 0.0
    %1945 = vmatpush1.xpose.msra.mxu0 0.0
    %1946 = vmatprep.subr.mxu0 0.0
    %1947 = vmatpush1.xpose.msra.mxu0 0.0
    %1948 = vmatprep.subr.mxu0 0.0
    %1949 = vmatpush1.xpose.msra.mxu0 0.0
    %1950 = vmatprep.subr.mxu0 0.0
    %1951 = vmatpush1.xpose.msra.mxu0 0.0
    %1952 = vmatprep.subr.mxu0 0.0
    %1953 = vmatpush1.xpose.msra.mxu0 0.0
    %1954 = vmatprep.subr.mxu0 0.0
    %1955 = vmatpush1.xpose.msra.mxu0 0.0
    %1956 = vmatprep.subr.mxu0 0.0
    %1957 = vmatpush1.xpose.msra.mxu0 0.0
    %1958 = vmatprep.subr.mxu0 0.0
    %1959 = vmatpush1.xpose.msra.mxu0 0.0
    %1960 = vmatprep.subr.mxu0 0.0
    %1961 = vmatpush1.xpose.msra.mxu0 0.0
    %1962 = vmatprep.subr.mxu0 0.0
    %1963 = vmatpush1.xpose.msra.mxu0 0.0
    %1964 = vmatprep.subr.mxu0 0.0
    %1965 = vmatpush1.xpose.msra.mxu0 0.0
    %1966 = vmatprep.subr.mxu0 0.0
    %1967 = vmatpush1.xpose.msra.mxu0 0.0
    %1968 = vmatprep.subr.mxu0 0.0
    %1969 = vmatpush1.xpose.msra.mxu0 0.0
    %1970 = vmatprep.mubr.f32.mxu0 0.0
    %1971 = vmatmul.mubr.f32.gmra.mrb[0].mxu0 %v1902
    %v1972 = vpop.f32.mrb[0].mxu0
    %v1973 = vadd.f32 0.0, %v1972
    %v1974 = vpop.f32.mrb[0].mxu0
    %1975 = vdwg.mxu0
    %1976 = vrot.lane.b32.xlu0 %v240, 124
    %v1977 = vpop.permute.xlu0 %1976
    %v1978 = vsel %vm105, %v437, 0
    %v1980 = vsel %vm105, %v1977, 0
    %1982 = vmatprep.subr.mxu0 0.0
    %1983 = vmatpush1.xpose.msra.mxu0 %v1980
    %1984 = vmatprep.subr.mxu0 0.0
    %1985 = vmatpush1.xpose.msra.mxu0 0.0
    %1986 = vmatprep.subr.mxu0 0.0
    %1987 = vmatpush1.xpose.msra.mxu0 0.0
    %1988 = vmatprep.subr.mxu0 0.0
    %1989 = vmatpush1.xpose.msra.mxu0 0.0
    %1990 = vmatprep.subr.mxu0 0.0
    %1991 = vmatpush1.xpose.msra.mxu0 0.0
    %1992 = vmatprep.subr.mxu0 0.0
    %1993 = vmatpush1.xpose.msra.mxu0 0.0
    %1994 = vmatprep.subr.mxu0 0.0
    %1995 = vmatpush1.xpose.msra.mxu0 0.0
    %1996 = vmatprep.subr.mxu0 0.0
    %1997 = vmatpush1.xpose.msra.mxu0 0.0
    %1998 = vmatprep.subr.mxu0 0.0
    %1999 = vmatpush1.xpose.msra.mxu0 0.0
    %2000 = vmatprep.subr.mxu0 0.0
    %2001 = vmatpush1.xpose.msra.mxu0 0.0
    %2002 = vmatprep.subr.mxu0 0.0
    %2003 = vmatpush1.xpose.msra.mxu0 0.0
    %2004 = vmatprep.subr.mxu0 0.0
    %2005 = vmatpush1.xpose.msra.mxu0 0.0
    %2006 = vmatprep.subr.mxu0 0.0
    %2007 = vmatpush1.xpose.msra.mxu0 0.0
    %2008 = vmatprep.subr.mxu0 0.0
    %2009 = vmatpush1.xpose.msra.mxu0 0.0
    %2010 = vmatprep.subr.mxu0 0.0
    %2011 = vmatpush1.xpose.msra.mxu0 0.0
    %2012 = vmatprep.subr.mxu0 0.0
    %2013 = vmatpush1.xpose.msra.mxu0 0.0
    %2014 = vmatprep.subr.mxu0 0.0
    %2015 = vmatpush1.xpose.msra.mxu0 0.0
    %2016 = vmatprep.subr.mxu0 0.0
    %2017 = vmatpush1.xpose.msra.mxu0 0.0
    %2018 = vmatprep.subr.mxu0 0.0
    %2019 = vmatpush1.xpose.msra.mxu0 0.0
    %2020 = vmatprep.subr.mxu0 0.0
    %2021 = vmatpush1.xpose.msra.mxu0 0.0
    %2022 = vmatprep.subr.mxu0 0.0
    %2023 = vmatpush1.xpose.msra.mxu0 0.0
    %2024 = vmatprep.subr.mxu0 0.0
    %2025 = vmatpush1.xpose.msra.mxu0 0.0
    %2026 = vmatprep.subr.mxu0 0.0
    %2027 = vmatpush1.xpose.msra.mxu0 0.0
    %2028 = vmatprep.subr.mxu0 0.0
    %2029 = vmatpush1.xpose.msra.mxu0 0.0
    %2030 = vmatprep.subr.mxu0 0.0
    %2031 = vmatpush1.xpose.msra.mxu0 0.0
    %2032 = vmatprep.subr.mxu0 0.0
    %2033 = vmatpush1.xpose.msra.mxu0 0.0
    %2034 = vmatprep.subr.mxu0 0.0
    %2035 = vmatpush1.xpose.msra.mxu0 0.0
    %2036 = vmatprep.subr.mxu0 0.0
    %2037 = vmatpush1.xpose.msra.mxu0 0.0
    %2038 = vmatprep.subr.mxu0 0.0
    %2039 = vmatpush1.xpose.msra.mxu0 0.0
    %2040 = vmatprep.subr.mxu0 0.0
    %2041 = vmatpush1.xpose.msra.mxu0 0.0
    %2042 = vmatprep.subr.mxu0 0.0
    %2043 = vmatpush1.xpose.msra.mxu0 0.0
    %2044 = vmatprep.subr.mxu0 0.0
    %2045 = vmatpush1.xpose.msra.mxu0 0.0
    %2046 = vmatprep.mubr.f32.mxu0 0.0
    %2047 = vmatmul.mubr.f32.gmra.mrb[0].mxu0 %v1978
    %v2048 = vpop.f32.mrb[0].mxu0
    %v2049 = vadd.f32 0.0, %v2048
    %v2050 = vpop.f32.mrb[0].mxu0
    %2051 = vdwg.mxu0
    %2052 = vrot.lane.b32.xlu0 %v245, 124
    %v2053 = vpop.permute.xlu0 %2052
    %v2054 = vsel %vm105, %v442, 0
    %v2056 = vsel %vm105, %v2053, 0
    %2058 = vmatprep.subr.mxu0 0.0
    %2059 = vmatpush1.xpose.msra.mxu0 %v2056
    %2060 = vmatprep.subr.mxu0 0.0
    %2061 = vmatpush1.xpose.msra.mxu0 0.0
    %2062 = vmatprep.subr.mxu0 0.0
    %2063 = vmatpush1.xpose.msra.mxu0 0.0
    %2064 = vmatprep.subr.mxu0 0.0
    %2065 = vmatpush1.xpose.msra.mxu0 0.0
    %2066 = vmatprep.subr.mxu0 0.0
    %2067 = vmatpush1.xpose.msra.mxu0 0.0
    %2068 = vmatprep.subr.mxu0 0.0
    %2069 = vmatpush1.xpose.msra.mxu0 0.0
    %2070 = vmatprep.subr.mxu0 0.0
    %2071 = vmatpush1.xpose.msra.mxu0 0.0
    %2072 = vmatprep.subr.mxu0 0.0
    %2073 = vmatpush1.xpose.msra.mxu0 0.0
    %2074 = vmatprep.subr.mxu0 0.0
    %2075 = vmatpush1.xpose.msra.mxu0 0.0
    %2076 = vmatprep.subr.mxu0 0.0
    %2077 = vmatpush1.xpose.msra.mxu0 0.0
    %2078 = vmatprep.subr.mxu0 0.0
    %2079 = vmatpush1.xpose.msra.mxu0 0.0
    %2080 = vmatprep.subr.mxu0 0.0
    %2081 = vmatpush1.xpose.msra.mxu0 0.0
    %2082 = vmatprep.subr.mxu0 0.0
    %2083 = vmatpush1.xpose.msra.mxu0 0.0
    %2084 = vmatprep.subr.mxu0 0.0
    %2085 = vmatpush1.xpose.msra.mxu0 0.0
    %2086 = vmatprep.subr.mxu0 0.0
    %2087 = vmatpush1.xpose.msra.mxu0 0.0
    %2088 = vmatprep.subr.mxu0 0.0
    %2089 = vmatpush1.xpose.msra.mxu0 0.0
    %2090 = vmatprep.subr.mxu0 0.0
    %2091 = vmatpush1.xpose.msra.mxu0 0.0
    %2092 = vmatprep.subr.mxu0 0.0
    %2093 = vmatpush1.xpose.msra.mxu0 0.0
    %2094 = vmatprep.subr.mxu0 0.0
    %2095 = vmatpush1.xpose.msra.mxu0 0.0
    %2096 = vmatprep.subr.mxu0 0.0
    %2097 = vmatpush1.xpose.msra.mxu0 0.0
    %2098 = vmatprep.subr.mxu0 0.0
    %2099 = vmatpush1.xpose.msra.mxu0 0.0
    %2100 = vmatprep.subr.mxu0 0.0
    %2101 = vmatpush1.xpose.msra.mxu0 0.0
    %2102 = vmatprep.subr.mxu0 0.0
    %2103 = vmatpush1.xpose.msra.mxu0 0.0
    %2104 = vmatprep.subr.mxu0 0.0
    %2105 = vmatpush1.xpose.msra.mxu0 0.0
    %2106 = vmatprep.subr.mxu0 0.0
    %2107 = vmatpush1.xpose.msra.mxu0 0.0
    %2108 = vmatprep.subr.mxu0 0.0
    %2109 = vmatpush1.xpose.msra.mxu0 0.0
    %2110 = vmatprep.subr.mxu0 0.0
    %2111 = vmatpush1.xpose.msra.mxu0 0.0
    %2112 = vmatprep.subr.mxu0 0.0
    %2113 = vmatpush1.xpose.msra.mxu0 0.0
    %2114 = vmatprep.subr.mxu0 0.0
    %2115 = vmatpush1.xpose.msra.mxu0 0.0
    %2116 = vmatprep.subr.mxu0 0.0
    %2117 = vmatpush1.xpose.msra.mxu0 0.0
    %2118 = vmatprep.subr.mxu0 0.0
    %2119 = vmatpush1.xpose.msra.mxu0 0.0
    %2120 = vmatprep.subr.mxu0 0.0
    %2121 = vmatpush1.xpose.msra.mxu0 0.0
    %2122 = vmatprep.mubr.f32.mxu0 0.0
    %2123 = vmatmul.mubr.f32.gmra.mrb[0].mxu0 %v2054
    %v2124 = vpop.f32.mrb[0].mxu0
    %v2125 = vadd.f32 0.0, %v2124
    %v2126 = vpop.f32.mrb[0].mxu0
    %2127 = vdwg.mxu0
    %2128 = vrot.lane.b32.xlu0 %v250, 124
    %v2129 = vpop.permute.xlu0 %2128
    %v2130 = vsel %vm105, %v447, 0
    %v2132 = vsel %vm105, %v2129, 0
    %2134 = vmatprep.subr.mxu0 0.0
    %2135 = vmatpush1.xpose.msra.mxu0 %v2132
    %2136 = vmatprep.subr.mxu0 0.0
    %2137 = vmatpush1.xpose.msra.mxu0 0.0
    %2138 = vmatprep.subr.mxu0 0.0
    %2139 = vmatpush1.xpose.msra.mxu0 0.0
    %2140 = vmatprep.subr.mxu0 0.0
    %2141 = vmatpush1.xpose.msra.mxu0 0.0
    %2142 = vmatprep.subr.mxu0 0.0
    %2143 = vmatpush1.xpose.msra.mxu0 0.0
    %2144 = vmatprep.subr.mxu0 0.0
    %2145 = vmatpush1.xpose.msra.mxu0 0.0
    %2146 = vmatprep.subr.mxu0 0.0
    %2147 = vmatpush1.xpose.msra.mxu0 0.0
    %2148 = vmatprep.subr.mxu0 0.0
    %2149 = vmatpush1.xpose.msra.mxu0 0.0
    %2150 = vmatprep.subr.mxu0 0.0
    %2151 = vmatpush1.xpose.msra.mxu0 0.0
    %2152 = vmatprep.subr.mxu0 0.0
    %2153 = vmatpush1.xpose.msra.mxu0 0.0
    %2154 = vmatprep.subr.mxu0 0.0
    %2155 = vmatpush1.xpose.msra.mxu0 0.0
    %2156 = vmatprep.subr.mxu0 0.0
    %2157 = vmatpush1.xpose.msra.mxu0 0.0
    %2158 = vmatprep.subr.mxu0 0.0
    %2159 = vmatpush1.xpose.msra.mxu0 0.0
    %2160 = vmatprep.subr.mxu0 0.0
    %2161 = vmatpush1.xpose.msra.mxu0 0.0
    %2162 = vmatprep.subr.mxu0 0.0
    %2163 = vmatpush1.xpose.msra.mxu0 0.0
    %2164 = vmatprep.subr.mxu0 0.0
    %2165 = vmatpush1.xpose.msra.mxu0 0.0
    %2166 = vmatprep.subr.mxu0 0.0
    %2167 = vmatpush1.xpose.msra.mxu0 0.0
    %2168 = vmatprep.subr.mxu0 0.0
    %2169 = vmatpush1.xpose.msra.mxu0 0.0
    %2170 = vmatprep.subr.mxu0 0.0
    %2171 = vmatpush1.xpose.msra.mxu0 0.0
    %2172 = vmatprep.subr.mxu0 0.0
    %2173 = vmatpush1.xpose.msra.mxu0 0.0
    %2174 = vmatprep.subr.mxu0 0.0
    %2175 = vmatpush1.xpose.msra.mxu0 0.0
    %2176 = vmatprep.subr.mxu0 0.0
    %2177 = vmatpush1.xpose.msra.mxu0 0.0
    %2178 = vmatprep.subr.mxu0 0.0
    %2179 = vmatpush1.xpose.msra.mxu0 0.0
    %2180 = vmatprep.subr.mxu0 0.0
    %2181 = vmatpush1.xpose.msra.mxu0 0.0
    %2182 = vmatprep.subr.mxu0 0.0
    %2183 = vmatpush1.xpose.msra.mxu0 0.0
    %2184 = vmatprep.subr.mxu0 0.0
    %2185 = vmatpush1.xpose.msra.mxu0 0.0
    %2186 = vmatprep.subr.mxu0 0.0
    %2187 = vmatpush1.xpose.msra.mxu0 0.0
    %2188 = vmatprep.subr.mxu0 0.0
    %2189 = vmatpush1.xpose.msra.mxu0 0.0
    %2190 = vmatprep.subr.mxu0 0.0
    %2191 = vmatpush1.xpose.msra.mxu0 0.0
    %2192 = vmatprep.subr.mxu0 0.0
    %2193 = vmatpush1.xpose.msra.mxu0 0.0
    %2194 = vmatprep.subr.mxu0 0.0
    %2195 = vmatpush1.xpose.msra.mxu0 0.0
    %2196 = vmatprep.subr.mxu0 0.0
    %2197 = vmatpush1.xpose.msra.mxu0 0.0
    %2198 = vmatprep.mubr.f32.mxu0 0.0
    %2199 = vmatmul.mubr.f32.gmra.mrb[0].mxu0 %v2130
    %v2200 = vpop.f32.mrb[0].mxu0
    %v2201 = vadd.f32 0.0, %v2200
    %v2202 = vpop.f32.mrb[0].mxu0
    %2203 = vdwg.mxu0
    %2204 = vrot.lane.b32.xlu0 %v255, 124
    %v2205 = vpop.permute.xlu0 %2204
    %v2206 = vsel %vm105, %v452, 0
    %v2208 = vsel %vm105, %v2205, 0
    %2210 = vmatprep.subr.mxu0 0.0
    %2211 = vmatpush1.xpose.msra.mxu0 %v2208
    %2212 = vmatprep.subr.mxu0 0.0
    %2213 = vmatpush1.xpose.msra.mxu0 0.0
    %2214 = vmatprep.subr.mxu0 0.0
    %2215 = vmatpush1.xpose.msra.mxu0 0.0
    %2216 = vmatprep.subr.mxu0 0.0
    %2217 = vmatpush1.xpose.msra.mxu0 0.0
    %2218 = vmatprep.subr.mxu0 0.0
    %2219 = vmatpush1.xpose.msra.mxu0 0.0
    %2220 = vmatprep.subr.mxu0 0.0
    %2221 = vmatpush1.xpose.msra.mxu0 0.0
    %2222 = vmatprep.subr.mxu0 0.0
    %2223 = vmatpush1.xpose.msra.mxu0 0.0
    %2224 = vmatprep.subr.mxu0 0.0
    %2225 = vmatpush1.xpose.msra.mxu0 0.0
    %2226 = vmatprep.subr.mxu0 0.0
    %2227 = vmatpush1.xpose.msra.mxu0 0.0
    %2228 = vmatprep.subr.mxu0 0.0
    %2229 = vmatpush1.xpose.msra.mxu0 0.0
    %2230 = vmatprep.subr.mxu0 0.0
    %2231 = vmatpush1.xpose.msra.mxu0 0.0
    %2232 = vmatprep.subr.mxu0 0.0
    %2233 = vmatpush1.xpose.msra.mxu0 0.0
    %2234 = vmatprep.subr.mxu0 0.0
    %2235 = vmatpush1.xpose.msra.mxu0 0.0
    %2236 = vmatprep.subr.mxu0 0.0
    %2237 = vmatpush1.xpose.msra.mxu0 0.0
    %2238 = vmatprep.subr.mxu0 0.0
    %2239 = vmatpush1.xpose.msra.mxu0 0.0
    %2240 = vmatprep.subr.mxu0 0.0
    %2241 = vmatpush1.xpose.msra.mxu0 0.0
    %2242 = vmatprep.subr.mxu0 0.0
    %2243 = vmatpush1.xpose.msra.mxu0 0.0
    %2244 = vmatprep.subr.mxu0 0.0
    %2245 = vmatpush1.xpose.msra.mxu0 0.0
    %2246 = vmatprep.subr.mxu0 0.0
    %2247 = vmatpush1.xpose.msra.mxu0 0.0
    %2248 = vmatprep.subr.mxu0 0.0
    %2249 = vmatpush1.xpose.msra.mxu0 0.0
    %2250 = vmatprep.subr.mxu0 0.0
    %2251 = vmatpush1.xpose.msra.mxu0 0.0
    %2252 = vmatprep.subr.mxu0 0.0
    %2253 = vmatpush1.xpose.msra.mxu0 0.0
    %2254 = vmatprep.subr.mxu0 0.0
    %2255 = vmatpush1.xpose.msra.mxu0 0.0
    %2256 = vmatprep.subr.mxu0 0.0
    %2257 = vmatpush1.xpose.msra.mxu0 0.0
    %2258 = vmatprep.subr.mxu0 0.0
    %2259 = vmatpush1.xpose.msra.mxu0 0.0
    %2260 = vmatprep.subr.mxu0 0.0
    %2261 = vmatpush1.xpose.msra.mxu0 0.0
    %2262 = vmatprep.subr.mxu0 0.0
    %2263 = vmatpush1.xpose.msra.mxu0 0.0
    %2264 = vmatprep.subr.mxu0 0.0
    %2265 = vmatpush1.xpose.msra.mxu0 0.0
    %2266 = vmatprep.subr.mxu0 0.0
    %2267 = vmatpush1.xpose.msra.mxu0 0.0
    %2268 = vmatprep.subr.mxu0 0.0
    %2269 = vmatpush1.xpose.msra.mxu0 0.0
    %2270 = vmatprep.subr.mxu0 0.0
    %2271 = vmatpush1.xpose.msra.mxu0 0.0
    %2272 = vmatprep.subr.mxu0 0.0
    %2273 = vmatpush1.xpose.msra.mxu0 0.0
    %2274 = vmatprep.mubr.f32.mxu0 0.0
    %2275 = vmatmul.mubr.f32.gmra.mrb[0].mxu0 %v2206
    %v2276 = vpop.f32.mrb[0].mxu0
    %v2277 = vadd.f32 0.0, %v2276
    %v2278 = vpop.f32.mrb[0].mxu0
    %2279 = vdwg.mxu0
    %2280 = vrot.lane.b32.xlu0 %v260, 124
    %v2281 = vpop.permute.xlu0 %2280
    %v2282 = vsel %vm105, %v457, 0
    %v2284 = vsel %vm105, %v2281, 0
    %2286 = vmatprep.subr.mxu0 0.0
    %2287 = vmatpush1.xpose.msra.mxu0 %v2284
    %2288 = vmatprep.subr.mxu0 0.0
    %2289 = vmatpush1.xpose.msra.mxu0 0.0
    %2290 = vmatprep.subr.mxu0 0.0
    %2291 = vmatpush1.xpose.msra.mxu0 0.0
    %2292 = vmatprep.subr.mxu0 0.0
    %2293 = vmatpush1.xpose.msra.mxu0 0.0
    %2294 = vmatprep.subr.mxu0 0.0
    %2295 = vmatpush1.xpose.msra.mxu0 0.0
    %2296 = vmatprep.subr.mxu0 0.0
    %2297 = vmatpush1.xpose.msra.mxu0 0.0
    %2298 = vmatprep.subr.mxu0 0.0
    %2299 = vmatpush1.xpose.msra.mxu0 0.0
    %2300 = vmatprep.subr.mxu0 0.0
    %2301 = vmatpush1.xpose.msra.mxu0 0.0
    %2302 = vmatprep.subr.mxu0 0.0
    %2303 = vmatpush1.xpose.msra.mxu0 0.0
    %2304 = vmatprep.subr.mxu0 0.0
    %2305 = vmatpush1.xpose.msra.mxu0 0.0
    %2306 = vmatprep.subr.mxu0 0.0
    %2307 = vmatpush1.xpose.msra.mxu0 0.0
    %2308 = vmatprep.subr.mxu0 0.0
    %2309 = vmatpush1.xpose.msra.mxu0 0.0
    %2310 = vmatprep.subr.mxu0 0.0
    %2311 = vmatpush1.xpose.msra.mxu0 0.0
    %2312 = vmatprep.subr.mxu0 0.0
    %2313 = vmatpush1.xpose.msra.mxu0 0.0
    %2314 = vmatprep.subr.mxu0 0.0
    %2315 = vmatpush1.xpose.msra.mxu0 0.0
    %2316 = vmatprep.subr.mxu0 0.0
    %2317 = vmatpush1.xpose.msra.mxu0 0.0
    %2318 = vmatprep.subr.mxu0 0.0
    %2319 = vmatpush1.xpose.msra.mxu0 0.0
    %2320 = vmatprep.subr.mxu0 0.0
    %2321 = vmatpush1.xpose.msra.mxu0 0.0
    %2322 = vmatprep.subr.mxu0 0.0
    %2323 = vmatpush1.xpose.msra.mxu0 0.0
    %2324 = vmatprep.subr.mxu0 0.0
    %2325 = vmatpush1.xpose.msra.mxu0 0.0
    %2326 = vmatprep.subr.mxu0 0.0
    %2327 = vmatpush1.xpose.msra.mxu0 0.0
    %2328 = vmatprep.subr.mxu0 0.0
    %2329 = vmatpush1.xpose.msra.mxu0 0.0
    %2330 = vmatprep.subr.mxu0 0.0
    %2331 = vmatpush1.xpose.msra.mxu0 0.0
    %2332 = vmatprep.subr.mxu0 0.0
    %2333 = vmatpush1.xpose.msra.mxu0 0.0
    %2334 = vmatprep.subr.mxu0 0.0
    %2335 = vmatpush1.xpose.msra.mxu0 0.0
    %2336 = vmatprep.subr.mxu0 0.0
    %2337 = vmatpush1.xpose.msra.mxu0 0.0
    %2338 = vmatprep.subr.mxu0 0.0
    %2339 = vmatpush1.xpose.msra.mxu0 0.0
    %2340 = vmatprep.subr.mxu0 0.0
    %2341 = vmatpush1.xpose.msra.mxu0 0.0
    %2342 = vmatprep.subr.mxu0 0.0
    %2343 = vmatpush1.xpose.msra.mxu0 0.0
    %2344 = vmatprep.subr.mxu0 0.0
    %2345 = vmatpush1.xpose.msra.mxu0 0.0
    %2346 = vmatprep.subr.mxu0 0.0
    %2347 = vmatpush1.xpose.msra.mxu0 0.0
    %2348 = vmatprep.subr.mxu0 0.0
    %2349 = vmatpush1.xpose.msra.mxu0 0.0
    %2350 = vmatprep.mubr.f32.mxu0 0.0
    %2351 = vmatmul.mubr.f32.gmra.mrb[0].mxu0 %v2282
    %v2352 = vpop.f32.mrb[0].mxu0
    %v2353 = vadd.f32 0.0, %v2352
    %v2354 = vpop.f32.mrb[0].mxu0
    %2355 = vdwg.mxu0
    %2356 = vrot.lane.b32.xlu0 %v265, 124
    %v2357 = vpop.permute.xlu0 %2356
    %v2358 = vsel %vm105, %v462, 0
    %v2360 = vsel %vm105, %v2357, 0
    %2362 = vmatprep.subr.mxu0 0.0
    %2363 = vmatpush1.xpose.msra.mxu0 %v2360
    %2364 = vmatprep.subr.mxu0 0.0
    %2365 = vmatpush1.xpose.msra.mxu0 0.0
    %2366 = vmatprep.subr.mxu0 0.0
    %2367 = vmatpush1.xpose.msra.mxu0 0.0
    %2368 = vmatprep.subr.mxu0 0.0
    %2369 = vmatpush1.xpose.msra.mxu0 0.0
    %2370 = vmatprep.subr.mxu0 0.0
    %2371 = vmatpush1.xpose.msra.mxu0 0.0
    %2372 = vmatprep.subr.mxu0 0.0
    %2373 = vmatpush1.xpose.msra.mxu0 0.0
    %2374 = vmatprep.subr.mxu0 0.0
    %2375 = vmatpush1.xpose.msra.mxu0 0.0
    %2376 = vmatprep.subr.mxu0 0.0
    %2377 = vmatpush1.xpose.msra.mxu0 0.0
    %2378 = vmatprep.subr.mxu0 0.0
    %2379 = vmatpush1.xpose.msra.mxu0 0.0
    %2380 = vmatprep.subr.mxu0 0.0
    %2381 = vmatpush1.xpose.msra.mxu0 0.0
    %2382 = vmatprep.subr.mxu0 0.0
    %2383 = vmatpush1.xpose.msra.mxu0 0.0
    %2384 = vmatprep.subr.mxu0 0.0
    %2385 = vmatpush1.xpose.msra.mxu0 0.0
    %2386 = vmatprep.subr.mxu0 0.0
    %2387 = vmatpush1.xpose.msra.mxu0 0.0
    %2388 = vmatprep.subr.mxu0 0.0
    %2389 = vmatpush1.xpose.msra.mxu0 0.0
    %2390 = vmatprep.subr.mxu0 0.0
    %2391 = vmatpush1.xpose.msra.mxu0 0.0
    %2392 = vmatprep.subr.mxu0 0.0
    %2393 = vmatpush1.xpose.msra.mxu0 0.0
    %2394 = vmatprep.subr.mxu0 0.0
    %2395 = vmatpush1.xpose.msra.mxu0 0.0
    %2396 = vmatprep.subr.mxu0 0.0
    %2397 = vmatpush1.xpose.msra.mxu0 0.0
    %2398 = vmatprep.subr.mxu0 0.0
    %2399 = vmatpush1.xpose.msra.mxu0 0.0
    %2400 = vmatprep.subr.mxu0 0.0
    %2401 = vmatpush1.xpose.msra.mxu0 0.0
    %2402 = vmatprep.subr.mxu0 0.0
    %2403 = vmatpush1.xpose.msra.mxu0 0.0
    %2404 = vmatprep.subr.mxu0 0.0
    %2405 = vmatpush1.xpose.msra.mxu0 0.0
    %2406 = vmatprep.subr.mxu0 0.0
    %2407 = vmatpush1.xpose.msra.mxu0 0.0
    %2408 = vmatprep.subr.mxu0 0.0
    %2409 = vmatpush1.xpose.msra.mxu0 0.0
    %2410 = vmatprep.subr.mxu0 0.0
    %2411 = vmatpush1.xpose.msra.mxu0 0.0
    %2412 = vmatprep.subr.mxu0 0.0
    %2413 = vmatpush1.xpose.msra.mxu0 0.0
    %2414 = vmatprep.subr.mxu0 0.0
    %2415 = vmatpush1.xpose.msra.mxu0 0.0
    %2416 = vmatprep.subr.mxu0 0.0
    %2417 = vmatpush1.xpose.msra.mxu0 0.0
    %2418 = vmatprep.subr.mxu0 0.0
    %2419 = vmatpush1.xpose.msra.mxu0 0.0
    %2420 = vmatprep.subr.mxu0 0.0
    %2421 = vmatpush1.xpose.msra.mxu0 0.0
    %2422 = vmatprep.subr.mxu0 0.0
    %2423 = vmatpush1.xpose.msra.mxu0 0.0
    %2424 = vmatprep.subr.mxu0 0.0
    %2425 = vmatpush1.xpose.msra.mxu0 0.0
    %2426 = vmatprep.mubr.f32.mxu0 0.0
    %2427 = vmatmul.mubr.f32.gmra.mrb[0].mxu0 %v2358
    %v2428 = vpop.f32.mrb[0].mxu0
    %v2429 = vadd.f32 0.0, %v2428
    %v2430 = vpop.f32.mrb[0].mxu0
    %2431 = vdwg.mxu0
    %2432 = vrot.lane.b32.xlu0 %v270, 124
    %v2433 = vpop.permute.xlu0 %2432
    %v2434 = vsel %vm105, %v467, 0
    %v2436 = vsel %vm105, %v2433, 0
    %2438 = vmatprep.subr.mxu0 0.0
    %2439 = vmatpush1.xpose.msra.mxu0 %v2436
    %2440 = vmatprep.subr.mxu0 0.0
    %2441 = vmatpush1.xpose.msra.mxu0 0.0
    %2442 = vmatprep.subr.mxu0 0.0
    %2443 = vmatpush1.xpose.msra.mxu0 0.0
    %2444 = vmatprep.subr.mxu0 0.0
    %2445 = vmatpush1.xpose.msra.mxu0 0.0
    %2446 = vmatprep.subr.mxu0 0.0
    %2447 = vmatpush1.xpose.msra.mxu0 0.0
    %2448 = vmatprep.subr.mxu0 0.0
    %2449 = vmatpush1.xpose.msra.mxu0 0.0
    %2450 = vmatprep.subr.mxu0 0.0
    %2451 = vmatpush1.xpose.msra.mxu0 0.0
    %2452 = vmatprep.subr.mxu0 0.0
    %2453 = vmatpush1.xpose.msra.mxu0 0.0
    %2454 = vmatprep.subr.mxu0 0.0
    %2455 = vmatpush1.xpose.msra.mxu0 0.0
    %2456 = vmatprep.subr.mxu0 0.0
    %2457 = vmatpush1.xpose.msra.mxu0 0.0
    %2458 = vmatprep.subr.mxu0 0.0
    %2459 = vmatpush1.xpose.msra.mxu0 0.0
    %2460 = vmatprep.subr.mxu0 0.0
    %2461 = vmatpush1.xpose.msra.mxu0 0.0
    %2462 = vmatprep.subr.mxu0 0.0
    %2463 = vmatpush1.xpose.msra.mxu0 0.0
    %2464 = vmatprep.subr.mxu0 0.0
    %2465 = vmatpush1.xpose.msra.mxu0 0.0
    %2466 = vmatprep.subr.mxu0 0.0
    %2467 = vmatpush1.xpose.msra.mxu0 0.0
    %2468 = vmatprep.subr.mxu0 0.0
    %2469 = vmatpush1.xpose.msra.mxu0 0.0
    %2470 = vmatprep.subr.mxu0 0.0
    %2471 = vmatpush1.xpose.msra.mxu0 0.0
    %2472 = vmatprep.subr.mxu0 0.0
    %2473 = vmatpush1.xpose.msra.mxu0 0.0
    %2474 = vmatprep.subr.mxu0 0.0
    %2475 = vmatpush1.xpose.msra.mxu0 0.0
    %2476 = vmatprep.subr.mxu0 0.0
    %2477 = vmatpush1.xpose.msra.mxu0 0.0
    %2478 = vmatprep.subr.mxu0 0.0
    %2479 = vmatpush1.xpose.msra.mxu0 0.0
    %2480 = vmatprep.subr.mxu0 0.0
    %2481 = vmatpush1.xpose.msra.mxu0 0.0
    %2482 = vmatprep.subr.mxu0 0.0
    %2483 = vmatpush1.xpose.msra.mxu0 0.0
    %2484 = vmatprep.subr.mxu0 0.0
    %2485 = vmatpush1.xpose.msra.mxu0 0.0
    %2486 = vmatprep.subr.mxu0 0.0
    %2487 = vmatpush1.xpose.msra.mxu0 0.0
    %2488 = vmatprep.subr.mxu0 0.0
    %2489 = vmatpush1.xpose.msra.mxu0 0.0
    %2490 = vmatprep.subr.mxu0 0.0
    %2491 = vmatpush1.xpose.msra.mxu0 0.0
    %2492 = vmatprep.subr.mxu0 0.0
    %2493 = vmatpush1.xpose.msra.mxu0 0.0
    %2494 = vmatprep.subr.mxu0 0.0
    %2495 = vmatpush1.xpose.msra.mxu0 0.0
    %2496 = vmatprep.subr.mxu0 0.0
    %2497 = vmatpush1.xpose.msra.mxu0 0.0
    %2498 = vmatprep.subr.mxu0 0.0
    %2499 = vmatpush1.xpose.msra.mxu0 0.0
    %2500 = vmatprep.subr.mxu0 0.0
    %2501 = vmatpush1.xpose.msra.mxu0 0.0
    %2502 = vmatprep.mubr.f32.mxu0 0.0
    %2503 = vmatmul.mubr.f32.gmra.mrb[0].mxu0 %v2434
    %v2504 = vpop.f32.mrb[0].mxu0
    %v2505 = vadd.f32 0.0, %v2504
    %v2506 = vpop.f32.mrb[0].mxu0
    %2507 = vdwg.mxu0
    %2508 = vrot.lane.b32.xlu0 %v275, 124
    %v2509 = vpop.permute.xlu0 %2508
    %v2510 = vsel %vm105, %v472, 0
    %v2512 = vsel %vm105, %v2509, 0
    %2514 = vmatprep.subr.mxu0 0.0
    %2515 = vmatpush1.xpose.msra.mxu0 %v2512
    %2516 = vmatprep.subr.mxu0 0.0
    %2517 = vmatpush1.xpose.msra.mxu0 0.0
    %2518 = vmatprep.subr.mxu0 0.0
    %2519 = vmatpush1.xpose.msra.mxu0 0.0
    %2520 = vmatprep.subr.mxu0 0.0
    %2521 = vmatpush1.xpose.msra.mxu0 0.0
    %2522 = vmatprep.subr.mxu0 0.0
    %2523 = vmatpush1.xpose.msra.mxu0 0.0
    %2524 = vmatprep.subr.mxu0 0.0
    %2525 = vmatpush1.xpose.msra.mxu0 0.0
    %2526 = vmatprep.subr.mxu0 0.0
    %2527 = vmatpush1.xpose.msra.mxu0 0.0
    %2528 = vmatprep.subr.mxu0 0.0
    %2529 = vmatpush1.xpose.msra.mxu0 0.0
    %2530 = vmatprep.subr.mxu0 0.0
    %2531 = vmatpush1.xpose.msra.mxu0 0.0
    %2532 = vmatprep.subr.mxu0 0.0
    %2533 = vmatpush1.xpose.msra.mxu0 0.0
    %2534 = vmatprep.subr.mxu0 0.0
    %2535 = vmatpush1.xpose.msra.mxu0 0.0
    %2536 = vmatprep.subr.mxu0 0.0
    %2537 = vmatpush1.xpose.msra.mxu0 0.0
    %2538 = vmatprep.subr.mxu0 0.0
    %2539 = vmatpush1.xpose.msra.mxu0 0.0
    %2540 = vmatprep.subr.mxu0 0.0
    %2541 = vmatpush1.xpose.msra.mxu0 0.0
    %2542 = vmatprep.subr.mxu0 0.0
    %2543 = vmatpush1.xpose.msra.mxu0 0.0
    %2544 = vmatprep.subr.mxu0 0.0
    %2545 = vmatpush1.xpose.msra.mxu0 0.0
    %2546 = vmatprep.subr.mxu0 0.0
    %2547 = vmatpush1.xpose.msra.mxu0 0.0
    %2548 = vmatprep.subr.mxu0 0.0
    %2549 = vmatpush1.xpose.msra.mxu0 0.0
    %2550 = vmatprep.subr.mxu0 0.0
    %2551 = vmatpush1.xpose.msra.mxu0 0.0
    %2552 = vmatprep.subr.mxu0 0.0
    %2553 = vmatpush1.xpose.msra.mxu0 0.0
    %2554 = vmatprep.subr.mxu0 0.0
    %2555 = vmatpush1.xpose.msra.mxu0 0.0
    %2556 = vmatprep.subr.mxu0 0.0
    %2557 = vmatpush1.xpose.msra.mxu0 0.0
    %2558 = vmatprep.subr.mxu0 0.0
    %2559 = vmatpush1.xpose.msra.mxu0 0.0
    %2560 = vmatprep.subr.mxu0 0.0
    %2561 = vmatpush1.xpose.msra.mxu0 0.0
    %2562 = vmatprep.subr.mxu0 0.0
    %2563 = vmatpush1.xpose.msra.mxu0 0.0
    %2564 = vmatprep.subr.mxu0 0.0
    %2565 = vmatpush1.xpose.msra.mxu0 0.0
    %2566 = vmatprep.subr.mxu0 0.0
    %2567 = vmatpush1.xpose.msra.mxu0 0.0
    %2568 = vmatprep.subr.mxu0 0.0
    %2569 = vmatpush1.xpose.msra.mxu0 0.0
    %2570 = vmatprep.subr.mxu0 0.0
    %2571 = vmatpush1.xpose.msra.mxu0 0.0
    %2572 = vmatprep.subr.mxu0 0.0
    %2573 = vmatpush1.xpose.msra.mxu0 0.0
    %2574 = vmatprep.subr.mxu0 0.0
    %2575 = vmatpush1.xpose.msra.mxu0 0.0
    %2576 = vmatprep.subr.mxu0 0.0
    %2577 = vmatpush1.xpose.msra.mxu0 0.0
    %2578 = vmatprep.mubr.f32.mxu0 0.0
    %2579 = vmatmul.mubr.f32.gmra.mrb[0].mxu0 %v2510
    %v2580 = vpop.f32.mrb[0].mxu0
    %v2581 = vadd.f32 0.0, %v2580
    %v2582 = vpop.f32.mrb[0].mxu0
    %2583 = vdwg.mxu0
    %2584 = vrot.lane.b32.xlu0 %v280, 124
    %v2585 = vpop.permute.xlu0 %2584
    %v2586 = vsel %vm105, %v477, 0
    %v2588 = vsel %vm105, %v2585, 0
    %2590 = vmatprep.subr.mxu0 0.0
    %2591 = vmatpush1.xpose.msra.mxu0 %v2588
    %2592 = vmatprep.subr.mxu0 0.0
    %2593 = vmatpush1.xpose.msra.mxu0 0.0
    %2594 = vmatprep.subr.mxu0 0.0
    %2595 = vmatpush1.xpose.msra.mxu0 0.0
    %2596 = vmatprep.subr.mxu0 0.0
    %2597 = vmatpush1.xpose.msra.mxu0 0.0
    %2598 = vmatprep.subr.mxu0 0.0
    %2599 = vmatpush1.xpose.msra.mxu0 0.0
    %2600 = vmatprep.subr.mxu0 0.0
    %2601 = vmatpush1.xpose.msra.mxu0 0.0
    %2602 = vmatprep.subr.mxu0 0.0
    %2603 = vmatpush1.xpose.msra.mxu0 0.0
    %2604 = vmatprep.subr.mxu0 0.0
    %2605 = vmatpush1.xpose.msra.mxu0 0.0
    %2606 = vmatprep.subr.mxu0 0.0
    %2607 = vmatpush1.xpose.msra.mxu0 0.0
    %2608 = vmatprep.subr.mxu0 0.0
    %2609 = vmatpush1.xpose.msra.mxu0 0.0
    %2610 = vmatprep.subr.mxu0 0.0
    %2611 = vmatpush1.xpose.msra.mxu0 0.0
    %2612 = vmatprep.subr.mxu0 0.0
    %2613 = vmatpush1.xpose.msra.mxu0 0.0
    %2614 = vmatprep.subr.mxu0 0.0
    %2615 = vmatpush1.xpose.msra.mxu0 0.0
    %2616 = vmatprep.subr.mxu0 0.0
    %2617 = vmatpush1.xpose.msra.mxu0 0.0
    %2618 = vmatprep.subr.mxu0 0.0
    %2619 = vmatpush1.xpose.msra.mxu0 0.0
    %2620 = vmatprep.subr.mxu0 0.0
    %2621 = vmatpush1.xpose.msra.mxu0 0.0
    %2622 = vmatprep.subr.mxu0 0.0
    %2623 = vmatpush1.xpose.msra.mxu0 0.0
    %2624 = vmatprep.subr.mxu0 0.0
    %2625 = vmatpush1.xpose.msra.mxu0 0.0
    %2626 = vmatprep.subr.mxu0 0.0
    %2627 = vmatpush1.xpose.msra.mxu0 0.0
    %2628 = vmatprep.subr.mxu0 0.0
    %2629 = vmatpush1.xpose.msra.mxu0 0.0
    %2630 = vmatprep.subr.mxu0 0.0
    %2631 = vmatpush1.xpose.msra.mxu0 0.0
    %2632 = vmatprep.subr.mxu0 0.0
    %2633 = vmatpush1.xpose.msra.mxu0 0.0
    %2634 = vmatprep.subr.mxu0 0.0
    %2635 = vmatpush1.xpose.msra.mxu0 0.0
    %2636 = vmatprep.subr.mxu0 0.0
    %2637 = vmatpush1.xpose.msra.mxu0 0.0
    %2638 = vmatprep.subr.mxu0 0.0
    %2639 = vmatpush1.xpose.msra.mxu0 0.0
    %2640 = vmatprep.subr.mxu0 0.0
    %2641 = vmatpush1.xpose.msra.mxu0 0.0
    %2642 = vmatprep.subr.mxu0 0.0
    %2643 = vmatpush1.xpose.msra.mxu0 0.0
    %2644 = vmatprep.subr.mxu0 0.0
    %2645 = vmatpush1.xpose.msra.mxu0 0.0
    %2646 = vmatprep.subr.mxu0 0.0
    %2647 = vmatpush1.xpose.msra.mxu0 0.0
    %2648 = vmatprep.subr.mxu0 0.0
    %2649 = vmatpush1.xpose.msra.mxu0 0.0
    %2650 = vmatprep.subr.mxu0 0.0
    %2651 = vmatpush1.xpose.msra.mxu0 0.0
    %2652 = vmatprep.subr.mxu0 0.0
    %2653 = vmatpush1.xpose.msra.mxu0 0.0
    %2654 = vmatprep.mubr.f32.mxu0 0.0
    %2655 = vmatmul.mubr.f32.gmra.mrb[0].mxu0 %v2586
    %v2656 = vpop.f32.mrb[0].mxu0
    %v2657 = vadd.f32 0.0, %v2656
    %v2658 = vpop.f32.mrb[0].mxu0
    %2659 = vdwg.mxu0
    %2660 = vrot.lane.b32.xlu0 %v285, 124
    %v2661 = vpop.permute.xlu0 %2660
    %v2662 = vsel %vm105, %v482, 0
    %v2664 = vsel %vm105, %v2661, 0
    %2666 = vmatprep.subr.mxu0 0.0
    %2667 = vmatpush1.xpose.msra.mxu0 %v2664
    %2668 = vmatprep.subr.mxu0 0.0
    %2669 = vmatpush1.xpose.msra.mxu0 0.0
    %2670 = vmatprep.subr.mxu0 0.0
    %2671 = vmatpush1.xpose.msra.mxu0 0.0
    %2672 = vmatprep.subr.mxu0 0.0
    %2673 = vmatpush1.xpose.msra.mxu0 0.0
    %2674 = vmatprep.subr.mxu0 0.0
    %2675 = vmatpush1.xpose.msra.mxu0 0.0
    %2676 = vmatprep.subr.mxu0 0.0
    %2677 = vmatpush1.xpose.msra.mxu0 0.0
    %2678 = vmatprep.subr.mxu0 0.0
    %2679 = vmatpush1.xpose.msra.mxu0 0.0
    %2680 = vmatprep.subr.mxu0 0.0
    %2681 = vmatpush1.xpose.msra.mxu0 0.0
    %2682 = vmatprep.subr.mxu0 0.0
    %2683 = vmatpush1.xpose.msra.mxu0 0.0
    %2684 = vmatprep.subr.mxu0 0.0
    %2685 = vmatpush1.xpose.msra.mxu0 0.0
    %2686 = vmatprep.subr.mxu0 0.0
    %2687 = vmatpush1.xpose.msra.mxu0 0.0
    %2688 = vmatprep.subr.mxu0 0.0
    %2689 = vmatpush1.xpose.msra.mxu0 0.0
    %2690 = vmatprep.subr.mxu0 0.0
    %2691 = vmatpush1.xpose.msra.mxu0 0.0
    %2692 = vmatprep.subr.mxu0 0.0
    %2693 = vmatpush1.xpose.msra.mxu0 0.0
    %2694 = vmatprep.subr.mxu0 0.0
    %2695 = vmatpush1.xpose.msra.mxu0 0.0
    %2696 = vmatprep.subr.mxu0 0.0
    %2697 = vmatpush1.xpose.msra.mxu0 0.0
    %2698 = vmatprep.subr.mxu0 0.0
    %2699 = vmatpush1.xpose.msra.mxu0 0.0
    %2700 = vmatprep.subr.mxu0 0.0
    %2701 = vmatpush1.xpose.msra.mxu0 0.0
    %2702 = vmatprep.subr.mxu0 0.0
    %2703 = vmatpush1.xpose.msra.mxu0 0.0
    %2704 = vmatprep.subr.mxu0 0.0
    %2705 = vmatpush1.xpose.msra.mxu0 0.0
    %2706 = vmatprep.subr.mxu0 0.0
    %2707 = vmatpush1.xpose.msra.mxu0 0.0
    %2708 = vmatprep.subr.mxu0 0.0
    %2709 = vmatpush1.xpose.msra.mxu0 0.0
    %2710 = vmatprep.subr.mxu0 0.0
    %2711 = vmatpush1.xpose.msra.mxu0 0.0
    %2712 = vmatprep.subr.mxu0 0.0
    %2713 = vmatpush1.xpose.msra.mxu0 0.0
    %2714 = vmatprep.subr.mxu0 0.0
    %2715 = vmatpush1.xpose.msra.mxu0 0.0
    %2716 = vmatprep.subr.mxu0 0.0
    %2717 = vmatpush1.xpose.msra.mxu0 0.0
    %2718 = vmatprep.subr.mxu0 0.0
    %2719 = vmatpush1.xpose.msra.mxu0 0.0
    %2720 = vmatprep.subr.mxu0 0.0
    %2721 = vmatpush1.xpose.msra.mxu0 0.0
    %2722 = vmatprep.subr.mxu0 0.0
    %2723 = vmatpush1.xpose.msra.mxu0 0.0
    %2724 = vmatprep.subr.mxu0 0.0
    %2725 = vmatpush1.xpose.msra.mxu0 0.0
    %2726 = vmatprep.subr.mxu0 0.0
    %2727 = vmatpush1.xpose.msra.mxu0 0.0
    %2728 = vmatprep.subr.mxu0 0.0
    %2729 = vmatpush1.xpose.msra.mxu0 0.0
    %2730 = vmatprep.mubr.f32.mxu0 0.0
    %2731 = vmatmul.mubr.f32.gmra.mrb[0].mxu0 %v2662
    %v2732 = vpop.f32.mrb[0].mxu0
    %v2733 = vadd.f32 0.0, %v2732
    %v2734 = vpop.f32.mrb[0].mxu0
    %2735 = vdwg.mxu0
    %2736 = vrot.lane.b32.xlu0 %v290, 124
    %v2737 = vpop.permute.xlu0 %2736
    %v2738 = vsel %vm105, %v487, 0
    %v2740 = vsel %vm105, %v2737, 0
    %2742 = vmatprep.subr.mxu0 0.0
    %2743 = vmatpush1.xpose.msra.mxu0 %v2740
    %2744 = vmatprep.subr.mxu0 0.0
    %2745 = vmatpush1.xpose.msra.mxu0 0.0
    %2746 = vmatprep.subr.mxu0 0.0
    %2747 = vmatpush1.xpose.msra.mxu0 0.0
    %2748 = vmatprep.subr.mxu0 0.0
    %2749 = vmatpush1.xpose.msra.mxu0 0.0
    %2750 = vmatprep.subr.mxu0 0.0
    %2751 = vmatpush1.xpose.msra.mxu0 0.0
    %2752 = vmatprep.subr.mxu0 0.0
    %2753 = vmatpush1.xpose.msra.mxu0 0.0
    %2754 = vmatprep.subr.mxu0 0.0
    %2755 = vmatpush1.xpose.msra.mxu0 0.0
    %2756 = vmatprep.subr.mxu0 0.0
    %2757 = vmatpush1.xpose.msra.mxu0 0.0
    %2758 = vmatprep.subr.mxu0 0.0
    %2759 = vmatpush1.xpose.msra.mxu0 0.0
    %2760 = vmatprep.subr.mxu0 0.0
    %2761 = vmatpush1.xpose.msra.mxu0 0.0
    %2762 = vmatprep.subr.mxu0 0.0
    %2763 = vmatpush1.xpose.msra.mxu0 0.0
    %2764 = vmatprep.subr.mxu0 0.0
    %2765 = vmatpush1.xpose.msra.mxu0 0.0
    %2766 = vmatprep.subr.mxu0 0.0
    %2767 = vmatpush1.xpose.msra.mxu0 0.0
    %2768 = vmatprep.subr.mxu0 0.0
    %2769 = vmatpush1.xpose.msra.mxu0 0.0
    %2770 = vmatprep.subr.mxu0 0.0
    %2771 = vmatpush1.xpose.msra.mxu0 0.0
    %2772 = vmatprep.subr.mxu0 0.0
    %2773 = vmatpush1.xpose.msra.mxu0 0.0
    %2774 = vmatprep.subr.mxu0 0.0
    %2775 = vmatpush1.xpose.msra.mxu0 0.0
    %2776 = vmatprep.subr.mxu0 0.0
    %2777 = vmatpush1.xpose.msra.mxu0 0.0
    %2778 = vmatprep.subr.mxu0 0.0
    %2779 = vmatpush1.xpose.msra.mxu0 0.0
    %2780 = vmatprep.subr.mxu0 0.0
    %2781 = vmatpush1.xpose.msra.mxu0 0.0
    %2782 = vmatprep.subr.mxu0 0.0
    %2783 = vmatpush1.xpose.msra.mxu0 0.0
    %2784 = vmatprep.subr.mxu0 0.0
    %2785 = vmatpush1.xpose.msra.mxu0 0.0
    %2786 = vmatprep.subr.mxu0 0.0
    %2787 = vmatpush1.xpose.msra.mxu0 0.0
    %2788 = vmatprep.subr.mxu0 0.0
    %2789 = vmatpush1.xpose.msra.mxu0 0.0
    %2790 = vmatprep.subr.mxu0 0.0
    %2791 = vmatpush1.xpose.msra.mxu0 0.0
    %2792 = vmatprep.subr.mxu0 0.0
    %2793 = vmatpush1.xpose.msra.mxu0 0.0
    %2794 = vmatprep.subr.mxu0 0.0
    %2795 = vmatpush1.xpose.msra.mxu0 0.0
    %2796 = vmatprep.subr.mxu0 0.0
    %2797 = vmatpush1.xpose.msra.mxu0 0.0
    %2798 = vmatprep.subr.mxu0 0.0
    %2799 = vmatpush1.xpose.msra.mxu0 0.0
    %2800 = vmatprep.subr.mxu0 0.0
    %2801 = vmatpush1.xpose.msra.mxu0 0.0
    %2802 = vmatprep.subr.mxu0 0.0
    %2803 = vmatpush1.xpose.msra.mxu0 0.0
    %2804 = vmatprep.subr.mxu0 0.0
    %2805 = vmatpush1.xpose.msra.mxu0 0.0
    %2806 = vmatprep.mubr.f32.mxu0 0.0
    %2807 = vmatmul.mubr.f32.gmra.mrb[0].mxu0 %v2738
    %v2808 = vpop.f32.mrb[0].mxu0
    %v2809 = vadd.f32 0.0, %v2808
    %v2810 = vpop.f32.mrb[0].mxu0
    %2811 = vdwg.mxu0
    %2812 = vrot.lane.b32.xlu0 %v295, 124
    %v2813 = vpop.permute.xlu0 %2812
    %v2814 = vsel %vm105, %v492, 0
    %v2816 = vsel %vm105, %v2813, 0
    %2818 = vmatprep.subr.mxu0 0.0
    %2819 = vmatpush1.xpose.msra.mxu0 %v2816
    %2820 = vmatprep.subr.mxu0 0.0
    %2821 = vmatpush1.xpose.msra.mxu0 0.0
    %2822 = vmatprep.subr.mxu0 0.0
    %2823 = vmatpush1.xpose.msra.mxu0 0.0
    %2824 = vmatprep.subr.mxu0 0.0
    %2825 = vmatpush1.xpose.msra.mxu0 0.0
    %2826 = vmatprep.subr.mxu0 0.0
    %2827 = vmatpush1.xpose.msra.mxu0 0.0
    %2828 = vmatprep.subr.mxu0 0.0
    %2829 = vmatpush1.xpose.msra.mxu0 0.0
    %2830 = vmatprep.subr.mxu0 0.0
    %2831 = vmatpush1.xpose.msra.mxu0 0.0
    %2832 = vmatprep.subr.mxu0 0.0
    %2833 = vmatpush1.xpose.msra.mxu0 0.0
    %2834 = vmatprep.subr.mxu0 0.0
    %2835 = vmatpush1.xpose.msra.mxu0 0.0
    %2836 = vmatprep.subr.mxu0 0.0
    %2837 = vmatpush1.xpose.msra.mxu0 0.0
    %2838 = vmatprep.subr.mxu0 0.0
    %2839 = vmatpush1.xpose.msra.mxu0 0.0
    %2840 = vmatprep.subr.mxu0 0.0
    %2841 = vmatpush1.xpose.msra.mxu0 0.0
    %2842 = vmatprep.subr.mxu0 0.0
    %2843 = vmatpush1.xpose.msra.mxu0 0.0
    %2844 = vmatprep.subr.mxu0 0.0
    %2845 = vmatpush1.xpose.msra.mxu0 0.0
    %2846 = vmatprep.subr.mxu0 0.0
    %2847 = vmatpush1.xpose.msra.mxu0 0.0
    %2848 = vmatprep.subr.mxu0 0.0
    %2849 = vmatpush1.xpose.msra.mxu0 0.0
    %2850 = vmatprep.subr.mxu0 0.0
    %2851 = vmatpush1.xpose.msra.mxu0 0.0
    %2852 = vmatprep.subr.mxu0 0.0
    %2853 = vmatpush1.xpose.msra.mxu0 0.0
    %2854 = vmatprep.subr.mxu0 0.0
    %2855 = vmatpush1.xpose.msra.mxu0 0.0
    %2856 = vmatprep.subr.mxu0 0.0
    %2857 = vmatpush1.xpose.msra.mxu0 0.0
    %2858 = vmatprep.subr.mxu0 0.0
    %2859 = vmatpush1.xpose.msra.mxu0 0.0
    %2860 = vmatprep.subr.mxu0 0.0
    %2861 = vmatpush1.xpose.msra.mxu0 0.0
    %2862 = vmatprep.subr.mxu0 0.0
    %2863 = vmatpush1.xpose.msra.mxu0 0.0
    %2864 = vmatprep.subr.mxu0 0.0
    %2865 = vmatpush1.xpose.msra.mxu0 0.0
    %2866 = vmatprep.subr.mxu0 0.0
    %2867 = vmatpush1.xpose.msra.mxu0 0.0
    %2868 = vmatprep.subr.mxu0 0.0
    %2869 = vmatpush1.xpose.msra.mxu0 0.0
    %2870 = vmatprep.subr.mxu0 0.0
    %2871 = vmatpush1.xpose.msra.mxu0 0.0
    %2872 = vmatprep.subr.mxu0 0.0
    %2873 = vmatpush1.xpose.msra.mxu0 0.0
    %2874 = vmatprep.subr.mxu0 0.0
    %2875 = vmatpush1.xpose.msra.mxu0 0.0
    %2876 = vmatprep.subr.mxu0 0.0
    %2877 = vmatpush1.xpose.msra.mxu0 0.0
    %2878 = vmatprep.subr.mxu0 0.0
    %2879 = vmatpush1.xpose.msra.mxu0 0.0
    %2880 = vmatprep.subr.mxu0 0.0
    %2881 = vmatpush1.xpose.msra.mxu0 0.0
    %2882 = vmatprep.mubr.f32.mxu0 0.0
    %2883 = vmatmul.mubr.f32.gmra.mrb[0].mxu0 %v2814
    %v2884 = vpop.f32.mrb[0].mxu0
    %v2885 = vadd.f32 0.0, %v2884
    %v2886 = vpop.f32.mrb[0].mxu0
    %2887 = vdwg.mxu0
    %2888 = vrot.lane.b32.xlu0 %v300, 124
    %v2889 = vpop.permute.xlu0 %2888
    %v2890 = vsel %vm105, %v497, 0
    %v2892 = vsel %vm105, %v2889, 0
    %2894 = vmatprep.subr.mxu0 0.0
    %2895 = vmatpush1.xpose.msra.mxu0 %v2892
    %2896 = vmatprep.subr.mxu0 0.0
    %2897 = vmatpush1.xpose.msra.mxu0 0.0
    %2898 = vmatprep.subr.mxu0 0.0
    %2899 = vmatpush1.xpose.msra.mxu0 0.0
    %2900 = vmatprep.subr.mxu0 0.0
    %2901 = vmatpush1.xpose.msra.mxu0 0.0
    %2902 = vmatprep.subr.mxu0 0.0
    %2903 = vmatpush1.xpose.msra.mxu0 0.0
    %2904 = vmatprep.subr.mxu0 0.0
    %2905 = vmatpush1.xpose.msra.mxu0 0.0
    %2906 = vmatprep.subr.mxu0 0.0
    %2907 = vmatpush1.xpose.msra.mxu0 0.0
    %2908 = vmatprep.subr.mxu0 0.0
    %2909 = vmatpush1.xpose.msra.mxu0 0.0
    %2910 = vmatprep.subr.mxu0 0.0
    %2911 = vmatpush1.xpose.msra.mxu0 0.0
    %2912 = vmatprep.subr.mxu0 0.0
    %2913 = vmatpush1.xpose.msra.mxu0 0.0
    %2914 = vmatprep.subr.mxu0 0.0
    %2915 = vmatpush1.xpose.msra.mxu0 0.0
    %2916 = vmatprep.subr.mxu0 0.0
    %2917 = vmatpush1.xpose.msra.mxu0 0.0
    %2918 = vmatprep.subr.mxu0 0.0
    %2919 = vmatpush1.xpose.msra.mxu0 0.0
    %2920 = vmatprep.subr.mxu0 0.0
    %2921 = vmatpush1.xpose.msra.mxu0 0.0
    %2922 = vmatprep.subr.mxu0 0.0
    %2923 = vmatpush1.xpose.msra.mxu0 0.0
    %2924 = vmatprep.subr.mxu0 0.0
    %2925 = vmatpush1.xpose.msra.mxu0 0.0
    %2926 = vmatprep.subr.mxu0 0.0
    %2927 = vmatpush1.xpose.msra.mxu0 0.0
    %2928 = vmatprep.subr.mxu0 0.0
    %2929 = vmatpush1.xpose.msra.mxu0 0.0
    %2930 = vmatprep.subr.mxu0 0.0
    %2931 = vmatpush1.xpose.msra.mxu0 0.0
    %2932 = vmatprep.subr.mxu0 0.0
    %2933 = vmatpush1.xpose.msra.mxu0 0.0
    %2934 = vmatprep.subr.mxu0 0.0
    %2935 = vmatpush1.xpose.msra.mxu0 0.0
    %2936 = vmatprep.subr.mxu0 0.0
    %2937 = vmatpush1.xpose.msra.mxu0 0.0
    %2938 = vmatprep.subr.mxu0 0.0
    %2939 = vmatpush1.xpose.msra.mxu0 0.0
    %2940 = vmatprep.subr.mxu0 0.0
    %2941 = vmatpush1.xpose.msra.mxu0 0.0
    %2942 = vmatprep.subr.mxu0 0.0
    %2943 = vmatpush1.xpose.msra.mxu0 0.0
    %2944 = vmatprep.subr.mxu0 0.0
    %2945 = vmatpush1.xpose.msra.mxu0 0.0
    %2946 = vmatprep.subr.mxu0 0.0
    %2947 = vmatpush1.xpose.msra.mxu0 0.0
    %2948 = vmatprep.subr.mxu0 0.0
    %2949 = vmatpush1.xpose.msra.mxu0 0.0
    %2950 = vmatprep.subr.mxu0 0.0
    %2951 = vmatpush1.xpose.msra.mxu0 0.0
    %2952 = vmatprep.subr.mxu0 0.0
    %2953 = vmatpush1.xpose.msra.mxu0 0.0
    %2954 = vmatprep.subr.mxu0 0.0
    %2955 = vmatpush1.xpose.msra.mxu0 0.0
    %2956 = vmatprep.subr.mxu0 0.0
    %2957 = vmatpush1.xpose.msra.mxu0 0.0
    %2958 = vmatprep.mubr.f32.mxu0 0.0
    %2959 = vmatmul.mubr.f32.gmra.mrb[0].mxu0 %v2890
    %v2960 = vpop.f32.mrb[0].mxu0
    %v2961 = vadd.f32 0.0, %v2960
    %v2962 = vpop.f32.mrb[0].mxu0
    %2963 = vdwg.mxu0
    %vm2964 = vcmask 64512
    %v2965 = vsel %vm2964, %v575, -inf
    %2966 = vmax.xlane.f32.xlu0 %v2965
    %v2967 = vpop.xlane.xlu0 %2966
    %v2968 = vsel %vm2964, %v653, -inf
    %2969 = vmax.xlane.f32.xlu0 %v2968
    %v2970 = vpop.xlane.xlu0 %2969
    %v2971 = vsel %vm2964, %v731, -inf
    %2972 = vmax.xlane.f32.xlu0 %v2971
    %v2973 = vpop.xlane.xlu0 %2972
    %v2974 = vsel %vm2964, %v809, -inf
    %2975 = vmax.xlane.f32.xlu0 %v2974
    %v2976 = vpop.xlane.xlu0 %2975
    %v2977 = vsel %vm2964, %v887, -inf
    %2978 = vmax.xlane.f32.xlu0 %v2977
    %v2979 = vpop.xlane.xlu0 %2978
    %v2980 = vsel %vm2964, %v965, -inf
    %2981 = vmax.xlane.f32.xlu0 %v2980
    %v2982 = vpop.xlane.xlu0 %2981
    %v2983 = vsel %vm2964, %v1043, -inf
    %2984 = vmax.xlane.f32.xlu0 %v2983
    %v2985 = vpop.xlane.xlu0 %2984
    %v2986 = vsel %vm2964, %v1121, -inf
    %2987 = vmax.xlane.f32.xlu0 %v2986
    %v2988 = vpop.xlane.xlu0 %2987
    %v2989 = vsel %vm2964, %v1199, -inf
    %2990 = vmax.xlane.f32.xlu0 %v2989
    %v2991 = vpop.xlane.xlu0 %2990
    %v2992 = vsel %vm2964, %v1277, -inf
    %2993 = vmax.xlane.f32.xlu0 %v2992
    %v2994 = vpop.xlane.xlu0 %2993
    %v2995 = vsel %vm2964, %v1355, -inf
    %2996 = vmax.xlane.f32.xlu0 %v2995
    %v2997 = vpop.xlane.xlu0 %2996
    %v2998 = vsel %vm2964, %v1433, -inf
    %2999 = vmax.xlane.f32.xlu0 %v2998
    %v3000 = vpop.xlane.xlu0 %2999
    %v3001 = vsel %vm2964, %v1511, -inf
    %3002 = vmax.xlane.f32.xlu0 %v3001
    %v3003 = vpop.xlane.xlu0 %3002
    %v3004 = vsel %vm2964, %v1589, -inf
    %3005 = vmax.xlane.f32.xlu0 %v3004
    %v3006 = vpop.xlane.xlu0 %3005
    %v3007 = vsel %vm2964, %v1667, -inf
    %3008 = vmax.xlane.f32.xlu0 %v3007
    %v3009 = vpop.xlane.xlu0 %3008
    %v3010 = vsel %vm2964, %v1745, -inf
    %3011 = vmax.xlane.f32.xlu0 %v3010
    %v3012 = vpop.xlane.xlu0 %3011
    %v3013 = vsub.f32 %v575, %v2967
    %v3014 = vsub.f32 %v653, %v2970
    %v3015 = vsub.f32 %v731, %v2973
    %v3016 = vsub.f32 %v809, %v2976
    %v3017 = vsub.f32 %v887, %v2979
    %v3018 = vsub.f32 %v965, %v2982
    %v3019 = vsub.f32 %v1043, %v2985
    %v3020 = vsub.f32 %v1121, %v2988
    %v3021 = vsub.f32 %v1199, %v2991
    %v3022 = vsub.f32 %v1277, %v2994
    %v3023 = vsub.f32 %v1355, %v2997
    %v3024 = vsub.f32 %v1433, %v3000
    %v3025 = vsub.f32 %v1511, %v3003
    %v3026 = vsub.f32 %v1589, %v3006
    %v3027 = vsub.f32 %v1667, %v3009
    %v3028 = vsub.f32 %v1745, %v3012
    %v3029 = vmul.f32 %v3013, 1.442695
    %v3030 = vpow.pop %v3029
    %v3031 = vmul.f32 %v3014, 1.442695
    %v3032 = vpow.pop %v3031
    %v3033 = vmul.f32 %v3015, 1.442695
    %v3034 = vpow.pop %v3033
    %v3035 = vmul.f32 %v3016, 1.442695
    %v3036 = vpow.pop %v3035
    %v3037 = vmul.f32 %v3017, 1.442695
    %v3038 = vpow.pop %v3037
    %v3039 = vmul.f32 %v3018, 1.442695
    %v3040 = vpow.pop %v3039
    %v3041 = vmul.f32 %v3019, 1.442695
    %v3042 = vpow.pop %v3041
    %v3043 = vmul.f32 %v3020, 1.442695
    %v3044 = vpow.pop %v3043
    %v3045 = vmul.f32 %v3021, 1.442695
    %v3046 = vpow.pop %v3045
    %v3047 = vmul.f32 %v3022, 1.442695
    %v3048 = vpow.pop %v3047
    %v3049 = vmul.f32 %v3023, 1.442695
    %v3050 = vpow.pop %v3049
    %v3051 = vmul.f32 %v3024, 1.442695
    %v3052 = vpow.pop %v3051
    %v3053 = vmul.f32 %v3025, 1.442695
    %v3054 = vpow.pop %v3053
    %v3055 = vmul.f32 %v3026, 1.442695
    %v3056 = vpow.pop %v3055
    %v3057 = vmul.f32 %v3027, 1.442695
    %v3058 = vpow.pop %v3057
    %v3059 = vmul.f32 %v3028, 1.442695
    %v3060 = vpow.pop %v3059
    %v3061 = vsel %vm2964, %v3030, 0.0
    %3062 = vadd.xlane.f32.xlu0 %v3061
    %v3063 = vpop.xlane.xlu0 %3062
    %v3064 = vsel %vm2964, %v3032, 0.0
    %3065 = vadd.xlane.f32.xlu0 %v3064
    %v3066 = vpop.xlane.xlu0 %3065
    %v3067 = vsel %vm2964, %v3034, 0.0
    %3068 = vadd.xlane.f32.xlu0 %v3067
    %v3069 = vpop.xlane.xlu0 %3068
    %v3070 = vsel %vm2964, %v3036, 0.0
    %3071 = vadd.xlane.f32.xlu0 %v3070
    %v3072 = vpop.xlane.xlu0 %3071
    %v3073 = vsel %vm2964, %v3038, 0.0
    %3074 = vadd.xlane.f32.xlu0 %v3073
    %v3075 = vpop.xlane.xlu0 %3074
    %v3076 = vsel %vm2964, %v3040, 0.0
    %3077 = vadd.xlane.f32.xlu0 %v3076
    %v3078 = vpop.xlane.xlu0 %3077
    %v3079 = vsel %vm2964, %v3042, 0.0
    %3080 = vadd.xlane.f32.xlu0 %v3079
    %v3081 = vpop.xlane.xlu0 %3080
    %v3082 = vsel %vm2964, %v3044, 0.0
    %3083 = vadd.xlane.f32.xlu0 %v3082
    %v3084 = vpop.xlane.xlu0 %3083
    %v3085 = vsel %vm2964, %v3046, 0.0
    %3086 = vadd.xlane.f32.xlu0 %v3085
    %v3087 = vpop.xlane.xlu0 %3086
    %v3088 = vsel %vm2964, %v3048, 0.0
    %3089 = vadd.xlane.f32.xlu0 %v3088
    %v3090 = vpop.xlane.xlu0 %3089
    %v3091 = vsel %vm2964, %v3050, 0.0
    %3092 = vadd.xlane.f32.xlu0 %v3091
    %v3093 = vpop.xlane.xlu0 %3092
    %v3094 = vsel %vm2964, %v3052, 0.0
    %3095 = vadd.xlane.f32.xlu0 %v3094
    %v3096 = vpop.xlane.xlu0 %3095
    %v3097 = vsel %vm2964, %v3054, 0.0
    %3098 = vadd.xlane.f32.xlu0 %v3097
    %v3099 = vpop.xlane.xlu0 %3098
    %v3100 = vsel %vm2964, %v3056, 0.0
    %3101 = vadd.xlane.f32.xlu0 %v3100
    %v3102 = vpop.xlane.xlu0 %3101
    %v3103 = vsel %vm2964, %v3058, 0.0
    %3104 = vadd.xlane.f32.xlu0 %v3103
    %v3105 = vpop.xlane.xlu0 %3104
    %v3106 = vsel %vm2964, %v3060, 0.0
    %3107 = vadd.xlane.f32.xlu0 %v3106
    %v3108 = vpop.xlane.xlu0 %3107
    %v3109 = vrcp.pop %v3063
    %v3110 = vrcp.pop %v3066
    %v3111 = vrcp.pop %v3069
    %v3112 = vrcp.pop %v3072
    %v3113 = vrcp.pop %v3075
    %v3114 = vrcp.pop %v3078
    %v3115 = vrcp.pop %v3081
    %v3116 = vrcp.pop %v3084
    %v3117 = vrcp.pop %v3087
    %v3118 = vrcp.pop %v3090
    %v3119 = vrcp.pop %v3093
    %v3120 = vrcp.pop %v3096
    %v3121 = vrcp.pop %v3099
    %v3122 = vrcp.pop %v3102
    %v3123 = vrcp.pop %v3105
    %v3124 = vrcp.pop %v3108
    %v3125 = vmul.f32 %v3030, %v3109
    %v3126 = vmul.f32 %v3032, %v3110
    %v3127 = vmul.f32 %v3034, %v3111
    %v3128 = vmul.f32 %v3036, %v3112
    %v3129 = vmul.f32 %v3038, %v3113
    %v3130 = vmul.f32 %v3040, %v3114
    %v3131 = vmul.f32 %v3042, %v3115
    %v3132 = vmul.f32 %v3044, %v3116
    %v3133 = vmul.f32 %v3046, %v3117
    %v3134 = vmul.f32 %v3048, %v3118
    %v3135 = vmul.f32 %v3050, %v3119
    %v3136 = vmul.f32 %v3052, %v3120
    %v3137 = vmul.f32 %v3054, %v3121
    %v3138 = vmul.f32 %v3056, %v3122
    %v3139 = vmul.f32 %v3058, %v3123
    %v3140 = vmul.f32 %v3060, %v3124
    %v3141 = vsel %vm2964, %v1821, -inf
    %3142 = vmax.xlane.f32.xlu0 %v3141
    %v3143 = vpop.xlane.xlu0 %3142
    %v3144 = vsel %vm2964, %v1897, -inf
    %3145 = vmax.xlane.f32.xlu0 %v3144
    %v3146 = vpop.xlane.xlu0 %3145
    %v3147 = vsel %vm2964, %v1973, -inf
    %3148 = vmax.xlane.f32.xlu0 %v3147
    %v3149 = vpop.xlane.xlu0 %3148
    %v3150 = vsel %vm2964, %v2049, -inf
    %3151 = vmax.xlane.f32.xlu0 %v3150
    %v3152 = vpop.xlane.xlu0 %3151
    %v3153 = vsel %vm2964, %v2125, -inf
    %3154 = vmax.xlane.f32.xlu0 %v3153
    %v3155 = vpop.xlane.xlu0 %3154
    %v3156 = vsel %vm2964, %v2201, -inf
    %3157 = vmax.xlane.f32.xlu0 %v3156
    %v3158 = vpop.xlane.xlu0 %3157
    %v3159 = vsel %vm2964, %v2277, -inf
    %3160 = vmax.xlane.f32.xlu0 %v3159
    %v3161 = vpop.xlane.xlu0 %3160
    %v3162 = vsel %vm2964, %v2353, -inf
    %3163 = vmax.xlane.f32.xlu0 %v3162
    %v3164 = vpop.xlane.xlu0 %3163
    %v3165 = vsel %vm2964, %v2429, -inf
    %3166 = vmax.xlane.f32.xlu0 %v3165
    %v3167 = vpop.xlane.xlu0 %3166
    %v3168 = vsel %vm2964, %v2505, -inf
    %3169 = vmax.xlane.f32.xlu0 %v3168
    %v3170 = vpop.xlane.xlu0 %3169
    %v3171 = vsel %vm2964, %v2581, -inf
    %3172 = vmax.xlane.f32.xlu0 %v3171
    %v3173 = vpop.xlane.xlu0 %3172
    %v3174 = vsel %vm2964, %v2657, -inf
    %3175 = vmax.xlane.f32.xlu0 %v3174
    %v3176 = vpop.xlane.xlu0 %3175
    %v3177 = vsel %vm2964, %v2733, -inf
    %3178 = vmax.xlane.f32.xlu0 %v3177
    %v3179 = vpop.xlane.xlu0 %3178
    %v3180 = vsel %vm2964, %v2809, -inf
    %3181 = vmax.xlane.f32.xlu0 %v3180
    %v3182 = vpop.xlane.xlu0 %3181
    %v3183 = vsel %vm2964, %v2885, -inf
    %3184 = vmax.xlane.f32.xlu0 %v3183
    %v3185 = vpop.xlane.xlu0 %3184
    %v3186 = vsel %vm2964, %v2961, -inf
    %3187 = vmax.xlane.f32.xlu0 %v3186
    %v3188 = vpop.xlane.xlu0 %3187
    %v3189 = vsub.f32 %v1821, %v3143
    %v3190 = vsub.f32 %v1897, %v3146
    %v3191 = vsub.f32 %v1973, %v3149
    %v3192 = vsub.f32 %v2049, %v3152
    %v3193 = vsub.f32 %v2125, %v3155
    %v3194 = vsub.f32 %v2201, %v3158
    %v3195 = vsub.f32 %v2277, %v3161
    %v3196 = vsub.f32 %v2353, %v3164
    %v3197 = vsub.f32 %v2429, %v3167
    %v3198 = vsub.f32 %v2505, %v3170
    %v3199 = vsub.f32 %v2581, %v3173
    %v3200 = vsub.f32 %v2657, %v3176
    %v3201 = vsub.f32 %v2733, %v3179
    %v3202 = vsub.f32 %v2809, %v3182
    %v3203 = vsub.f32 %v2885, %v3185
    %v3204 = vsub.f32 %v2961, %v3188
    %v3205 = vmul.f32 %v3189, 1.442695
    %v3206 = vpow.pop %v3205
    %v3207 = vmul.f32 %v3190, 1.442695
    %v3208 = vpow.pop %v3207
    %v3209 = vmul.f32 %v3191, 1.442695
    %v3210 = vpow.pop %v3209
    %v3211 = vmul.f32 %v3192, 1.442695
    %v3212 = vpow.pop %v3211
    %v3213 = vmul.f32 %v3193, 1.442695
    %v3214 = vpow.pop %v3213
    %v3215 = vmul.f32 %v3194, 1.442695
    %v3216 = vpow.pop %v3215
    %v3217 = vmul.f32 %v3195, 1.442695
    %v3218 = vpow.pop %v3217
    %v3219 = vmul.f32 %v3196, 1.442695
    %v3220 = vpow.pop %v3219
    %v3221 = vmul.f32 %v3197, 1.442695
    %v3222 = vpow.pop %v3221
    %v3223 = vmul.f32 %v3198, 1.442695
    %v3224 = vpow.pop %v3223
    %v3225 = vmul.f32 %v3199, 1.442695
    %v3226 = vpow.pop %v3225
    %v3227 = vmul.f32 %v3200, 1.442695
    %v3228 = vpow.pop %v3227
    %v3229 = vmul.f32 %v3201, 1.442695
    %v3230 = vpow.pop %v3229
    %v3231 = vmul.f32 %v3202, 1.442695
    %v3232 = vpow.pop %v3231
    %v3233 = vmul.f32 %v3203, 1.442695
    %v3234 = vpow.pop %v3233
    %v3235 = vmul.f32 %v3204, 1.442695
    %v3236 = vpow.pop %v3235
    %v3237 = vsel %vm2964, %v3206, 0.0
    %3238 = vadd.xlane.f32.xlu0 %v3237
    %v3239 = vpop.xlane.xlu0 %3238
    %v3240 = vsel %vm2964, %v3208, 0.0
    %3241 = vadd.xlane.f32.xlu0 %v3240
    %v3242 = vpop.xlane.xlu0 %3241
    %v3243 = vsel %vm2964, %v3210, 0.0
    %3244 = vadd.xlane.f32.xlu0 %v3243
    %v3245 = vpop.xlane.xlu0 %3244
    %v3246 = vsel %vm2964, %v3212, 0.0
    %3247 = vadd.xlane.f32.xlu0 %v3246
    %v3248 = vpop.xlane.xlu0 %3247
    %v3249 = vsel %vm2964, %v3214, 0.0
    %3250 = vadd.xlane.f32.xlu0 %v3249
    %v3251 = vpop.xlane.xlu0 %3250
    %v3252 = vsel %vm2964, %v3216, 0.0
    %3253 = vadd.xlane.f32.xlu0 %v3252
    %v3254 = vpop.xlane.xlu0 %3253
    %v3255 = vsel %vm2964, %v3218, 0.0
    %3256 = vadd.xlane.f32.xlu0 %v3255
    %v3257 = vpop.xlane.xlu0 %3256
    %v3258 = vsel %vm2964, %v3220, 0.0
    %3259 = vadd.xlane.f32.xlu0 %v3258
    %v3260 = vpop.xlane.xlu0 %3259
    %v3261 = vsel %vm2964, %v3222, 0.0
    %3262 = vadd.xlane.f32.xlu0 %v3261
    %v3263 = vpop.xlane.xlu0 %3262
    %v3264 = vsel %vm2964, %v3224, 0.0
    %3265 = vadd.xlane.f32.xlu0 %v3264
    %v3266 = vpop.xlane.xlu0 %3265
    %v3267 = vsel %vm2964, %v3226, 0.0
    %3268 = vadd.xlane.f32.xlu0 %v3267
    %v3269 = vpop.xlane.xlu0 %3268
    %v3270 = vsel %vm2964, %v3228, 0.0
    %3271 = vadd.xlane.f32.xlu0 %v3270
    %v3272 = vpop.xlane.xlu0 %3271
    %v3273 = vsel %vm2964, %v3230, 0.0
    %3274 = vadd.xlane.f32.xlu0 %v3273
    %v3275 = vpop.xlane.xlu0 %3274
    %v3276 = vsel %vm2964, %v3232, 0.0
    %3277 = vadd.xlane.f32.xlu0 %v3276
    %v3278 = vpop.xlane.xlu0 %3277
    %v3279 = vsel %vm2964, %v3234, 0.0
    %3280 = vadd.xlane.f32.xlu0 %v3279
    %v3281 = vpop.xlane.xlu0 %3280
    %v3282 = vsel %vm2964, %v3236, 0.0
    %3283 = vadd.xlane.f32.xlu0 %v3282
    %v3284 = vpop.xlane.xlu0 %3283
    %v3285 = vrcp.pop %v3239
    %v3286 = vrcp.pop %v3242
    %v3287 = vrcp.pop %v3245
    %v3288 = vrcp.pop %v3248
    %v3289 = vrcp.pop %v3251
    %v3290 = vrcp.pop %v3254
    %v3291 = vrcp.pop %v3257
    %v3292 = vrcp.pop %v3260
    %v3293 = vrcp.pop %v3263
    %v3294 = vrcp.pop %v3266
    %v3295 = vrcp.pop %v3269
    %v3296 = vrcp.pop %v3272
    %v3297 = vrcp.pop %v3275
    %v3298 = vrcp.pop %v3278
    %v3299 = vrcp.pop %v3281
    %v3300 = vrcp.pop %v3284
    %v3301 = vmul.f32 %v3206, %v3285
    %v3302 = vmul.f32 %v3208, %v3286
    %v3303 = vmul.f32 %v3210, %v3287
    %v3304 = vmul.f32 %v3212, %v3288
    %v3305 = vmul.f32 %v3214, %v3289
    %v3306 = vmul.f32 %v3216, %v3290
    %v3307 = vmul.f32 %v3218, %v3291
    %v3308 = vmul.f32 %v3220, %v3292
    %v3309 = vmul.f32 %v3222, %v3293
    %v3310 = vmul.f32 %v3224, %v3294
    %v3311 = vmul.f32 %v3226, %v3295
    %v3312 = vmul.f32 %v3228, %v3296
    %v3313 = vmul.f32 %v3230, %v3297
    %v3314 = vmul.f32 %v3232, %v3298
    %v3315 = vmul.f32 %v3234, %v3299
    %v3316 = vmul.f32 %v3236, %v3300
    %v3318 = vsel %vm2964, %v3125, 0
    %3320 = vmatprep.subr.mxu0 0.0
    %3321 = vmatpush1.msra.mxu0 %v88
    %3322 = vmatprep.subr.mxu0 0.0
    %3323 = vmatpush1.msra.mxu0 0.0
    %3324 = vmatprep.subr.mxu0 0.0
    %3325 = vmatpush1.msra.mxu0 0.0
    %3326 = vmatprep.subr.mxu0 0.0
    %3327 = vmatpush1.msra.mxu0 0.0
    %3328 = vmatprep.subr.mxu0 0.0
    %3329 = vmatpush1.msra.mxu0 0.0
    %3330 = vmatprep.subr.mxu0 0.0
    %3331 = vmatpush1.msra.mxu0 0.0
    %3332 = vmatprep.subr.mxu0 0.0
    %3333 = vmatpush1.msra.mxu0 0.0
    %3334 = vmatprep.subr.mxu0 0.0
    %3335 = vmatpush1.msra.mxu0 0.0
    %3336 = vmatprep.subr.mxu0 0.0
    %3337 = vmatpush1.msra.mxu0 0.0
    %3338 = vmatprep.subr.mxu0 0.0
    %3339 = vmatpush1.msra.mxu0 0.0
    %3340 = vmatprep.subr.mxu0 0.0
    %3341 = vmatpush1.msra.mxu0 0.0
    %3342 = vmatprep.subr.mxu0 0.0
    %3343 = vmatpush1.msra.mxu0 0.0
    %3344 = vmatprep.subr.mxu0 0.0
    %3345 = vmatpush1.msra.mxu0 0.0
    %3346 = vmatprep.subr.mxu0 0.0
    %3347 = vmatpush1.msra.mxu0 0.0
    %3348 = vmatprep.subr.mxu0 0.0
    %3349 = vmatpush1.msra.mxu0 0.0
    %3350 = vmatprep.subr.mxu0 0.0
    %3351 = vmatpush1.msra.mxu0 0.0
    %3352 = vmatprep.subr.mxu0 0.0
    %3353 = vmatpush1.msra.mxu0 0.0
    %3354 = vmatprep.subr.mxu0 0.0
    %3355 = vmatpush1.msra.mxu0 0.0
    %3356 = vmatprep.subr.mxu0 0.0
    %3357 = vmatpush1.msra.mxu0 0.0
    %3358 = vmatprep.subr.mxu0 0.0
    %3359 = vmatpush1.msra.mxu0 0.0
    %3360 = vmatprep.subr.mxu0 0.0
    %3361 = vmatpush1.msra.mxu0 0.0
    %3362 = vmatprep.subr.mxu0 0.0
    %3363 = vmatpush1.msra.mxu0 0.0
    %3364 = vmatprep.subr.mxu0 0.0
    %3365 = vmatpush1.msra.mxu0 0.0
    %3366 = vmatprep.subr.mxu0 0.0
    %3367 = vmatpush1.msra.mxu0 0.0
    %3368 = vmatprep.subr.mxu0 0.0
    %3369 = vmatpush1.msra.mxu0 0.0
    %3370 = vmatprep.subr.mxu0 0.0
    %3371 = vmatpush1.msra.mxu0 0.0
    %3372 = vmatprep.subr.mxu0 0.0
    %3373 = vmatpush1.msra.mxu0 0.0
    %3374 = vmatprep.subr.mxu0 0.0
    %3375 = vmatpush1.msra.mxu0 0.0
    %3376 = vmatprep.subr.mxu0 0.0
    %3377 = vmatpush1.msra.mxu0 0.0
    %3378 = vmatprep.subr.mxu0 0.0
    %3379 = vmatpush1.msra.mxu0 0.0
    %3380 = vmatprep.subr.mxu0 0.0
    %3381 = vmatpush1.msra.mxu0 0.0
    %3382 = vmatprep.subr.mxu0 0.0
    %3383 = vmatpush1.msra.mxu0 0.0
    %3384 = vmatprep.mubr.f32.mxu0 0.0
    %3385 = vmatmul.mubr.f32.gmra.mrb[0].mxu0 %v3318
    %v3386 = vpop.f32.mrb[0].mxu0
    %v3387 = vadd.f32 0.0, %v3386
    %v3388 = vpop.f32.mrb[0].mxu0
    %3389 = vdwg.mxu0
    %v3391 = vsel %vm2964, %v3126, 0
    %3393 = vmatprep.subr.mxu0 0.0
    %3394 = vmatpush1.msra.mxu0 %v89
    %3395 = vmatprep.subr.mxu0 0.0
    %3396 = vmatpush1.msra.mxu0 0.0
    %3397 = vmatprep.subr.mxu0 0.0
    %3398 = vmatpush1.msra.mxu0 0.0
    %3399 = vmatprep.subr.mxu0 0.0
    %3400 = vmatpush1.msra.mxu0 0.0
    %3401 = vmatprep.subr.mxu0 0.0
    %3402 = vmatpush1.msra.mxu0 0.0
    %3403 = vmatprep.subr.mxu0 0.0
    %3404 = vmatpush1.msra.mxu0 0.0
    %3405 = vmatprep.subr.mxu0 0.0
    %3406 = vmatpush1.msra.mxu0 0.0
    %3407 = vmatprep.subr.mxu0 0.0
    %3408 = vmatpush1.msra.mxu0 0.0
    %3409 = vmatprep.subr.mxu0 0.0
    %3410 = vmatpush1.msra.mxu0 0.0
    %3411 = vmatprep.subr.mxu0 0.0
    %3412 = vmatpush1.msra.mxu0 0.0
    %3413 = vmatprep.subr.mxu0 0.0
    %3414 = vmatpush1.msra.mxu0 0.0
    %3415 = vmatprep.subr.mxu0 0.0
    %3416 = vmatpush1.msra.mxu0 0.0
    %3417 = vmatprep.subr.mxu0 0.0
    %3418 = vmatpush1.msra.mxu0 0.0
    %3419 = vmatprep.subr.mxu0 0.0
    %3420 = vmatpush1.msra.mxu0 0.0
    %3421 = vmatprep.subr.mxu0 0.0
    %3422 = vmatpush1.msra.mxu0 0.0
    %3423 = vmatprep.subr.mxu0 0.0
    %3424 = vmatpush1.msra.mxu0 0.0
    %3425 = vmatprep.subr.mxu0 0.0
    %3426 = vmatpush1.msra.mxu0 0.0
    %3427 = vmatprep.subr.mxu0 0.0
    %3428 = vmatpush1.msra.mxu0 0.0
    %3429 = vmatprep.subr.mxu0 0.0
    %3430 = vmatpush1.msra.mxu0 0.0
    %3431 = vmatprep.subr.mxu0 0.0
    %3432 = vmatpush1.msra.mxu0 0.0
    %3433 = vmatprep.subr.mxu0 0.0
    %3434 = vmatpush1.msra.mxu0 0.0
    %3435 = vmatprep.subr.mxu0 0.0
    %3436 = vmatpush1.msra.mxu0 0.0
    %3437 = vmatprep.subr.mxu0 0.0
    %3438 = vmatpush1.msra.mxu0 0.0
    %3439 = vmatprep.subr.mxu0 0.0
    %3440 = vmatpush1.msra.mxu0 0.0
    %3441 = vmatprep.subr.mxu0 0.0
    %3442 = vmatpush1.msra.mxu0 0.0
    %3443 = vmatprep.subr.mxu0 0.0
    %3444 = vmatpush1.msra.mxu0 0.0
    %3445 = vmatprep.subr.mxu0 0.0
    %3446 = vmatpush1.msra.mxu0 0.0
    %3447 = vmatprep.subr.mxu0 0.0
    %3448 = vmatpush1.msra.mxu0 0.0
    %3449 = vmatprep.subr.mxu0 0.0
    %3450 = vmatpush1.msra.mxu0 0.0
    %3451 = vmatprep.subr.mxu0 0.0
    %3452 = vmatpush1.msra.mxu0 0.0
    %3453 = vmatprep.subr.mxu0 0.0
    %3454 = vmatpush1.msra.mxu0 0.0
    %3455 = vmatprep.subr.mxu0 0.0
    %3456 = vmatpush1.msra.mxu0 0.0
    %3457 = vmatprep.mubr.f32.mxu0 0.0
    %3458 = vmatmul.mubr.f32.gmra.mrb[0].mxu0 %v3391
    %v3459 = vpop.f32.mrb[0].mxu0
    %v3460 = vadd.f32 0.0, %v3459
    %v3461 = vpop.f32.mrb[0].mxu0
    %3462 = vdwg.mxu0
    %v3464 = vsel %vm2964, %v3127, 0
    %3466 = vmatprep.subr.mxu0 0.0
    %3467 = vmatpush1.msra.mxu0 %v90
    %3468 = vmatprep.subr.mxu0 0.0
    %3469 = vmatpush1.msra.mxu0 0.0
    %3470 = vmatprep.subr.mxu0 0.0
    %3471 = vmatpush1.msra.mxu0 0.0
    %3472 = vmatprep.subr.mxu0 0.0
    %3473 = vmatpush1.msra.mxu0 0.0
    %3474 = vmatprep.subr.mxu0 0.0
    %3475 = vmatpush1.msra.mxu0 0.0
    %3476 = vmatprep.subr.mxu0 0.0
    %3477 = vmatpush1.msra.mxu0 0.0
    %3478 = vmatprep.subr.mxu0 0.0
    %3479 = vmatpush1.msra.mxu0 0.0
    %3480 = vmatprep.subr.mxu0 0.0
    %3481 = vmatpush1.msra.mxu0 0.0
    %3482 = vmatprep.subr.mxu0 0.0
    %3483 = vmatpush1.msra.mxu0 0.0
    %3484 = vmatprep.subr.mxu0 0.0
    %3485 = vmatpush1.msra.mxu0 0.0
    %3486 = vmatprep.subr.mxu0 0.0
    %3487 = vmatpush1.msra.mxu0 0.0
    %3488 = vmatprep.subr.mxu0 0.0
    %3489 = vmatpush1.msra.mxu0 0.0
    %3490 = vmatprep.subr.mxu0 0.0
    %3491 = vmatpush1.msra.mxu0 0.0
    %3492 = vmatprep.subr.mxu0 0.0
    %3493 = vmatpush1.msra.mxu0 0.0
    %3494 = vmatprep.subr.mxu0 0.0
    %3495 = vmatpush1.msra.mxu0 0.0
    %3496 = vmatprep.subr.mxu0 0.0
    %3497 = vmatpush1.msra.mxu0 0.0
    %3498 = vmatprep.subr.mxu0 0.0
    %3499 = vmatpush1.msra.mxu0 0.0
    %3500 = vmatprep.subr.mxu0 0.0
    %3501 = vmatpush1.msra.mxu0 0.0
    %3502 = vmatprep.subr.mxu0 0.0
    %3503 = vmatpush1.msra.mxu0 0.0
    %3504 = vmatprep.subr.mxu0 0.0
    %3505 = vmatpush1.msra.mxu0 0.0
    %3506 = vmatprep.subr.mxu0 0.0
    %3507 = vmatpush1.msra.mxu0 0.0
    %3508 = vmatprep.subr.mxu0 0.0
    %3509 = vmatpush1.msra.mxu0 0.0
    %3510 = vmatprep.subr.mxu0 0.0
    %3511 = vmatpush1.msra.mxu0 0.0
    %3512 = vmatprep.subr.mxu0 0.0
    %3513 = vmatpush1.msra.mxu0 0.0
    %3514 = vmatprep.subr.mxu0 0.0
    %3515 = vmatpush1.msra.mxu0 0.0
    %3516 = vmatprep.subr.mxu0 0.0
    %3517 = vmatpush1.msra.mxu0 0.0
    %3518 = vmatprep.subr.mxu0 0.0
    %3519 = vmatpush1.msra.mxu0 0.0
    %3520 = vmatprep.subr.mxu0 0.0
    %3521 = vmatpush1.msra.mxu0 0.0
    %3522 = vmatprep.subr.mxu0 0.0
    %3523 = vmatpush1.msra.mxu0 0.0
    %3524 = vmatprep.subr.mxu0 0.0
    %3525 = vmatpush1.msra.mxu0 0.0
    %3526 = vmatprep.subr.mxu0 0.0
    %3527 = vmatpush1.msra.mxu0 0.0
    %3528 = vmatprep.subr.mxu0 0.0
    %3529 = vmatpush1.msra.mxu0 0.0
    %3530 = vmatprep.mubr.f32.mxu0 0.0
    %3531 = vmatmul.mubr.f32.gmra.mrb[0].mxu0 %v3464
    %v3532 = vpop.f32.mrb[0].mxu0
    %v3533 = vadd.f32 0.0, %v3532
    %v3534 = vpop.f32.mrb[0].mxu0
    %3535 = vdwg.mxu0
    %v3537 = vsel %vm2964, %v3128, 0
    %3539 = vmatprep.subr.mxu0 0.0
    %3540 = vmatpush1.msra.mxu0 %v91
    %3541 = vmatprep.subr.mxu0 0.0
    %3542 = vmatpush1.msra.mxu0 0.0
    %3543 = vmatprep.subr.mxu0 0.0
    %3544 = vmatpush1.msra.mxu0 0.0
    %3545 = vmatprep.subr.mxu0 0.0
    %3546 = vmatpush1.msra.mxu0 0.0
    %3547 = vmatprep.subr.mxu0 0.0
    %3548 = vmatpush1.msra.mxu0 0.0
    %3549 = vmatprep.subr.mxu0 0.0
    %3550 = vmatpush1.msra.mxu0 0.0
    %3551 = vmatprep.subr.mxu0 0.0
    %3552 = vmatpush1.msra.mxu0 0.0
    %3553 = vmatprep.subr.mxu0 0.0
    %3554 = vmatpush1.msra.mxu0 0.0
    %3555 = vmatprep.subr.mxu0 0.0
    %3556 = vmatpush1.msra.mxu0 0.0
    %3557 = vmatprep.subr.mxu0 0.0
    %3558 = vmatpush1.msra.mxu0 0.0
    %3559 = vmatprep.subr.mxu0 0.0
    %3560 = vmatpush1.msra.mxu0 0.0
    %3561 = vmatprep.subr.mxu0 0.0
    %3562 = vmatpush1.msra.mxu0 0.0
    %3563 = vmatprep.subr.mxu0 0.0
    %3564 = vmatpush1.msra.mxu0 0.0
    %3565 = vmatprep.subr.mxu0 0.0
    %3566 = vmatpush1.msra.mxu0 0.0
    %3567 = vmatprep.subr.mxu0 0.0
    %3568 = vmatpush1.msra.mxu0 0.0
    %3569 = vmatprep.subr.mxu0 0.0
    %3570 = vmatpush1.msra.mxu0 0.0
    %3571 = vmatprep.subr.mxu0 0.0
    %3572 = vmatpush1.msra.mxu0 0.0
    %3573 = vmatprep.subr.mxu0 0.0
    %3574 = vmatpush1.msra.mxu0 0.0
    %3575 = vmatprep.subr.mxu0 0.0
    %3576 = vmatpush1.msra.mxu0 0.0
    %3577 = vmatprep.subr.mxu0 0.0
    %3578 = vmatpush1.msra.mxu0 0.0
    %3579 = vmatprep.subr.mxu0 0.0
    %3580 = vmatpush1.msra.mxu0 0.0
    %3581 = vmatprep.subr.mxu0 0.0
    %3582 = vmatpush1.msra.mxu0 0.0
    %3583 = vmatprep.subr.mxu0 0.0
    %3584 = vmatpush1.msra.mxu0 0.0
    %3585 = vmatprep.subr.mxu0 0.0
    %3586 = vmatpush1.msra.mxu0 0.0
    %3587 = vmatprep.subr.mxu0 0.0
    %3588 = vmatpush1.msra.mxu0 0.0
    %3589 = vmatprep.subr.mxu0 0.0
    %3590 = vmatpush1.msra.mxu0 0.0
    %3591 = vmatprep.subr.mxu0 0.0
    %3592 = vmatpush1.msra.mxu0 0.0
    %3593 = vmatprep.subr.mxu0 0.0
    %3594 = vmatpush1.msra.mxu0 0.0
    %3595 = vmatprep.subr.mxu0 0.0
    %3596 = vmatpush1.msra.mxu0 0.0
    %3597 = vmatprep.subr.mxu0 0.0
    %3598 = vmatpush1.msra.mxu0 0.0
    %3599 = vmatprep.subr.mxu0 0.0
    %3600 = vmatpush1.msra.mxu0 0.0
    %3601 = vmatprep.subr.mxu0 0.0
    %3602 = vmatpush1.msra.mxu0 0.0
    %3603 = vmatprep.mubr.f32.mxu0 0.0
    %3604 = vmatmul.mubr.f32.gmra.mrb[0].mxu0 %v3537
    %v3605 = vpop.f32.mrb[0].mxu0
    %v3606 = vadd.f32 0.0, %v3605
    %v3607 = vpop.f32.mrb[0].mxu0
    %3608 = vdwg.mxu0
    %v3610 = vsel %vm2964, %v3129, 0
    %3612 = vmatprep.subr.mxu0 0.0
    %3613 = vmatpush1.msra.mxu0 %v92
    %3614 = vmatprep.subr.mxu0 0.0
    %3615 = vmatpush1.msra.mxu0 0.0
    %3616 = vmatprep.subr.mxu0 0.0
    %3617 = vmatpush1.msra.mxu0 0.0
    %3618 = vmatprep.subr.mxu0 0.0
    %3619 = vmatpush1.msra.mxu0 0.0
    %3620 = vmatprep.subr.mxu0 0.0
    %3621 = vmatpush1.msra.mxu0 0.0
    %3622 = vmatprep.subr.mxu0 0.0
    %3623 = vmatpush1.msra.mxu0 0.0
    %3624 = vmatprep.subr.mxu0 0.0
    %3625 = vmatpush1.msra.mxu0 0.0
    %3626 = vmatprep.subr.mxu0 0.0
    %3627 = vmatpush1.msra.mxu0 0.0
    %3628 = vmatprep.subr.mxu0 0.0
    %3629 = vmatpush1.msra.mxu0 0.0
    %3630 = vmatprep.subr.mxu0 0.0
    %3631 = vmatpush1.msra.mxu0 0.0
    %3632 = vmatprep.subr.mxu0 0.0
    %3633 = vmatpush1.msra.mxu0 0.0
    %3634 = vmatprep.subr.mxu0 0.0
    %3635 = vmatpush1.msra.mxu0 0.0
    %3636 = vmatprep.subr.mxu0 0.0
    %3637 = vmatpush1.msra.mxu0 0.0
    %3638 = vmatprep.subr.mxu0 0.0
    %3639 = vmatpush1.msra.mxu0 0.0
    %3640 = vmatprep.subr.mxu0 0.0
    %3641 = vmatpush1.msra.mxu0 0.0
    %3642 = vmatprep.subr.mxu0 0.0
    %3643 = vmatpush1.msra.mxu0 0.0
    %3644 = vmatprep.subr.mxu0 0.0
    %3645 = vmatpush1.msra.mxu0 0.0
    %3646 = vmatprep.subr.mxu0 0.0
    %3647 = vmatpush1.msra.mxu0 0.0
    %3648 = vmatprep.subr.mxu0 0.0
    %3649 = vmatpush1.msra.mxu0 0.0
    %3650 = vmatprep.subr.mxu0 0.0
    %3651 = vmatpush1.msra.mxu0 0.0
    %3652 = vmatprep.subr.mxu0 0.0
    %3653 = vmatpush1.msra.mxu0 0.0
    %3654 = vmatprep.subr.mxu0 0.0
    %3655 = vmatpush1.msra.mxu0 0.0
    %3656 = vmatprep.subr.mxu0 0.0
    %3657 = vmatpush1.msra.mxu0 0.0
    %3658 = vmatprep.subr.mxu0 0.0
    %3659 = vmatpush1.msra.mxu0 0.0
    %3660 = vmatprep.subr.mxu0 0.0
    %3661 = vmatpush1.msra.mxu0 0.0
    %3662 = vmatprep.subr.mxu0 0.0
    %3663 = vmatpush1.msra.mxu0 0.0
    %3664 = vmatprep.subr.mxu0 0.0
    %3665 = vmatpush1.msra.mxu0 0.0
    %3666 = vmatprep.subr.mxu0 0.0
    %3667 = vmatpush1.msra.mxu0 0.0
    %3668 = vmatprep.subr.mxu0 0.0
    %3669 = vmatpush1.msra.mxu0 0.0
    %3670 = vmatprep.subr.mxu0 0.0
    %3671 = vmatpush1.msra.mxu0 0.0
    %3672 = vmatprep.subr.mxu0 0.0
    %3673 = vmatpush1.msra.mxu0 0.0
    %3674 = vmatprep.subr.mxu0 0.0
    %3675 = vmatpush1.msra.mxu0 0.0
    %3676 = vmatprep.mubr.f32.mxu0 0.0
    %3677 = vmatmul.mubr.f32.gmra.mrb[0].mxu0 %v3610
    %v3678 = vpop.f32.mrb[0].mxu0
    %v3679 = vadd.f32 0.0, %v3678
    %v3680 = vpop.f32.mrb[0].mxu0
    %3681 = vdwg.mxu0
    %v3683 = vsel %vm2964, %v3130, 0
    %3685 = vmatprep.subr.mxu0 0.0
    %3686 = vmatpush1.msra.mxu0 %v93
    %3687 = vmatprep.subr.mxu0 0.0
    %3688 = vmatpush1.msra.mxu0 0.0
    %3689 = vmatprep.subr.mxu0 0.0
    %3690 = vmatpush1.msra.mxu0 0.0
    %3691 = vmatprep.subr.mxu0 0.0
    %3692 = vmatpush1.msra.mxu0 0.0
    %3693 = vmatprep.subr.mxu0 0.0
    %3694 = vmatpush1.msra.mxu0 0.0
    %3695 = vmatprep.subr.mxu0 0.0
    %3696 = vmatpush1.msra.mxu0 0.0
    %3697 = vmatprep.subr.mxu0 0.0
    %3698 = vmatpush1.msra.mxu0 0.0
    %3699 = vmatprep.subr.mxu0 0.0
    %3700 = vmatpush1.msra.mxu0 0.0
    %3701 = vmatprep.subr.mxu0 0.0
    %3702 = vmatpush1.msra.mxu0 0.0
    %3703 = vmatprep.subr.mxu0 0.0
    %3704 = vmatpush1.msra.mxu0 0.0
    %3705 = vmatprep.subr.mxu0 0.0
    %3706 = vmatpush1.msra.mxu0 0.0
    %3707 = vmatprep.subr.mxu0 0.0
    %3708 = vmatpush1.msra.mxu0 0.0
    %3709 = vmatprep.subr.mxu0 0.0
    %3710 = vmatpush1.msra.mxu0 0.0
    %3711 = vmatprep.subr.mxu0 0.0
    %3712 = vmatpush1.msra.mxu0 0.0
    %3713 = vmatprep.subr.mxu0 0.0
    %3714 = vmatpush1.msra.mxu0 0.0
    %3715 = vmatprep.subr.mxu0 0.0
    %3716 = vmatpush1.msra.mxu0 0.0
    %3717 = vmatprep.subr.mxu0 0.0
    %3718 = vmatpush1.msra.mxu0 0.0
    %3719 = vmatprep.subr.mxu0 0.0
    %3720 = vmatpush1.msra.mxu0 0.0
    %3721 = vmatprep.subr.mxu0 0.0
    %3722 = vmatpush1.msra.mxu0 0.0
    %3723 = vmatprep.subr.mxu0 0.0
    %3724 = vmatpush1.msra.mxu0 0.0
    %3725 = vmatprep.subr.mxu0 0.0
    %3726 = vmatpush1.msra.mxu0 0.0
    %3727 = vmatprep.subr.mxu0 0.0
    %3728 = vmatpush1.msra.mxu0 0.0
    %3729 = vmatprep.subr.mxu0 0.0
    %3730 = vmatpush1.msra.mxu0 0.0
    %3731 = vmatprep.subr.mxu0 0.0
    %3732 = vmatpush1.msra.mxu0 0.0
    %3733 = vmatprep.subr.mxu0 0.0
    %3734 = vmatpush1.msra.mxu0 0.0
    %3735 = vmatprep.subr.mxu0 0.0
    %3736 = vmatpush1.msra.mxu0 0.0
    %3737 = vmatprep.subr.mxu0 0.0
    %3738 = vmatpush1.msra.mxu0 0.0
    %3739 = vmatprep.subr.mxu0 0.0
    %3740 = vmatpush1.msra.mxu0 0.0
    %3741 = vmatprep.subr.mxu0 0.0
    %3742 = vmatpush1.msra.mxu0 0.0
    %3743 = vmatprep.subr.mxu0 0.0
    %3744 = vmatpush1.msra.mxu0 0.0
    %3745 = vmatprep.subr.mxu0 0.0
    %3746 = vmatpush1.msra.mxu0 0.0
    %3747 = vmatprep.subr.mxu0 0.0
    %3748 = vmatpush1.msra.mxu0 0.0
    %3749 = vmatprep.mubr.f32.mxu0 0.0
    %3750 = vmatmul.mubr.f32.gmra.mrb[0].mxu0 %v3683
    %v3751 = vpop.f32.mrb[0].mxu0
    %v3752 = vadd.f32 0.0, %v3751
    %v3753 = vpop.f32.mrb[0].mxu0
    %3754 = vdwg.mxu0
    %v3756 = vsel %vm2964, %v3131, 0
    %3758 = vmatprep.subr.mxu0 0.0
    %3759 = vmatpush1.msra.mxu0 %v94
    %3760 = vmatprep.subr.mxu0 0.0
    %3761 = vmatpush1.msra.mxu0 0.0
    %3762 = vmatprep.subr.mxu0 0.0
    %3763 = vmatpush1.msra.mxu0 0.0
    %3764 = vmatprep.subr.mxu0 0.0
    %3765 = vmatpush1.msra.mxu0 0.0
    %3766 = vmatprep.subr.mxu0 0.0
    %3767 = vmatpush1.msra.mxu0 0.0
    %3768 = vmatprep.subr.mxu0 0.0
    %3769 = vmatpush1.msra.mxu0 0.0
    %3770 = vmatprep.subr.mxu0 0.0
    %3771 = vmatpush1.msra.mxu0 0.0
    %3772 = vmatprep.subr.mxu0 0.0
    %3773 = vmatpush1.msra.mxu0 0.0
    %3774 = vmatprep.subr.mxu0 0.0
    %3775 = vmatpush1.msra.mxu0 0.0
    %3776 = vmatprep.subr.mxu0 0.0
    %3777 = vmatpush1.msra.mxu0 0.0
    %3778 = vmatprep.subr.mxu0 0.0
    %3779 = vmatpush1.msra.mxu0 0.0
    %3780 = vmatprep.subr.mxu0 0.0
    %3781 = vmatpush1.msra.mxu0 0.0
    %3782 = vmatprep.subr.mxu0 0.0
    %3783 = vmatpush1.msra.mxu0 0.0
    %3784 = vmatprep.subr.mxu0 0.0
    %3785 = vmatpush1.msra.mxu0 0.0
    %3786 = vmatprep.subr.mxu0 0.0
    %3787 = vmatpush1.msra.mxu0 0.0
    %3788 = vmatprep.subr.mxu0 0.0
    %3789 = vmatpush1.msra.mxu0 0.0
    %3790 = vmatprep.subr.mxu0 0.0
    %3791 = vmatpush1.msra.mxu0 0.0
    %3792 = vmatprep.subr.mxu0 0.0
    %3793 = vmatpush1.msra.mxu0 0.0
    %3794 = vmatprep.subr.mxu0 0.0
    %3795 = vmatpush1.msra.mxu0 0.0
    %3796 = vmatprep.subr.mxu0 0.0
    %3797 = vmatpush1.msra.mxu0 0.0
    %3798 = vmatprep.subr.mxu0 0.0
    %3799 = vmatpush1.msra.mxu0 0.0
    %3800 = vmatprep.subr.mxu0 0.0
    %3801 = vmatpush1.msra.mxu0 0.0
    %3802 = vmatprep.subr.mxu0 0.0
    %3803 = vmatpush1.msra.mxu0 0.0
    %3804 = vmatprep.subr.mxu0 0.0
    %3805 = vmatpush1.msra.mxu0 0.0
    %3806 = vmatprep.subr.mxu0 0.0
    %3807 = vmatpush1.msra.mxu0 0.0
    %3808 = vmatprep.subr.mxu0 0.0
    %3809 = vmatpush1.msra.mxu0 0.0
    %3810 = vmatprep.subr.mxu0 0.0
    %3811 = vmatpush1.msra.mxu0 0.0
    %3812 = vmatprep.subr.mxu0 0.0
    %3813 = vmatpush1.msra.mxu0 0.0
    %3814 = vmatprep.subr.mxu0 0.0
    %3815 = vmatpush1.msra.mxu0 0.0
    %3816 = vmatprep.subr.mxu0 0.0
    %3817 = vmatpush1.msra.mxu0 0.0
    %3818 = vmatprep.subr.mxu0 0.0
    %3819 = vmatpush1.msra.mxu0 0.0
    %3820 = vmatprep.subr.mxu0 0.0
    %3821 = vmatpush1.msra.mxu0 0.0
    %3822 = vmatprep.mubr.f32.mxu0 0.0
    %3823 = vmatmul.mubr.f32.gmra.mrb[0].mxu0 %v3756
    %v3824 = vpop.f32.mrb[0].mxu0
    %v3825 = vadd.f32 0.0, %v3824
    %v3826 = vpop.f32.mrb[0].mxu0
    %3827 = vdwg.mxu0
    %v3829 = vsel %vm2964, %v3132, 0
    %3831 = vmatprep.subr.mxu0 0.0
    %3832 = vmatpush1.msra.mxu0 %v95
    %3833 = vmatprep.subr.mxu0 0.0
    %3834 = vmatpush1.msra.mxu0 0.0
    %3835 = vmatprep.subr.mxu0 0.0
    %3836 = vmatpush1.msra.mxu0 0.0
    %3837 = vmatprep.subr.mxu0 0.0
    %3838 = vmatpush1.msra.mxu0 0.0
    %3839 = vmatprep.subr.mxu0 0.0
    %3840 = vmatpush1.msra.mxu0 0.0
    %3841 = vmatprep.subr.mxu0 0.0
    %3842 = vmatpush1.msra.mxu0 0.0
    %3843 = vmatprep.subr.mxu0 0.0
    %3844 = vmatpush1.msra.mxu0 0.0
    %3845 = vmatprep.subr.mxu0 0.0
    %3846 = vmatpush1.msra.mxu0 0.0
    %3847 = vmatprep.subr.mxu0 0.0
    %3848 = vmatpush1.msra.mxu0 0.0
    %3849 = vmatprep.subr.mxu0 0.0
    %3850 = vmatpush1.msra.mxu0 0.0
    %3851 = vmatprep.subr.mxu0 0.0
    %3852 = vmatpush1.msra.mxu0 0.0
    %3853 = vmatprep.subr.mxu0 0.0
    %3854 = vmatpush1.msra.mxu0 0.0
    %3855 = vmatprep.subr.mxu0 0.0
    %3856 = vmatpush1.msra.mxu0 0.0
    %3857 = vmatprep.subr.mxu0 0.0
    %3858 = vmatpush1.msra.mxu0 0.0
    %3859 = vmatprep.subr.mxu0 0.0
    %3860 = vmatpush1.msra.mxu0 0.0
    %3861 = vmatprep.subr.mxu0 0.0
    %3862 = vmatpush1.msra.mxu0 0.0
    %3863 = vmatprep.subr.mxu0 0.0
    %3864 = vmatpush1.msra.mxu0 0.0
    %3865 = vmatprep.subr.mxu0 0.0
    %3866 = vmatpush1.msra.mxu0 0.0
    %3867 = vmatprep.subr.mxu0 0.0
    %3868 = vmatpush1.msra.mxu0 0.0
    %3869 = vmatprep.subr.mxu0 0.0
    %3870 = vmatpush1.msra.mxu0 0.0
    %3871 = vmatprep.subr.mxu0 0.0
    %3872 = vmatpush1.msra.mxu0 0.0
    %3873 = vmatprep.subr.mxu0 0.0
    %3874 = vmatpush1.msra.mxu0 0.0
    %3875 = vmatprep.subr.mxu0 0.0
    %3876 = vmatpush1.msra.mxu0 0.0
    %3877 = vmatprep.subr.mxu0 0.0
    %3878 = vmatpush1.msra.mxu0 0.0
    %3879 = vmatprep.subr.mxu0 0.0
    %3880 = vmatpush1.msra.mxu0 0.0
    %3881 = vmatprep.subr.mxu0 0.0
    %3882 = vmatpush1.msra.mxu0 0.0
    %3883 = vmatprep.subr.mxu0 0.0
    %3884 = vmatpush1.msra.mxu0 0.0
    %3885 = vmatprep.subr.mxu0 0.0
    %3886 = vmatpush1.msra.mxu0 0.0
    %3887 = vmatprep.subr.mxu0 0.0
    %3888 = vmatpush1.msra.mxu0 0.0
    %3889 = vmatprep.subr.mxu0 0.0
    %3890 = vmatpush1.msra.mxu0 0.0
    %3891 = vmatprep.subr.mxu0 0.0
    %3892 = vmatpush1.msra.mxu0 0.0
    %3893 = vmatprep.subr.mxu0 0.0
    %3894 = vmatpush1.msra.mxu0 0.0
    %3895 = vmatprep.mubr.f32.mxu0 0.0
    %3896 = vmatmul.mubr.f32.gmra.mrb[0].mxu0 %v3829
    %v3897 = vpop.f32.mrb[0].mxu0
    %v3898 = vadd.f32 0.0, %v3897
    %v3899 = vpop.f32.mrb[0].mxu0
    %3900 = vdwg.mxu0
    %v3902 = vsel %vm2964, %v3133, 0
    %3904 = vmatprep.subr.mxu0 0.0
    %3905 = vmatpush1.msra.mxu0 %v96
    %3906 = vmatprep.subr.mxu0 0.0
    %3907 = vmatpush1.msra.mxu0 0.0
    %3908 = vmatprep.subr.mxu0 0.0
    %3909 = vmatpush1.msra.mxu0 0.0
    %3910 = vmatprep.subr.mxu0 0.0
    %3911 = vmatpush1.msra.mxu0 0.0
    %3912 = vmatprep.subr.mxu0 0.0
    %3913 = vmatpush1.msra.mxu0 0.0
    %3914 = vmatprep.subr.mxu0 0.0
    %3915 = vmatpush1.msra.mxu0 0.0
    %3916 = vmatprep.subr.mxu0 0.0
    %3917 = vmatpush1.msra.mxu0 0.0
    %3918 = vmatprep.subr.mxu0 0.0
    %3919 = vmatpush1.msra.mxu0 0.0
    %3920 = vmatprep.subr.mxu0 0.0
    %3921 = vmatpush1.msra.mxu0 0.0
    %3922 = vmatprep.subr.mxu0 0.0
    %3923 = vmatpush1.msra.mxu0 0.0
    %3924 = vmatprep.subr.mxu0 0.0
    %3925 = vmatpush1.msra.mxu0 0.0
    %3926 = vmatprep.subr.mxu0 0.0
    %3927 = vmatpush1.msra.mxu0 0.0
    %3928 = vmatprep.subr.mxu0 0.0
    %3929 = vmatpush1.msra.mxu0 0.0
    %3930 = vmatprep.subr.mxu0 0.0
    %3931 = vmatpush1.msra.mxu0 0.0
    %3932 = vmatprep.subr.mxu0 0.0
    %3933 = vmatpush1.msra.mxu0 0.0
    %3934 = vmatprep.subr.mxu0 0.0
    %3935 = vmatpush1.msra.mxu0 0.0
    %3936 = vmatprep.subr.mxu0 0.0
    %3937 = vmatpush1.msra.mxu0 0.0
    %3938 = vmatprep.subr.mxu0 0.0
    %3939 = vmatpush1.msra.mxu0 0.0
    %3940 = vmatprep.subr.mxu0 0.0
    %3941 = vmatpush1.msra.mxu0 0.0
    %3942 = vmatprep.subr.mxu0 0.0
    %3943 = vmatpush1.msra.mxu0 0.0
    %3944 = vmatprep.subr.mxu0 0.0
    %3945 = vmatpush1.msra.mxu0 0.0
    %3946 = vmatprep.subr.mxu0 0.0
    %3947 = vmatpush1.msra.mxu0 0.0
    %3948 = vmatprep.subr.mxu0 0.0
    %3949 = vmatpush1.msra.mxu0 0.0
    %3950 = vmatprep.subr.mxu0 0.0
    %3951 = vmatpush1.msra.mxu0 0.0
    %3952 = vmatprep.subr.mxu0 0.0
    %3953 = vmatpush1.msra.mxu0 0.0
    %3954 = vmatprep.subr.mxu0 0.0
    %3955 = vmatpush1.msra.mxu0 0.0
    %3956 = vmatprep.subr.mxu0 0.0
    %3957 = vmatpush1.msra.mxu0 0.0
    %3958 = vmatprep.subr.mxu0 0.0
    %3959 = vmatpush1.msra.mxu0 0.0
    %3960 = vmatprep.subr.mxu0 0.0
    %3961 = vmatpush1.msra.mxu0 0.0
    %3962 = vmatprep.subr.mxu0 0.0
    %3963 = vmatpush1.msra.mxu0 0.0
    %3964 = vmatprep.subr.mxu0 0.0
    %3965 = vmatpush1.msra.mxu0 0.0
    %3966 = vmatprep.subr.mxu0 0.0
    %3967 = vmatpush1.msra.mxu0 0.0
    %3968 = vmatprep.mubr.f32.mxu0 0.0
    %3969 = vmatmul.mubr.f32.gmra.mrb[0].mxu0 %v3902
    %v3970 = vpop.f32.mrb[0].mxu0
    %v3971 = vadd.f32 0.0, %v3970
    %v3972 = vpop.f32.mrb[0].mxu0
    %3973 = vdwg.mxu0
    %v3975 = vsel %vm2964, %v3134, 0
    %3977 = vmatprep.subr.mxu0 0.0
    %3978 = vmatpush1.msra.mxu0 %v97
    %3979 = vmatprep.subr.mxu0 0.0
    %3980 = vmatpush1.msra.mxu0 0.0
    %3981 = vmatprep.subr.mxu0 0.0
    %3982 = vmatpush1.msra.mxu0 0.0
    %3983 = vmatprep.subr.mxu0 0.0
    %3984 = vmatpush1.msra.mxu0 0.0
    %3985 = vmatprep.subr.mxu0 0.0
    %3986 = vmatpush1.msra.mxu0 0.0
    %3987 = vmatprep.subr.mxu0 0.0
    %3988 = vmatpush1.msra.mxu0 0.0
    %3989 = vmatprep.subr.mxu0 0.0
    %3990 = vmatpush1.msra.mxu0 0.0
    %3991 = vmatprep.subr.mxu0 0.0
    %3992 = vmatpush1.msra.mxu0 0.0
    %3993 = vmatprep.subr.mxu0 0.0
    %3994 = vmatpush1.msra.mxu0 0.0
    %3995 = vmatprep.subr.mxu0 0.0
    %3996 = vmatpush1.msra.mxu0 0.0
    %3997 = vmatprep.subr.mxu0 0.0
    %3998 = vmatpush1.msra.mxu0 0.0
    %3999 = vmatprep.subr.mxu0 0.0
    %4000 = vmatpush1.msra.mxu0 0.0
    %4001 = vmatprep.subr.mxu0 0.0
    %4002 = vmatpush1.msra.mxu0 0.0
    %4003 = vmatprep.subr.mxu0 0.0
    %4004 = vmatpush1.msra.mxu0 0.0
    %4005 = vmatprep.subr.mxu0 0.0
    %4006 = vmatpush1.msra.mxu0 0.0
    %4007 = vmatprep.subr.mxu0 0.0
    %4008 = vmatpush1.msra.mxu0 0.0
    %4009 = vmatprep.subr.mxu0 0.0
    %4010 = vmatpush1.msra.mxu0 0.0
    %4011 = vmatprep.subr.mxu0 0.0
    %4012 = vmatpush1.msra.mxu0 0.0
    %4013 = vmatprep.subr.mxu0 0.0
    %4014 = vmatpush1.msra.mxu0 0.0
    %4015 = vmatprep.subr.mxu0 0.0
    %4016 = vmatpush1.msra.mxu0 0.0
    %4017 = vmatprep.subr.mxu0 0.0
    %4018 = vmatpush1.msra.mxu0 0.0
    %4019 = vmatprep.subr.mxu0 0.0
    %4020 = vmatpush1.msra.mxu0 0.0
    %4021 = vmatprep.subr.mxu0 0.0
    %4022 = vmatpush1.msra.mxu0 0.0
    %4023 = vmatprep.subr.mxu0 0.0
    %4024 = vmatpush1.msra.mxu0 0.0
    %4025 = vmatprep.subr.mxu0 0.0
    %4026 = vmatpush1.msra.mxu0 0.0
    %4027 = vmatprep.subr.mxu0 0.0
    %4028 = vmatpush1.msra.mxu0 0.0
    %4029 = vmatprep.subr.mxu0 0.0
    %4030 = vmatpush1.msra.mxu0 0.0
    %4031 = vmatprep.subr.mxu0 0.0
    %4032 = vmatpush1.msra.mxu0 0.0
    %4033 = vmatprep.subr.mxu0 0.0
    %4034 = vmatpush1.msra.mxu0 0.0
    %4035 = vmatprep.subr.mxu0 0.0
    %4036 = vmatpush1.msra.mxu0 0.0
    %4037 = vmatprep.subr.mxu0 0.0
    %4038 = vmatpush1.msra.mxu0 0.0
    %4039 = vmatprep.subr.mxu0 0.0
    %4040 = vmatpush1.msra.mxu0 0.0
    %4041 = vmatprep.mubr.f32.mxu0 0.0
    %4042 = vmatmul.mubr.f32.gmra.mrb[0].mxu0 %v3975
    %v4043 = vpop.f32.mrb[0].mxu0
    %v4044 = vadd.f32 0.0, %v4043
    %v4045 = vpop.f32.mrb[0].mxu0
    %4046 = vdwg.mxu0
    %v4048 = vsel %vm2964, %v3135, 0
    %4050 = vmatprep.subr.mxu0 0.0
    %4051 = vmatpush1.msra.mxu0 %v98
    %4052 = vmatprep.subr.mxu0 0.0
    %4053 = vmatpush1.msra.mxu0 0.0
    %4054 = vmatprep.subr.mxu0 0.0
    %4055 = vmatpush1.msra.mxu0 0.0
    %4056 = vmatprep.subr.mxu0 0.0
    %4057 = vmatpush1.msra.mxu0 0.0
    %4058 = vmatprep.subr.mxu0 0.0
    %4059 = vmatpush1.msra.mxu0 0.0
    %4060 = vmatprep.subr.mxu0 0.0
    %4061 = vmatpush1.msra.mxu0 0.0
    %4062 = vmatprep.subr.mxu0 0.0
    %4063 = vmatpush1.msra.mxu0 0.0
    %4064 = vmatprep.subr.mxu0 0.0
    %4065 = vmatpush1.msra.mxu0 0.0
    %4066 = vmatprep.subr.mxu0 0.0
    %4067 = vmatpush1.msra.mxu0 0.0
    %4068 = vmatprep.subr.mxu0 0.0
    %4069 = vmatpush1.msra.mxu0 0.0
    %4070 = vmatprep.subr.mxu0 0.0
    %4071 = vmatpush1.msra.mxu0 0.0
    %4072 = vmatprep.subr.mxu0 0.0
    %4073 = vmatpush1.msra.mxu0 0.0
    %4074 = vmatprep.subr.mxu0 0.0
    %4075 = vmatpush1.msra.mxu0 0.0
    %4076 = vmatprep.subr.mxu0 0.0
    %4077 = vmatpush1.msra.mxu0 0.0
    %4078 = vmatprep.subr.mxu0 0.0
    %4079 = vmatpush1.msra.mxu0 0.0
    %4080 = vmatprep.subr.mxu0 0.0
    %4081 = vmatpush1.msra.mxu0 0.0
    %4082 = vmatprep.subr.mxu0 0.0
    %4083 = vmatpush1.msra.mxu0 0.0
    %4084 = vmatprep.subr.mxu0 0.0
    %4085 = vmatpush1.msra.mxu0 0.0
    %4086 = vmatprep.subr.mxu0 0.0
    %4087 = vmatpush1.msra.mxu0 0.0
    %4088 = vmatprep.subr.mxu0 0.0
    %4089 = vmatpush1.msra.mxu0 0.0
    %4090 = vmatprep.subr.mxu0 0.0
    %4091 = vmatpush1.msra.mxu0 0.0
    %4092 = vmatprep.subr.mxu0 0.0
    %4093 = vmatpush1.msra.mxu0 0.0
    %4094 = vmatprep.subr.mxu0 0.0
    %4095 = vmatpush1.msra.mxu0 0.0
    %4096 = vmatprep.subr.mxu0 0.0
    %4097 = vmatpush1.msra.mxu0 0.0
    %4098 = vmatprep.subr.mxu0 0.0
    %4099 = vmatpush1.msra.mxu0 0.0
    %4100 = vmatprep.subr.mxu0 0.0
    %4101 = vmatpush1.msra.mxu0 0.0
    %4102 = vmatprep.subr.mxu0 0.0
    %4103 = vmatpush1.msra.mxu0 0.0
    %4104 = vmatprep.subr.mxu0 0.0
    %4105 = vmatpush1.msra.mxu0 0.0
    %4106 = vmatprep.subr.mxu0 0.0
    %4107 = vmatpush1.msra.mxu0 0.0
    %4108 = vmatprep.subr.mxu0 0.0
    %4109 = vmatpush1.msra.mxu0 0.0
    %4110 = vmatprep.subr.mxu0 0.0
    %4111 = vmatpush1.msra.mxu0 0.0
    %4112 = vmatprep.subr.mxu0 0.0
    %4113 = vmatpush1.msra.mxu0 0.0
    %4114 = vmatprep.mubr.f32.mxu0 0.0
    %4115 = vmatmul.mubr.f32.gmra.mrb[0].mxu0 %v4048
    %v4116 = vpop.f32.mrb[0].mxu0
    %v4117 = vadd.f32 0.0, %v4116
    %v4118 = vpop.f32.mrb[0].mxu0
    %4119 = vdwg.mxu0
    %v4121 = vsel %vm2964, %v3136, 0
    %4123 = vmatprep.subr.mxu0 0.0
    %4124 = vmatpush1.msra.mxu0 %v99
    %4125 = vmatprep.subr.mxu0 0.0
    %4126 = vmatpush1.msra.mxu0 0.0
    %4127 = vmatprep.subr.mxu0 0.0
    %4128 = vmatpush1.msra.mxu0 0.0
    %4129 = vmatprep.subr.mxu0 0.0
    %4130 = vmatpush1.msra.mxu0 0.0
    %4131 = vmatprep.subr.mxu0 0.0
    %4132 = vmatpush1.msra.mxu0 0.0
    %4133 = vmatprep.subr.mxu0 0.0
    %4134 = vmatpush1.msra.mxu0 0.0
    %4135 = vmatprep.subr.mxu0 0.0
    %4136 = vmatpush1.msra.mxu0 0.0
    %4137 = vmatprep.subr.mxu0 0.0
    %4138 = vmatpush1.msra.mxu0 0.0
    %4139 = vmatprep.subr.mxu0 0.0
    %4140 = vmatpush1.msra.mxu0 0.0
    %4141 = vmatprep.subr.mxu0 0.0
    %4142 = vmatpush1.msra.mxu0 0.0
    %4143 = vmatprep.subr.mxu0 0.0
    %4144 = vmatpush1.msra.mxu0 0.0
    %4145 = vmatprep.subr.mxu0 0.0
    %4146 = vmatpush1.msra.mxu0 0.0
    %4147 = vmatprep.subr.mxu0 0.0
    %4148 = vmatpush1.msra.mxu0 0.0
    %4149 = vmatprep.subr.mxu0 0.0
    %4150 = vmatpush1.msra.mxu0 0.0
    %4151 = vmatprep.subr.mxu0 0.0
    %4152 = vmatpush1.msra.mxu0 0.0
    %4153 = vmatprep.subr.mxu0 0.0
    %4154 = vmatpush1.msra.mxu0 0.0
    %4155 = vmatprep.subr.mxu0 0.0
    %4156 = vmatpush1.msra.mxu0 0.0
    %4157 = vmatprep.subr.mxu0 0.0
    %4158 = vmatpush1.msra.mxu0 0.0
    %4159 = vmatprep.subr.mxu0 0.0
    %4160 = vmatpush1.msra.mxu0 0.0
    %4161 = vmatprep.subr.mxu0 0.0
    %4162 = vmatpush1.msra.mxu0 0.0
    %4163 = vmatprep.subr.mxu0 0.0
    %4164 = vmatpush1.msra.mxu0 0.0
    %4165 = vmatprep.subr.mxu0 0.0
    %4166 = vmatpush1.msra.mxu0 0.0
    %4167 = vmatprep.subr.mxu0 0.0
    %4168 = vmatpush1.msra.mxu0 0.0
    %4169 = vmatprep.subr.mxu0 0.0
    %4170 = vmatpush1.msra.mxu0 0.0
    %4171 = vmatprep.subr.mxu0 0.0
    %4172 = vmatpush1.msra.mxu0 0.0
    %4173 = vmatprep.subr.mxu0 0.0
    %4174 = vmatpush1.msra.mxu0 0.0
    %4175 = vmatprep.subr.mxu0 0.0
    %4176 = vmatpush1.msra.mxu0 0.0
    %4177 = vmatprep.subr.mxu0 0.0
    %4178 = vmatpush1.msra.mxu0 0.0
    %4179 = vmatprep.subr.mxu0 0.0
    %4180 = vmatpush1.msra.mxu0 0.0
    %4181 = vmatprep.subr.mxu0 0.0
    %4182 = vmatpush1.msra.mxu0 0.0
    %4183 = vmatprep.subr.mxu0 0.0
    %4184 = vmatpush1.msra.mxu0 0.0
    %4185 = vmatprep.subr.mxu0 0.0
    %4186 = vmatpush1.msra.mxu0 0.0
    %4187 = vmatprep.mubr.f32.mxu0 0.0
    %4188 = vmatmul.mubr.f32.gmra.mrb[0].mxu0 %v4121
    %v4189 = vpop.f32.mrb[0].mxu0
    %v4190 = vadd.f32 0.0, %v4189
    %v4191 = vpop.f32.mrb[0].mxu0
    %4192 = vdwg.mxu0
    %v4194 = vsel %vm2964, %v3137, 0
    %4196 = vmatprep.subr.mxu0 0.0
    %4197 = vmatpush1.msra.mxu0 %v100
    %4198 = vmatprep.subr.mxu0 0.0
    %4199 = vmatpush1.msra.mxu0 0.0
    %4200 = vmatprep.subr.mxu0 0.0
    %4201 = vmatpush1.msra.mxu0 0.0
    %4202 = vmatprep.subr.mxu0 0.0
    %4203 = vmatpush1.msra.mxu0 0.0
    %4204 = vmatprep.subr.mxu0 0.0
    %4205 = vmatpush1.msra.mxu0 0.0
    %4206 = vmatprep.subr.mxu0 0.0
    %4207 = vmatpush1.msra.mxu0 0.0
    %4208 = vmatprep.subr.mxu0 0.0
    %4209 = vmatpush1.msra.mxu0 0.0
    %4210 = vmatprep.subr.mxu0 0.0
    %4211 = vmatpush1.msra.mxu0 0.0
    %4212 = vmatprep.subr.mxu0 0.0
    %4213 = vmatpush1.msra.mxu0 0.0
    %4214 = vmatprep.subr.mxu0 0.0
    %4215 = vmatpush1.msra.mxu0 0.0
    %4216 = vmatprep.subr.mxu0 0.0
    %4217 = vmatpush1.msra.mxu0 0.0
    %4218 = vmatprep.subr.mxu0 0.0
    %4219 = vmatpush1.msra.mxu0 0.0
    %4220 = vmatprep.subr.mxu0 0.0
    %4221 = vmatpush1.msra.mxu0 0.0
    %4222 = vmatprep.subr.mxu0 0.0
    %4223 = vmatpush1.msra.mxu0 0.0
    %4224 = vmatprep.subr.mxu0 0.0
    %4225 = vmatpush1.msra.mxu0 0.0
    %4226 = vmatprep.subr.mxu0 0.0
    %4227 = vmatpush1.msra.mxu0 0.0
    %4228 = vmatprep.subr.mxu0 0.0
    %4229 = vmatpush1.msra.mxu0 0.0
    %4230 = vmatprep.subr.mxu0 0.0
    %4231 = vmatpush1.msra.mxu0 0.0
    %4232 = vmatprep.subr.mxu0 0.0
    %4233 = vmatpush1.msra.mxu0 0.0
    %4234 = vmatprep.subr.mxu0 0.0
    %4235 = vmatpush1.msra.mxu0 0.0
    %4236 = vmatprep.subr.mxu0 0.0
    %4237 = vmatpush1.msra.mxu0 0.0
    %4238 = vmatprep.subr.mxu0 0.0
    %4239 = vmatpush1.msra.mxu0 0.0
    %4240 = vmatprep.subr.mxu0 0.0
    %4241 = vmatpush1.msra.mxu0 0.0
    %4242 = vmatprep.subr.mxu0 0.0
    %4243 = vmatpush1.msra.mxu0 0.0
    %4244 = vmatprep.subr.mxu0 0.0
    %4245 = vmatpush1.msra.mxu0 0.0
    %4246 = vmatprep.subr.mxu0 0.0
    %4247 = vmatpush1.msra.mxu0 0.0
    %4248 = vmatprep.subr.mxu0 0.0
    %4249 = vmatpush1.msra.mxu0 0.0
    %4250 = vmatprep.subr.mxu0 0.0
    %4251 = vmatpush1.msra.mxu0 0.0
    %4252 = vmatprep.subr.mxu0 0.0
    %4253 = vmatpush1.msra.mxu0 0.0
    %4254 = vmatprep.subr.mxu0 0.0
    %4255 = vmatpush1.msra.mxu0 0.0
    %4256 = vmatprep.subr.mxu0 0.0
    %4257 = vmatpush1.msra.mxu0 0.0
    %4258 = vmatprep.subr.mxu0 0.0
    %4259 = vmatpush1.msra.mxu0 0.0
    %4260 = vmatprep.mubr.f32.mxu0 0.0
    %4261 = vmatmul.mubr.f32.gmra.mrb[0].mxu0 %v4194
    %v4262 = vpop.f32.mrb[0].mxu0
    %v4263 = vadd.f32 0.0, %v4262
    %v4264 = vpop.f32.mrb[0].mxu0
    %4265 = vdwg.mxu0
    %v4267 = vsel %vm2964, %v3138, 0
    %4269 = vmatprep.subr.mxu0 0.0
    %4270 = vmatpush1.msra.mxu0 %v101
    %4271 = vmatprep.subr.mxu0 0.0
    %4272 = vmatpush1.msra.mxu0 0.0
    %4273 = vmatprep.subr.mxu0 0.0
    %4274 = vmatpush1.msra.mxu0 0.0
    %4275 = vmatprep.subr.mxu0 0.0
    %4276 = vmatpush1.msra.mxu0 0.0
    %4277 = vmatprep.subr.mxu0 0.0
    %4278 = vmatpush1.msra.mxu0 0.0
    %4279 = vmatprep.subr.mxu0 0.0
    %4280 = vmatpush1.msra.mxu0 0.0
    %4281 = vmatprep.subr.mxu0 0.0
    %4282 = vmatpush1.msra.mxu0 0.0
    %4283 = vmatprep.subr.mxu0 0.0
    %4284 = vmatpush1.msra.mxu0 0.0
    %4285 = vmatprep.subr.mxu0 0.0
    %4286 = vmatpush1.msra.mxu0 0.0
    %4287 = vmatprep.subr.mxu0 0.0
    %4288 = vmatpush1.msra.mxu0 0.0
    %4289 = vmatprep.subr.mxu0 0.0
    %4290 = vmatpush1.msra.mxu0 0.0
    %4291 = vmatprep.subr.mxu0 0.0
    %4292 = vmatpush1.msra.mxu0 0.0
    %4293 = vmatprep.subr.mxu0 0.0
    %4294 = vmatpush1.msra.mxu0 0.0
    %4295 = vmatprep.subr.mxu0 0.0
    %4296 = vmatpush1.msra.mxu0 0.0
    %4297 = vmatprep.subr.mxu0 0.0
    %4298 = vmatpush1.msra.mxu0 0.0
    %4299 = vmatprep.subr.mxu0 0.0
    %4300 = vmatpush1.msra.mxu0 0.0
    %4301 = vmatprep.subr.mxu0 0.0
    %4302 = vmatpush1.msra.mxu0 0.0
    %4303 = vmatprep.subr.mxu0 0.0
    %4304 = vmatpush1.msra.mxu0 0.0
    %4305 = vmatprep.subr.mxu0 0.0
    %4306 = vmatpush1.msra.mxu0 0.0
    %4307 = vmatprep.subr.mxu0 0.0
    %4308 = vmatpush1.msra.mxu0 0.0
    %4309 = vmatprep.subr.mxu0 0.0
    %4310 = vmatpush1.msra.mxu0 0.0
    %4311 = vmatprep.subr.mxu0 0.0
    %4312 = vmatpush1.msra.mxu0 0.0
    %4313 = vmatprep.subr.mxu0 0.0
    %4314 = vmatpush1.msra.mxu0 0.0
    %4315 = vmatprep.subr.mxu0 0.0
    %4316 = vmatpush1.msra.mxu0 0.0
    %4317 = vmatprep.subr.mxu0 0.0
    %4318 = vmatpush1.msra.mxu0 0.0
    %4319 = vmatprep.subr.mxu0 0.0
    %4320 = vmatpush1.msra.mxu0 0.0
    %4321 = vmatprep.subr.mxu0 0.0
    %4322 = vmatpush1.msra.mxu0 0.0
    %4323 = vmatprep.subr.mxu0 0.0
    %4324 = vmatpush1.msra.mxu0 0.0
    %4325 = vmatprep.subr.mxu0 0.0
    %4326 = vmatpush1.msra.mxu0 0.0
    %4327 = vmatprep.subr.mxu0 0.0
    %4328 = vmatpush1.msra.mxu0 0.0
    %4329 = vmatprep.subr.mxu0 0.0
    %4330 = vmatpush1.msra.mxu0 0.0
    %4331 = vmatprep.subr.mxu0 0.0
    %4332 = vmatpush1.msra.mxu0 0.0
    %4333 = vmatprep.mubr.f32.mxu0 0.0
    %4334 = vmatmul.mubr.f32.gmra.mrb[0].mxu0 %v4267
    %v4335 = vpop.f32.mrb[0].mxu0
    %v4336 = vadd.f32 0.0, %v4335
    %v4337 = vpop.f32.mrb[0].mxu0
    %4338 = vdwg.mxu0
    %v4340 = vsel %vm2964, %v3139, 0
    %4342 = vmatprep.subr.mxu0 0.0
    %4343 = vmatpush1.msra.mxu0 %v102
    %4344 = vmatprep.subr.mxu0 0.0
    %4345 = vmatpush1.msra.mxu0 0.0
    %4346 = vmatprep.subr.mxu0 0.0
    %4347 = vmatpush1.msra.mxu0 0.0
    %4348 = vmatprep.subr.mxu0 0.0
    %4349 = vmatpush1.msra.mxu0 0.0
    %4350 = vmatprep.subr.mxu0 0.0
    %4351 = vmatpush1.msra.mxu0 0.0
    %4352 = vmatprep.subr.mxu0 0.0
    %4353 = vmatpush1.msra.mxu0 0.0
    %4354 = vmatprep.subr.mxu0 0.0
    %4355 = vmatpush1.msra.mxu0 0.0
    %4356 = vmatprep.subr.mxu0 0.0
    %4357 = vmatpush1.msra.mxu0 0.0
    %4358 = vmatprep.subr.mxu0 0.0
    %4359 = vmatpush1.msra.mxu0 0.0
    %4360 = vmatprep.subr.mxu0 0.0
    %4361 = vmatpush1.msra.mxu0 0.0
    %4362 = vmatprep.subr.mxu0 0.0
    %4363 = vmatpush1.msra.mxu0 0.0
    %4364 = vmatprep.subr.mxu0 0.0
    %4365 = vmatpush1.msra.mxu0 0.0
    %4366 = vmatprep.subr.mxu0 0.0
    %4367 = vmatpush1.msra.mxu0 0.0
    %4368 = vmatprep.subr.mxu0 0.0
    %4369 = vmatpush1.msra.mxu0 0.0
    %4370 = vmatprep.subr.mxu0 0.0
    %4371 = vmatpush1.msra.mxu0 0.0
    %4372 = vmatprep.subr.mxu0 0.0
    %4373 = vmatpush1.msra.mxu0 0.0
    %4374 = vmatprep.subr.mxu0 0.0
    %4375 = vmatpush1.msra.mxu0 0.0
    %4376 = vmatprep.subr.mxu0 0.0
    %4377 = vmatpush1.msra.mxu0 0.0
    %4378 = vmatprep.subr.mxu0 0.0
    %4379 = vmatpush1.msra.mxu0 0.0
    %4380 = vmatprep.subr.mxu0 0.0
    %4381 = vmatpush1.msra.mxu0 0.0
    %4382 = vmatprep.subr.mxu0 0.0
    %4383 = vmatpush1.msra.mxu0 0.0
    %4384 = vmatprep.subr.mxu0 0.0
    %4385 = vmatpush1.msra.mxu0 0.0
    %4386 = vmatprep.subr.mxu0 0.0
    %4387 = vmatpush1.msra.mxu0 0.0
    %4388 = vmatprep.subr.mxu0 0.0
    %4389 = vmatpush1.msra.mxu0 0.0
    %4390 = vmatprep.subr.mxu0 0.0
    %4391 = vmatpush1.msra.mxu0 0.0
    %4392 = vmatprep.subr.mxu0 0.0
    %4393 = vmatpush1.msra.mxu0 0.0
    %4394 = vmatprep.subr.mxu0 0.0
    %4395 = vmatpush1.msra.mxu0 0.0
    %4396 = vmatprep.subr.mxu0 0.0
    %4397 = vmatpush1.msra.mxu0 0.0
    %4398 = vmatprep.subr.mxu0 0.0
    %4399 = vmatpush1.msra.mxu0 0.0
    %4400 = vmatprep.subr.mxu0 0.0
    %4401 = vmatpush1.msra.mxu0 0.0
    %4402 = vmatprep.subr.mxu0 0.0
    %4403 = vmatpush1.msra.mxu0 0.0
    %4404 = vmatprep.subr.mxu0 0.0
    %4405 = vmatpush1.msra.mxu0 0.0
    %4406 = vmatprep.mubr.f32.mxu0 0.0
    %4407 = vmatmul.mubr.f32.gmra.mrb[0].mxu0 %v4340
    %v4408 = vpop.f32.mrb[0].mxu0
    %v4409 = vadd.f32 0.0, %v4408
    %v4410 = vpop.f32.mrb[0].mxu0
    %4411 = vdwg.mxu0
    %v4413 = vsel %vm2964, %v3140, 0
    %4415 = vmatprep.subr.mxu0 0.0
    %4416 = vmatpush1.msra.mxu0 %v103
    %4417 = vmatprep.subr.mxu0 0.0
    %4418 = vmatpush1.msra.mxu0 0.0
    %4419 = vmatprep.subr.mxu0 0.0
    %4420 = vmatpush1.msra.mxu0 0.0
    %4421 = vmatprep.subr.mxu0 0.0
    %4422 = vmatpush1.msra.mxu0 0.0
    %4423 = vmatprep.subr.mxu0 0.0
    %4424 = vmatpush1.msra.mxu0 0.0
    %4425 = vmatprep.subr.mxu0 0.0
    %4426 = vmatpush1.msra.mxu0 0.0
    %4427 = vmatprep.subr.mxu0 0.0
    %4428 = vmatpush1.msra.mxu0 0.0
    %4429 = vmatprep.subr.mxu0 0.0
    %4430 = vmatpush1.msra.mxu0 0.0
    %4431 = vmatprep.subr.mxu0 0.0
    %4432 = vmatpush1.msra.mxu0 0.0
    %4433 = vmatprep.subr.mxu0 0.0
    %4434 = vmatpush1.msra.mxu0 0.0
    %4435 = vmatprep.subr.mxu0 0.0
    %4436 = vmatpush1.msra.mxu0 0.0
    %4437 = vmatprep.subr.mxu0 0.0
    %4438 = vmatpush1.msra.mxu0 0.0
    %4439 = vmatprep.subr.mxu0 0.0
    %4440 = vmatpush1.msra.mxu0 0.0
    %4441 = vmatprep.subr.mxu0 0.0
    %4442 = vmatpush1.msra.mxu0 0.0
    %4443 = vmatprep.subr.mxu0 0.0
    %4444 = vmatpush1.msra.mxu0 0.0
    %4445 = vmatprep.subr.mxu0 0.0
    %4446 = vmatpush1.msra.mxu0 0.0
    %4447 = vmatprep.subr.mxu0 0.0
    %4448 = vmatpush1.msra.mxu0 0.0
    %4449 = vmatprep.subr.mxu0 0.0
    %4450 = vmatpush1.msra.mxu0 0.0
    %4451 = vmatprep.subr.mxu0 0.0
    %4452 = vmatpush1.msra.mxu0 0.0
    %4453 = vmatprep.subr.mxu0 0.0
    %4454 = vmatpush1.msra.mxu0 0.0
    %4455 = vmatprep.subr.mxu0 0.0
    %4456 = vmatpush1.msra.mxu0 0.0
    %4457 = vmatprep.subr.mxu0 0.0
    %4458 = vmatpush1.msra.mxu0 0.0
    %4459 = vmatprep.subr.mxu0 0.0
    %4460 = vmatpush1.msra.mxu0 0.0
    %4461 = vmatprep.subr.mxu0 0.0
    %4462 = vmatpush1.msra.mxu0 0.0
    %4463 = vmatprep.subr.mxu0 0.0
    %4464 = vmatpush1.msra.mxu0 0.0
    %4465 = vmatprep.subr.mxu0 0.0
    %4466 = vmatpush1.msra.mxu0 0.0
    %4467 = vmatprep.subr.mxu0 0.0
    %4468 = vmatpush1.msra.mxu0 0.0
    %4469 = vmatprep.subr.mxu0 0.0
    %4470 = vmatpush1.msra.mxu0 0.0
    %4471 = vmatprep.subr.mxu0 0.0
    %4472 = vmatpush1.msra.mxu0 0.0
    %4473 = vmatprep.subr.mxu0 0.0
    %4474 = vmatpush1.msra.mxu0 0.0
    %4475 = vmatprep.subr.mxu0 0.0
    %4476 = vmatpush1.msra.mxu0 0.0
    %4477 = vmatprep.subr.mxu0 0.0
    %4478 = vmatpush1.msra.mxu0 0.0
    %4479 = vmatprep.mubr.f32.mxu0 0.0
    %4480 = vmatmul.mubr.f32.gmra.mrb[0].mxu0 %v4413
    %v4481 = vpop.f32.mrb[0].mxu0
    %v4482 = vadd.f32 0.0, %v4481
    %v4483 = vpop.f32.mrb[0].mxu0
    %4484 = vdwg.mxu0
    %v4486 = vsel %vm2964, %v3301, 0
    %4488 = vmatprep.subr.mxu0 0.0
    %4489 = vmatpush1.msra.mxu0 %v72
    %4490 = vmatprep.subr.mxu0 0.0
    %4491 = vmatpush1.msra.mxu0 0.0
    %4492 = vmatprep.subr.mxu0 0.0
    %4493 = vmatpush1.msra.mxu0 0.0
    %4494 = vmatprep.subr.mxu0 0.0
    %4495 = vmatpush1.msra.mxu0 0.0
    %4496 = vmatprep.subr.mxu0 0.0
    %4497 = vmatpush1.msra.mxu0 0.0
    %4498 = vmatprep.subr.mxu0 0.0
    %4499 = vmatpush1.msra.mxu0 0.0
    %4500 = vmatprep.subr.mxu0 0.0
    %4501 = vmatpush1.msra.mxu0 0.0
    %4502 = vmatprep.subr.mxu0 0.0
    %4503 = vmatpush1.msra.mxu0 0.0
    %4504 = vmatprep.subr.mxu0 0.0
    %4505 = vmatpush1.msra.mxu0 0.0
    %4506 = vmatprep.subr.mxu0 0.0
    %4507 = vmatpush1.msra.mxu0 0.0
    %4508 = vmatprep.subr.mxu0 0.0
    %4509 = vmatpush1.msra.mxu0 0.0
    %4510 = vmatprep.subr.mxu0 0.0
    %4511 = vmatpush1.msra.mxu0 0.0
    %4512 = vmatprep.subr.mxu0 0.0
    %4513 = vmatpush1.msra.mxu0 0.0
    %4514 = vmatprep.subr.mxu0 0.0
    %4515 = vmatpush1.msra.mxu0 0.0
    %4516 = vmatprep.subr.mxu0 0.0
    %4517 = vmatpush1.msra.mxu0 0.0
    %4518 = vmatprep.subr.mxu0 0.0
    %4519 = vmatpush1.msra.mxu0 0.0
    %4520 = vmatprep.subr.mxu0 0.0
    %4521 = vmatpush1.msra.mxu0 0.0
    %4522 = vmatprep.subr.mxu0 0.0
    %4523 = vmatpush1.msra.mxu0 0.0
    %4524 = vmatprep.subr.mxu0 0.0
    %4525 = vmatpush1.msra.mxu0 0.0
    %4526 = vmatprep.subr.mxu0 0.0
    %4527 = vmatpush1.msra.mxu0 0.0
    %4528 = vmatprep.subr.mxu0 0.0
    %4529 = vmatpush1.msra.mxu0 0.0
    %4530 = vmatprep.subr.mxu0 0.0
    %4531 = vmatpush1.msra.mxu0 0.0
    %4532 = vmatprep.subr.mxu0 0.0
    %4533 = vmatpush1.msra.mxu0 0.0
    %4534 = vmatprep.subr.mxu0 0.0
    %4535 = vmatpush1.msra.mxu0 0.0
    %4536 = vmatprep.subr.mxu0 0.0
    %4537 = vmatpush1.msra.mxu0 0.0
    %4538 = vmatprep.subr.mxu0 0.0
    %4539 = vmatpush1.msra.mxu0 0.0
    %4540 = vmatprep.subr.mxu0 0.0
    %4541 = vmatpush1.msra.mxu0 0.0
    %4542 = vmatprep.subr.mxu0 0.0
    %4543 = vmatpush1.msra.mxu0 0.0
    %4544 = vmatprep.subr.mxu0 0.0
    %4545 = vmatpush1.msra.mxu0 0.0
    %4546 = vmatprep.subr.mxu0 0.0
    %4547 = vmatpush1.msra.mxu0 0.0
    %4548 = vmatprep.subr.mxu0 0.0
    %4549 = vmatpush1.msra.mxu0 0.0
    %4550 = vmatprep.subr.mxu0 0.0
    %4551 = vmatpush1.msra.mxu0 0.0
    %4552 = vmatprep.mubr.f32.mxu0 0.0
    %4553 = vmatmul.mubr.f32.gmra.mrb[0].mxu0 %v4486
    %v4554 = vpop.f32.mrb[0].mxu0
    %v4555 = vadd.f32 0.0, %v4554
    %v4556 = vpop.f32.mrb[0].mxu0
    %4557 = vdwg.mxu0
    %v4559 = vsel %vm2964, %v3302, 0
    %4561 = vmatprep.subr.mxu0 0.0
    %4562 = vmatpush1.msra.mxu0 %v73
    %4563 = vmatprep.subr.mxu0 0.0
    %4564 = vmatpush1.msra.mxu0 0.0
    %4565 = vmatprep.subr.mxu0 0.0
    %4566 = vmatpush1.msra.mxu0 0.0
    %4567 = vmatprep.subr.mxu0 0.0
    %4568 = vmatpush1.msra.mxu0 0.0
    %4569 = vmatprep.subr.mxu0 0.0
    %4570 = vmatpush1.msra.mxu0 0.0
    %4571 = vmatprep.subr.mxu0 0.0
    %4572 = vmatpush1.msra.mxu0 0.0
    %4573 = vmatprep.subr.mxu0 0.0
    %4574 = vmatpush1.msra.mxu0 0.0
    %4575 = vmatprep.subr.mxu0 0.0
    %4576 = vmatpush1.msra.mxu0 0.0
    %4577 = vmatprep.subr.mxu0 0.0
    %4578 = vmatpush1.msra.mxu0 0.0
    %4579 = vmatprep.subr.mxu0 0.0
    %4580 = vmatpush1.msra.mxu0 0.0
    %4581 = vmatprep.subr.mxu0 0.0
    %4582 = vmatpush1.msra.mxu0 0.0
    %4583 = vmatprep.subr.mxu0 0.0
    %4584 = vmatpush1.msra.mxu0 0.0
    %4585 = vmatprep.subr.mxu0 0.0
    %4586 = vmatpush1.msra.mxu0 0.0
    %4587 = vmatprep.subr.mxu0 0.0
    %4588 = vmatpush1.msra.mxu0 0.0
    %4589 = vmatprep.subr.mxu0 0.0
    %4590 = vmatpush1.msra.mxu0 0.0
    %4591 = vmatprep.subr.mxu0 0.0
    %4592 = vmatpush1.msra.mxu0 0.0
    %4593 = vmatprep.subr.mxu0 0.0
    %4594 = vmatpush1.msra.mxu0 0.0
    %4595 = vmatprep.subr.mxu0 0.0
    %4596 = vmatpush1.msra.mxu0 0.0
    %4597 = vmatprep.subr.mxu0 0.0
    %4598 = vmatpush1.msra.mxu0 0.0
    %4599 = vmatprep.subr.mxu0 0.0
    %4600 = vmatpush1.msra.mxu0 0.0
    %4601 = vmatprep.subr.mxu0 0.0
    %4602 = vmatpush1.msra.mxu0 0.0
    %4603 = vmatprep.subr.mxu0 0.0
    %4604 = vmatpush1.msra.mxu0 0.0
    %4605 = vmatprep.subr.mxu0 0.0
    %4606 = vmatpush1.msra.mxu0 0.0
    %4607 = vmatprep.subr.mxu0 0.0
    %4608 = vmatpush1.msra.mxu0 0.0
    %4609 = vmatprep.subr.mxu0 0.0
    %4610 = vmatpush1.msra.mxu0 0.0
    %4611 = vmatprep.subr.mxu0 0.0
    %4612 = vmatpush1.msra.mxu0 0.0
    %4613 = vmatprep.subr.mxu0 0.0
    %4614 = vmatpush1.msra.mxu0 0.0
    %4615 = vmatprep.subr.mxu0 0.0
    %4616 = vmatpush1.msra.mxu0 0.0
    %4617 = vmatprep.subr.mxu0 0.0
    %4618 = vmatpush1.msra.mxu0 0.0
    %4619 = vmatprep.subr.mxu0 0.0
    %4620 = vmatpush1.msra.mxu0 0.0
    %4621 = vmatprep.subr.mxu0 0.0
    %4622 = vmatpush1.msra.mxu0 0.0
    %4623 = vmatprep.subr.mxu0 0.0
    %4624 = vmatpush1.msra.mxu0 0.0
    %4625 = vmatprep.mubr.f32.mxu0 0.0
    %4626 = vmatmul.mubr.f32.gmra.mrb[0].mxu0 %v4559
    %v4627 = vpop.f32.mrb[0].mxu0
    %v4628 = vadd.f32 0.0, %v4627
    %v4629 = vpop.f32.mrb[0].mxu0
    %4630 = vdwg.mxu0
    %v4632 = vsel %vm2964, %v3303, 0
    %4634 = vmatprep.subr.mxu0 0.0
    %4635 = vmatpush1.msra.mxu0 %v74
    %4636 = vmatprep.subr.mxu0 0.0
    %4637 = vmatpush1.msra.mxu0 0.0
    %4638 = vmatprep.subr.mxu0 0.0
    %4639 = vmatpush1.msra.mxu0 0.0
    %4640 = vmatprep.subr.mxu0 0.0
    %4641 = vmatpush1.msra.mxu0 0.0
    %4642 = vmatprep.subr.mxu0 0.0
    %4643 = vmatpush1.msra.mxu0 0.0
    %4644 = vmatprep.subr.mxu0 0.0
    %4645 = vmatpush1.msra.mxu0 0.0
    %4646 = vmatprep.subr.mxu0 0.0
    %4647 = vmatpush1.msra.mxu0 0.0
    %4648 = vmatprep.subr.mxu0 0.0
    %4649 = vmatpush1.msra.mxu0 0.0
    %4650 = vmatprep.subr.mxu0 0.0
    %4651 = vmatpush1.msra.mxu0 0.0
    %4652 = vmatprep.subr.mxu0 0.0
    %4653 = vmatpush1.msra.mxu0 0.0
    %4654 = vmatprep.subr.mxu0 0.0
    %4655 = vmatpush1.msra.mxu0 0.0
    %4656 = vmatprep.subr.mxu0 0.0
    %4657 = vmatpush1.msra.mxu0 0.0
    %4658 = vmatprep.subr.mxu0 0.0
    %4659 = vmatpush1.msra.mxu0 0.0
    %4660 = vmatprep.subr.mxu0 0.0
    %4661 = vmatpush1.msra.mxu0 0.0
    %4662 = vmatprep.subr.mxu0 0.0
    %4663 = vmatpush1.msra.mxu0 0.0
    %4664 = vmatprep.subr.mxu0 0.0
    %4665 = vmatpush1.msra.mxu0 0.0
    %4666 = vmatprep.subr.mxu0 0.0
    %4667 = vmatpush1.msra.mxu0 0.0
    %4668 = vmatprep.subr.mxu0 0.0
    %4669 = vmatpush1.msra.mxu0 0.0
    %4670 = vmatprep.subr.mxu0 0.0
    %4671 = vmatpush1.msra.mxu0 0.0
    %4672 = vmatprep.subr.mxu0 0.0
    %4673 = vmatpush1.msra.mxu0 0.0
    %4674 = vmatprep.subr.mxu0 0.0
    %4675 = vmatpush1.msra.mxu0 0.0
    %4676 = vmatprep.subr.mxu0 0.0
    %4677 = vmatpush1.msra.mxu0 0.0
    %4678 = vmatprep.subr.mxu0 0.0
    %4679 = vmatpush1.msra.mxu0 0.0
    %4680 = vmatprep.subr.mxu0 0.0
    %4681 = vmatpush1.msra.mxu0 0.0
    %4682 = vmatprep.subr.mxu0 0.0
    %4683 = vmatpush1.msra.mxu0 0.0
    %4684 = vmatprep.subr.mxu0 0.0
    %4685 = vmatpush1.msra.mxu0 0.0
    %4686 = vmatprep.subr.mxu0 0.0
    %4687 = vmatpush1.msra.mxu0 0.0
    %4688 = vmatprep.subr.mxu0 0.0
    %4689 = vmatpush1.msra.mxu0 0.0
    %4690 = vmatprep.subr.mxu0 0.0
    %4691 = vmatpush1.msra.mxu0 0.0
    %4692 = vmatprep.subr.mxu0 0.0
    %4693 = vmatpush1.msra.mxu0 0.0
    %4694 = vmatprep.subr.mxu0 0.0
    %4695 = vmatpush1.msra.mxu0 0.0
    %4696 = vmatprep.subr.mxu0 0.0
    %4697 = vmatpush1.msra.mxu0 0.0
    %4698 = vmatprep.mubr.f32.mxu0 0.0
    %4699 = vmatmul.mubr.f32.gmra.mrb[0].mxu0 %v4632
    %v4700 = vpop.f32.mrb[0].mxu0
    %v4701 = vadd.f32 0.0, %v4700
    %v4702 = vpop.f32.mrb[0].mxu0
    %4703 = vdwg.mxu0
    %v4705 = vsel %vm2964, %v3304, 0
    %4707 = vmatprep.subr.mxu0 0.0
    %4708 = vmatpush1.msra.mxu0 %v75
    %4709 = vmatprep.subr.mxu0 0.0
    %4710 = vmatpush1.msra.mxu0 0.0
    %4711 = vmatprep.subr.mxu0 0.0
    %4712 = vmatpush1.msra.mxu0 0.0
    %4713 = vmatprep.subr.mxu0 0.0
    %4714 = vmatpush1.msra.mxu0 0.0
    %4715 = vmatprep.subr.mxu0 0.0
    %4716 = vmatpush1.msra.mxu0 0.0
    %4717 = vmatprep.subr.mxu0 0.0
    %4718 = vmatpush1.msra.mxu0 0.0
    %4719 = vmatprep.subr.mxu0 0.0
    %4720 = vmatpush1.msra.mxu0 0.0
    %4721 = vmatprep.subr.mxu0 0.0
    %4722 = vmatpush1.msra.mxu0 0.0
    %4723 = vmatprep.subr.mxu0 0.0
    %4724 = vmatpush1.msra.mxu0 0.0
    %4725 = vmatprep.subr.mxu0 0.0
    %4726 = vmatpush1.msra.mxu0 0.0
    %4727 = vmatprep.subr.mxu0 0.0
    %4728 = vmatpush1.msra.mxu0 0.0
    %4729 = vmatprep.subr.mxu0 0.0
    %4730 = vmatpush1.msra.mxu0 0.0
    %4731 = vmatprep.subr.mxu0 0.0
    %4732 = vmatpush1.msra.mxu0 0.0
    %4733 = vmatprep.subr.mxu0 0.0
    %4734 = vmatpush1.msra.mxu0 0.0
    %4735 = vmatprep.subr.mxu0 0.0
    %4736 = vmatpush1.msra.mxu0 0.0
    %4737 = vmatprep.subr.mxu0 0.0
    %4738 = vmatpush1.msra.mxu0 0.0
    %4739 = vmatprep.subr.mxu0 0.0
    %4740 = vmatpush1.msra.mxu0 0.0
    %4741 = vmatprep.subr.mxu0 0.0
    %4742 = vmatpush1.msra.mxu0 0.0
    %4743 = vmatprep.subr.mxu0 0.0
    %4744 = vmatpush1.msra.mxu0 0.0
    %4745 = vmatprep.subr.mxu0 0.0
    %4746 = vmatpush1.msra.mxu0 0.0
    %4747 = vmatprep.subr.mxu0 0.0
    %4748 = vmatpush1.msra.mxu0 0.0
    %4749 = vmatprep.subr.mxu0 0.0
    %4750 = vmatpush1.msra.mxu0 0.0
    %4751 = vmatprep.subr.mxu0 0.0
    %4752 = vmatpush1.msra.mxu0 0.0
    %4753 = vmatprep.subr.mxu0 0.0
    %4754 = vmatpush1.msra.mxu0 0.0
    %4755 = vmatprep.subr.mxu0 0.0
    %4756 = vmatpush1.msra.mxu0 0.0
    %4757 = vmatprep.subr.mxu0 0.0
    %4758 = vmatpush1.msra.mxu0 0.0
    %4759 = vmatprep.subr.mxu0 0.0
    %4760 = vmatpush1.msra.mxu0 0.0
    %4761 = vmatprep.subr.mxu0 0.0
    %4762 = vmatpush1.msra.mxu0 0.0
    %4763 = vmatprep.subr.mxu0 0.0
    %4764 = vmatpush1.msra.mxu0 0.0
    %4765 = vmatprep.subr.mxu0 0.0
    %4766 = vmatpush1.msra.mxu0 0.0
    %4767 = vmatprep.subr.mxu0 0.0
    %4768 = vmatpush1.msra.mxu0 0.0
    %4769 = vmatprep.subr.mxu0 0.0
    %4770 = vmatpush1.msra.mxu0 0.0
    %4771 = vmatprep.mubr.f32.mxu0 0.0
    %4772 = vmatmul.mubr.f32.gmra.mrb[0].mxu0 %v4705
    %v4773 = vpop.f32.mrb[0].mxu0
    %v4774 = vadd.f32 0.0, %v4773
    %v4775 = vpop.f32.mrb[0].mxu0
    %4776 = vdwg.mxu0
    %v4778 = vsel %vm2964, %v3305, 0
    %4780 = vmatprep.subr.mxu0 0.0
    %4781 = vmatpush1.msra.mxu0 %v76
    %4782 = vmatprep.subr.mxu0 0.0
    %4783 = vmatpush1.msra.mxu0 0.0
    %4784 = vmatprep.subr.mxu0 0.0
    %4785 = vmatpush1.msra.mxu0 0.0
    %4786 = vmatprep.subr.mxu0 0.0
    %4787 = vmatpush1.msra.mxu0 0.0
    %4788 = vmatprep.subr.mxu0 0.0
    %4789 = vmatpush1.msra.mxu0 0.0
    %4790 = vmatprep.subr.mxu0 0.0
    %4791 = vmatpush1.msra.mxu0 0.0
    %4792 = vmatprep.subr.mxu0 0.0
    %4793 = vmatpush1.msra.mxu0 0.0
    %4794 = vmatprep.subr.mxu0 0.0
    %4795 = vmatpush1.msra.mxu0 0.0
    %4796 = vmatprep.subr.mxu0 0.0
    %4797 = vmatpush1.msra.mxu0 0.0
    %4798 = vmatprep.subr.mxu0 0.0
    %4799 = vmatpush1.msra.mxu0 0.0
    %4800 = vmatprep.subr.mxu0 0.0
    %4801 = vmatpush1.msra.mxu0 0.0
    %4802 = vmatprep.subr.mxu0 0.0
    %4803 = vmatpush1.msra.mxu0 0.0
    %4804 = vmatprep.subr.mxu0 0.0
    %4805 = vmatpush1.msra.mxu0 0.0
    %4806 = vmatprep.subr.mxu0 0.0
    %4807 = vmatpush1.msra.mxu0 0.0
    %4808 = vmatprep.subr.mxu0 0.0
    %4809 = vmatpush1.msra.mxu0 0.0
    %4810 = vmatprep.subr.mxu0 0.0
    %4811 = vmatpush1.msra.mxu0 0.0
    %4812 = vmatprep.subr.mxu0 0.0
    %4813 = vmatpush1.msra.mxu0 0.0
    %4814 = vmatprep.subr.mxu0 0.0
    %4815 = vmatpush1.msra.mxu0 0.0
    %4816 = vmatprep.subr.mxu0 0.0
    %4817 = vmatpush1.msra.mxu0 0.0
    %4818 = vmatprep.subr.mxu0 0.0
    %4819 = vmatpush1.msra.mxu0 0.0
    %4820 = vmatprep.subr.mxu0 0.0
    %4821 = vmatpush1.msra.mxu0 0.0
    %4822 = vmatprep.subr.mxu0 0.0
    %4823 = vmatpush1.msra.mxu0 0.0
    %4824 = vmatprep.subr.mxu0 0.0
    %4825 = vmatpush1.msra.mxu0 0.0
    %4826 = vmatprep.subr.mxu0 0.0
    %4827 = vmatpush1.msra.mxu0 0.0
    %4828 = vmatprep.subr.mxu0 0.0
    %4829 = vmatpush1.msra.mxu0 0.0
    %4830 = vmatprep.subr.mxu0 0.0
    %4831 = vmatpush1.msra.mxu0 0.0
    %4832 = vmatprep.subr.mxu0 0.0
    %4833 = vmatpush1.msra.mxu0 0.0
    %4834 = vmatprep.subr.mxu0 0.0
    %4835 = vmatpush1.msra.mxu0 0.0
    %4836 = vmatprep.subr.mxu0 0.0
    %4837 = vmatpush1.msra.mxu0 0.0
    %4838 = vmatprep.subr.mxu0 0.0
    %4839 = vmatpush1.msra.mxu0 0.0
    %4840 = vmatprep.subr.mxu0 0.0
    %4841 = vmatpush1.msra.mxu0 0.0
    %4842 = vmatprep.subr.mxu0 0.0
    %4843 = vmatpush1.msra.mxu0 0.0
    %4844 = vmatprep.mubr.f32.mxu0 0.0
    %4845 = vmatmul.mubr.f32.gmra.mrb[0].mxu0 %v4778
    %v4846 = vpop.f32.mrb[0].mxu0
    %v4847 = vadd.f32 0.0, %v4846
    %v4848 = vpop.f32.mrb[0].mxu0
    %4849 = vdwg.mxu0
    %v4851 = vsel %vm2964, %v3306, 0
    %4853 = vmatprep.subr.mxu0 0.0
    %4854 = vmatpush1.msra.mxu0 %v77
    %4855 = vmatprep.subr.mxu0 0.0
    %4856 = vmatpush1.msra.mxu0 0.0
    %4857 = vmatprep.subr.mxu0 0.0
    %4858 = vmatpush1.msra.mxu0 0.0
    %4859 = vmatprep.subr.mxu0 0.0
    %4860 = vmatpush1.msra.mxu0 0.0
    %4861 = vmatprep.subr.mxu0 0.0
    %4862 = vmatpush1.msra.mxu0 0.0
    %4863 = vmatprep.subr.mxu0 0.0
    %4864 = vmatpush1.msra.mxu0 0.0
    %4865 = vmatprep.subr.mxu0 0.0
    %4866 = vmatpush1.msra.mxu0 0.0
    %4867 = vmatprep.subr.mxu0 0.0
    %4868 = vmatpush1.msra.mxu0 0.0
    %4869 = vmatprep.subr.mxu0 0.0
    %4870 = vmatpush1.msra.mxu0 0.0
    %4871 = vmatprep.subr.mxu0 0.0
    %4872 = vmatpush1.msra.mxu0 0.0
    %4873 = vmatprep.subr.mxu0 0.0
    %4874 = vmatpush1.msra.mxu0 0.0
    %4875 = vmatprep.subr.mxu0 0.0
    %4876 = vmatpush1.msra.mxu0 0.0
    %4877 = vmatprep.subr.mxu0 0.0
    %4878 = vmatpush1.msra.mxu0 0.0
    %4879 = vmatprep.subr.mxu0 0.0
    %4880 = vmatpush1.msra.mxu0 0.0
    %4881 = vmatprep.subr.mxu0 0.0
    %4882 = vmatpush1.msra.mxu0 0.0
    %4883 = vmatprep.subr.mxu0 0.0
    %4884 = vmatpush1.msra.mxu0 0.0
    %4885 = vmatprep.subr.mxu0 0.0
    %4886 = vmatpush1.msra.mxu0 0.0
    %4887 = vmatprep.subr.mxu0 0.0
    %4888 = vmatpush1.msra.mxu0 0.0
    %4889 = vmatprep.subr.mxu0 0.0
    %4890 = vmatpush1.msra.mxu0 0.0
    %4891 = vmatprep.subr.mxu0 0.0
    %4892 = vmatpush1.msra.mxu0 0.0
    %4893 = vmatprep.subr.mxu0 0.0
    %4894 = vmatpush1.msra.mxu0 0.0
    %4895 = vmatprep.subr.mxu0 0.0
    %4896 = vmatpush1.msra.mxu0 0.0
    %4897 = vmatprep.subr.mxu0 0.0
    %4898 = vmatpush1.msra.mxu0 0.0
    %4899 = vmatprep.subr.mxu0 0.0
    %4900 = vmatpush1.msra.mxu0 0.0
    %4901 = vmatprep.subr.mxu0 0.0
    %4902 = vmatpush1.msra.mxu0 0.0
    %4903 = vmatprep.subr.mxu0 0.0
    %4904 = vmatpush1.msra.mxu0 0.0
    %4905 = vmatprep.subr.mxu0 0.0
    %4906 = vmatpush1.msra.mxu0 0.0
    %4907 = vmatprep.subr.mxu0 0.0
    %4908 = vmatpush1.msra.mxu0 0.0
    %4909 = vmatprep.subr.mxu0 0.0
    %4910 = vmatpush1.msra.mxu0 0.0
    %4911 = vmatprep.subr.mxu0 0.0
    %4912 = vmatpush1.msra.mxu0 0.0
    %4913 = vmatprep.subr.mxu0 0.0
    %4914 = vmatpush1.msra.mxu0 0.0
    %4915 = vmatprep.subr.mxu0 0.0
    %4916 = vmatpush1.msra.mxu0 0.0
    %4917 = vmatprep.mubr.f32.mxu0 0.0
    %4918 = vmatmul.mubr.f32.gmra.mrb[0].mxu0 %v4851
    %v4919 = vpop.f32.mrb[0].mxu0
    %v4920 = vadd.f32 0.0, %v4919
    %v4921 = vpop.f32.mrb[0].mxu0
    %4922 = vdwg.mxu0
    %v4924 = vsel %vm2964, %v3307, 0
    %4926 = vmatprep.subr.mxu0 0.0
    %4927 = vmatpush1.msra.mxu0 %v78
    %4928 = vmatprep.subr.mxu0 0.0
    %4929 = vmatpush1.msra.mxu0 0.0
    %4930 = vmatprep.subr.mxu0 0.0
    %4931 = vmatpush1.msra.mxu0 0.0
    %4932 = vmatprep.subr.mxu0 0.0
    %4933 = vmatpush1.msra.mxu0 0.0
    %4934 = vmatprep.subr.mxu0 0.0
    %4935 = vmatpush1.msra.mxu0 0.0
    %4936 = vmatprep.subr.mxu0 0.0
    %4937 = vmatpush1.msra.mxu0 0.0
    %4938 = vmatprep.subr.mxu0 0.0
    %4939 = vmatpush1.msra.mxu0 0.0
    %4940 = vmatprep.subr.mxu0 0.0
    %4941 = vmatpush1.msra.mxu0 0.0
    %4942 = vmatprep.subr.mxu0 0.0
    %4943 = vmatpush1.msra.mxu0 0.0
    %4944 = vmatprep.subr.mxu0 0.0
    %4945 = vmatpush1.msra.mxu0 0.0
    %4946 = vmatprep.subr.mxu0 0.0
    %4947 = vmatpush1.msra.mxu0 0.0
    %4948 = vmatprep.subr.mxu0 0.0
    %4949 = vmatpush1.msra.mxu0 0.0
    %4950 = vmatprep.subr.mxu0 0.0
    %4951 = vmatpush1.msra.mxu0 0.0
    %4952 = vmatprep.subr.mxu0 0.0
    %4953 = vmatpush1.msra.mxu0 0.0
    %4954 = vmatprep.subr.mxu0 0.0
    %4955 = vmatpush1.msra.mxu0 0.0
    %4956 = vmatprep.subr.mxu0 0.0
    %4957 = vmatpush1.msra.mxu0 0.0
    %4958 = vmatprep.subr.mxu0 0.0
    %4959 = vmatpush1.msra.mxu0 0.0
    %4960 = vmatprep.subr.mxu0 0.0
    %4961 = vmatpush1.msra.mxu0 0.0
    %4962 = vmatprep.subr.mxu0 0.0
    %4963 = vmatpush1.msra.mxu0 0.0
    %4964 = vmatprep.subr.mxu0 0.0
    %4965 = vmatpush1.msra.mxu0 0.0
    %4966 = vmatprep.subr.mxu0 0.0
    %4967 = vmatpush1.msra.mxu0 0.0
    %4968 = vmatprep.subr.mxu0 0.0
    %4969 = vmatpush1.msra.mxu0 0.0
    %4970 = vmatprep.subr.mxu0 0.0
    %4971 = vmatpush1.msra.mxu0 0.0
    %4972 = vmatprep.subr.mxu0 0.0
    %4973 = vmatpush1.msra.mxu0 0.0
    %4974 = vmatprep.subr.mxu0 0.0
    %4975 = vmatpush1.msra.mxu0 0.0
    %4976 = vmatprep.subr.mxu0 0.0
    %4977 = vmatpush1.msra.mxu0 0.0
    %4978 = vmatprep.subr.mxu0 0.0
    %4979 = vmatpush1.msra.mxu0 0.0
    %4980 = vmatprep.subr.mxu0 0.0
    %4981 = vmatpush1.msra.mxu0 0.0
    %4982 = vmatprep.subr.mxu0 0.0
    %4983 = vmatpush1.msra.mxu0 0.0
    %4984 = vmatprep.subr.mxu0 0.0
    %4985 = vmatpush1.msra.mxu0 0.0
    %4986 = vmatprep.subr.mxu0 0.0
    %4987 = vmatpush1.msra.mxu0 0.0
    %4988 = vmatprep.subr.mxu0 0.0
    %4989 = vmatpush1.msra.mxu0 0.0
    %4990 = vmatprep.mubr.f32.mxu0 0.0
    %4991 = vmatmul.mubr.f32.gmra.mrb[0].mxu0 %v4924
    %v4992 = vpop.f32.mrb[0].mxu0
    %v4993 = vadd.f32 0.0, %v4992
    %v4994 = vpop.f32.mrb[0].mxu0
    %4995 = vdwg.mxu0
    %v4997 = vsel %vm2964, %v3308, 0
    %4999 = vmatprep.subr.mxu0 0.0
    %5000 = vmatpush1.msra.mxu0 %v79
    %5001 = vmatprep.subr.mxu0 0.0
    %5002 = vmatpush1.msra.mxu0 0.0
    %5003 = vmatprep.subr.mxu0 0.0
    %5004 = vmatpush1.msra.mxu0 0.0
    %5005 = vmatprep.subr.mxu0 0.0
    %5006 = vmatpush1.msra.mxu0 0.0
    %5007 = vmatprep.subr.mxu0 0.0
    %5008 = vmatpush1.msra.mxu0 0.0
    %5009 = vmatprep.subr.mxu0 0.0
    %5010 = vmatpush1.msra.mxu0 0.0
    %5011 = vmatprep.subr.mxu0 0.0
    %5012 = vmatpush1.msra.mxu0 0.0
    %5013 = vmatprep.subr.mxu0 0.0
    %5014 = vmatpush1.msra.mxu0 0.0
    %5015 = vmatprep.subr.mxu0 0.0
    %5016 = vmatpush1.msra.mxu0 0.0
    %5017 = vmatprep.subr.mxu0 0.0
    %5018 = vmatpush1.msra.mxu0 0.0
    %5019 = vmatprep.subr.mxu0 0.0
    %5020 = vmatpush1.msra.mxu0 0.0
    %5021 = vmatprep.subr.mxu0 0.0
    %5022 = vmatpush1.msra.mxu0 0.0
    %5023 = vmatprep.subr.mxu0 0.0
    %5024 = vmatpush1.msra.mxu0 0.0
    %5025 = vmatprep.subr.mxu0 0.0
    %5026 = vmatpush1.msra.mxu0 0.0
    %5027 = vmatprep.subr.mxu0 0.0
    %5028 = vmatpush1.msra.mxu0 0.0
    %5029 = vmatprep.subr.mxu0 0.0
    %5030 = vmatpush1.msra.mxu0 0.0
    %5031 = vmatprep.subr.mxu0 0.0
    %5032 = vmatpush1.msra.mxu0 0.0
    %5033 = vmatprep.subr.mxu0 0.0
    %5034 = vmatpush1.msra.mxu0 0.0
    %5035 = vmatprep.subr.mxu0 0.0
    %5036 = vmatpush1.msra.mxu0 0.0
    %5037 = vmatprep.subr.mxu0 0.0
    %5038 = vmatpush1.msra.mxu0 0.0
    %5039 = vmatprep.subr.mxu0 0.0
    %5040 = vmatpush1.msra.mxu0 0.0
    %5041 = vmatprep.subr.mxu0 0.0
    %5042 = vmatpush1.msra.mxu0 0.0
    %5043 = vmatprep.subr.mxu0 0.0
    %5044 = vmatpush1.msra.mxu0 0.0
    %5045 = vmatprep.subr.mxu0 0.0
    %5046 = vmatpush1.msra.mxu0 0.0
    %5047 = vmatprep.subr.mxu0 0.0
    %5048 = vmatpush1.msra.mxu0 0.0
    %5049 = vmatprep.subr.mxu0 0.0
    %5050 = vmatpush1.msra.mxu0 0.0
    %5051 = vmatprep.subr.mxu0 0.0
    %5052 = vmatpush1.msra.mxu0 0.0
    %5053 = vmatprep.subr.mxu0 0.0
    %5054 = vmatpush1.msra.mxu0 0.0
    %5055 = vmatprep.subr.mxu0 0.0
    %5056 = vmatpush1.msra.mxu0 0.0
    %5057 = vmatprep.subr.mxu0 0.0
    %5058 = vmatpush1.msra.mxu0 0.0
    %5059 = vmatprep.subr.mxu0 0.0
    %5060 = vmatpush1.msra.mxu0 0.0
    %5061 = vmatprep.subr.mxu0 0.0
    %5062 = vmatpush1.msra.mxu0 0.0
    %5063 = vmatprep.mubr.f32.mxu0 0.0
    %5064 = vmatmul.mubr.f32.gmra.mrb[0].mxu0 %v4997
    %v5065 = vpop.f32.mrb[0].mxu0
    %v5066 = vadd.f32 0.0, %v5065
    %v5067 = vpop.f32.mrb[0].mxu0
    %5068 = vdwg.mxu0
    %v5070 = vsel %vm2964, %v3309, 0
    %5072 = vmatprep.subr.mxu0 0.0
    %5073 = vmatpush1.msra.mxu0 %v80
    %5074 = vmatprep.subr.mxu0 0.0
    %5075 = vmatpush1.msra.mxu0 0.0
    %5076 = vmatprep.subr.mxu0 0.0
    %5077 = vmatpush1.msra.mxu0 0.0
    %5078 = vmatprep.subr.mxu0 0.0
    %5079 = vmatpush1.msra.mxu0 0.0
    %5080 = vmatprep.subr.mxu0 0.0
    %5081 = vmatpush1.msra.mxu0 0.0
    %5082 = vmatprep.subr.mxu0 0.0
    %5083 = vmatpush1.msra.mxu0 0.0
    %5084 = vmatprep.subr.mxu0 0.0
    %5085 = vmatpush1.msra.mxu0 0.0
    %5086 = vmatprep.subr.mxu0 0.0
    %5087 = vmatpush1.msra.mxu0 0.0
    %5088 = vmatprep.subr.mxu0 0.0
    %5089 = vmatpush1.msra.mxu0 0.0
    %5090 = vmatprep.subr.mxu0 0.0
    %5091 = vmatpush1.msra.mxu0 0.0
    %5092 = vmatprep.subr.mxu0 0.0
    %5093 = vmatpush1.msra.mxu0 0.0
    %5094 = vmatprep.subr.mxu0 0.0
    %5095 = vmatpush1.msra.mxu0 0.0
    %5096 = vmatprep.subr.mxu0 0.0
    %5097 = vmatpush1.msra.mxu0 0.0
    %5098 = vmatprep.subr.mxu0 0.0
    %5099 = vmatpush1.msra.mxu0 0.0
    %5100 = vmatprep.subr.mxu0 0.0
    %5101 = vmatpush1.msra.mxu0 0.0
    %5102 = vmatprep.subr.mxu0 0.0
    %5103 = vmatpush1.msra.mxu0 0.0
    %5104 = vmatprep.subr.mxu0 0.0
    %5105 = vmatpush1.msra.mxu0 0.0
    %5106 = vmatprep.subr.mxu0 0.0
    %5107 = vmatpush1.msra.mxu0 0.0
    %5108 = vmatprep.subr.mxu0 0.0
    %5109 = vmatpush1.msra.mxu0 0.0
    %5110 = vmatprep.subr.mxu0 0.0
    %5111 = vmatpush1.msra.mxu0 0.0
    %5112 = vmatprep.subr.mxu0 0.0
    %5113 = vmatpush1.msra.mxu0 0.0
    %5114 = vmatprep.subr.mxu0 0.0
    %5115 = vmatpush1.msra.mxu0 0.0
    %5116 = vmatprep.subr.mxu0 0.0
    %5117 = vmatpush1.msra.mxu0 0.0
    %5118 = vmatprep.subr.mxu0 0.0
    %5119 = vmatpush1.msra.mxu0 0.0
    %5120 = vmatprep.subr.mxu0 0.0
    %5121 = vmatpush1.msra.mxu0 0.0
    %5122 = vmatprep.subr.mxu0 0.0
    %5123 = vmatpush1.msra.mxu0 0.0
    %5124 = vmatprep.subr.mxu0 0.0
    %5125 = vmatpush1.msra.mxu0 0.0
    %5126 = vmatprep.subr.mxu0 0.0
    %5127 = vmatpush1.msra.mxu0 0.0
    %5128 = vmatprep.subr.mxu0 0.0
    %5129 = vmatpush1.msra.mxu0 0.0
    %5130 = vmatprep.subr.mxu0 0.0
    %5131 = vmatpush1.msra.mxu0 0.0
    %5132 = vmatprep.subr.mxu0 0.0
    %5133 = vmatpush1.msra.mxu0 0.0
    %5134 = vmatprep.subr.mxu0 0.0
    %5135 = vmatpush1.msra.mxu0 0.0
    %5136 = vmatprep.mubr.f32.mxu0 0.0
    %5137 = vmatmul.mubr.f32.gmra.mrb[0].mxu0 %v5070
    %v5138 = vpop.f32.mrb[0].mxu0
    %v5139 = vadd.f32 0.0, %v5138
    %v5140 = vpop.f32.mrb[0].mxu0
    %5141 = vdwg.mxu0
    %v5143 = vsel %vm2964, %v3310, 0
    %5145 = vmatprep.subr.mxu0 0.0
    %5146 = vmatpush1.msra.mxu0 %v81
    %5147 = vmatprep.subr.mxu0 0.0
    %5148 = vmatpush1.msra.mxu0 0.0
    %5149 = vmatprep.subr.mxu0 0.0
    %5150 = vmatpush1.msra.mxu0 0.0
    %5151 = vmatprep.subr.mxu0 0.0
    %5152 = vmatpush1.msra.mxu0 0.0
    %5153 = vmatprep.subr.mxu0 0.0
    %5154 = vmatpush1.msra.mxu0 0.0
    %5155 = vmatprep.subr.mxu0 0.0
    %5156 = vmatpush1.msra.mxu0 0.0
    %5157 = vmatprep.subr.mxu0 0.0
    %5158 = vmatpush1.msra.mxu0 0.0
    %5159 = vmatprep.subr.mxu0 0.0
    %5160 = vmatpush1.msra.mxu0 0.0
    %5161 = vmatprep.subr.mxu0 0.0
    %5162 = vmatpush1.msra.mxu0 0.0
    %5163 = vmatprep.subr.mxu0 0.0
    %5164 = vmatpush1.msra.mxu0 0.0
    %5165 = vmatprep.subr.mxu0 0.0
    %5166 = vmatpush1.msra.mxu0 0.0
    %5167 = vmatprep.subr.mxu0 0.0
    %5168 = vmatpush1.msra.mxu0 0.0
    %5169 = vmatprep.subr.mxu0 0.0
    %5170 = vmatpush1.msra.mxu0 0.0
    %5171 = vmatprep.subr.mxu0 0.0
    %5172 = vmatpush1.msra.mxu0 0.0
    %5173 = vmatprep.subr.mxu0 0.0
    %5174 = vmatpush1.msra.mxu0 0.0
    %5175 = vmatprep.subr.mxu0 0.0
    %5176 = vmatpush1.msra.mxu0 0.0
    %5177 = vmatprep.subr.mxu0 0.0
    %5178 = vmatpush1.msra.mxu0 0.0
    %5179 = vmatprep.subr.mxu0 0.0
    %5180 = vmatpush1.msra.mxu0 0.0
    %5181 = vmatprep.subr.mxu0 0.0
    %5182 = vmatpush1.msra.mxu0 0.0
    %5183 = vmatprep.subr.mxu0 0.0
    %5184 = vmatpush1.msra.mxu0 0.0
    %5185 = vmatprep.subr.mxu0 0.0
    %5186 = vmatpush1.msra.mxu0 0.0
    %5187 = vmatprep.subr.mxu0 0.0
    %5188 = vmatpush1.msra.mxu0 0.0
    %5189 = vmatprep.subr.mxu0 0.0
    %5190 = vmatpush1.msra.mxu0 0.0
    %5191 = vmatprep.subr.mxu0 0.0
    %5192 = vmatpush1.msra.mxu0 0.0
    %5193 = vmatprep.subr.mxu0 0.0
    %5194 = vmatpush1.msra.mxu0 0.0
    %5195 = vmatprep.subr.mxu0 0.0
    %5196 = vmatpush1.msra.mxu0 0.0
    %5197 = vmatprep.subr.mxu0 0.0
    %5198 = vmatpush1.msra.mxu0 0.0
    %5199 = vmatprep.subr.mxu0 0.0
    %5200 = vmatpush1.msra.mxu0 0.0
    %5201 = vmatprep.subr.mxu0 0.0
    %5202 = vmatpush1.msra.mxu0 0.0
    %5203 = vmatprep.subr.mxu0 0.0
    %5204 = vmatpush1.msra.mxu0 0.0
    %5205 = vmatprep.subr.mxu0 0.0
    %5206 = vmatpush1.msra.mxu0 0.0
    %5207 = vmatprep.subr.mxu0 0.0
    %5208 = vmatpush1.msra.mxu0 0.0
    %5209 = vmatprep.mubr.f32.mxu0 0.0
    %5210 = vmatmul.mubr.f32.gmra.mrb[0].mxu0 %v5143
    %v5211 = vpop.f32.mrb[0].mxu0
    %v5212 = vadd.f32 0.0, %v5211
    %v5213 = vpop.f32.mrb[0].mxu0
    %5214 = vdwg.mxu0
    %v5216 = vsel %vm2964, %v3311, 0
    %5218 = vmatprep.subr.mxu0 0.0
    %5219 = vmatpush1.msra.mxu0 %v82
    %5220 = vmatprep.subr.mxu0 0.0
    %5221 = vmatpush1.msra.mxu0 0.0
    %5222 = vmatprep.subr.mxu0 0.0
    %5223 = vmatpush1.msra.mxu0 0.0
    %5224 = vmatprep.subr.mxu0 0.0
    %5225 = vmatpush1.msra.mxu0 0.0
    %5226 = vmatprep.subr.mxu0 0.0
    %5227 = vmatpush1.msra.mxu0 0.0
    %5228 = vmatprep.subr.mxu0 0.0
    %5229 = vmatpush1.msra.mxu0 0.0
    %5230 = vmatprep.subr.mxu0 0.0
    %5231 = vmatpush1.msra.mxu0 0.0
    %5232 = vmatprep.subr.mxu0 0.0
    %5233 = vmatpush1.msra.mxu0 0.0
    %5234 = vmatprep.subr.mxu0 0.0
    %5235 = vmatpush1.msra.mxu0 0.0
    %5236 = vmatprep.subr.mxu0 0.0
    %5237 = vmatpush1.msra.mxu0 0.0
    %5238 = vmatprep.subr.mxu0 0.0
    %5239 = vmatpush1.msra.mxu0 0.0
    %5240 = vmatprep.subr.mxu0 0.0
    %5241 = vmatpush1.msra.mxu0 0.0
    %5242 = vmatprep.subr.mxu0 0.0
    %5243 = vmatpush1.msra.mxu0 0.0
    %5244 = vmatprep.subr.mxu0 0.0
    %5245 = vmatpush1.msra.mxu0 0.0
    %5246 = vmatprep.subr.mxu0 0.0
    %5247 = vmatpush1.msra.mxu0 0.0
    %5248 = vmatprep.subr.mxu0 0.0
    %5249 = vmatpush1.msra.mxu0 0.0
    %5250 = vmatprep.subr.mxu0 0.0
    %5251 = vmatpush1.msra.mxu0 0.0
    %5252 = vmatprep.subr.mxu0 0.0
    %5253 = vmatpush1.msra.mxu0 0.0
    %5254 = vmatprep.subr.mxu0 0.0
    %5255 = vmatpush1.msra.mxu0 0.0
    %5256 = vmatprep.subr.mxu0 0.0
    %5257 = vmatpush1.msra.mxu0 0.0
    %5258 = vmatprep.subr.mxu0 0.0
    %5259 = vmatpush1.msra.mxu0 0.0
    %5260 = vmatprep.subr.mxu0 0.0
    %5261 = vmatpush1.msra.mxu0 0.0
    %5262 = vmatprep.subr.mxu0 0.0
    %5263 = vmatpush1.msra.mxu0 0.0
    %5264 = vmatprep.subr.mxu0 0.0
    %5265 = vmatpush1.msra.mxu0 0.0
    %5266 = vmatprep.subr.mxu0 0.0
    %5267 = vmatpush1.msra.mxu0 0.0
    %5268 = vmatprep.subr.mxu0 0.0
    %5269 = vmatpush1.msra.mxu0 0.0
    %5270 = vmatprep.subr.mxu0 0.0
    %5271 = vmatpush1.msra.mxu0 0.0
    %5272 = vmatprep.subr.mxu0 0.0
    %5273 = vmatpush1.msra.mxu0 0.0
    %5274 = vmatprep.subr.mxu0 0.0
    %5275 = vmatpush1.msra.mxu0 0.0
    %5276 = vmatprep.subr.mxu0 0.0
    %5277 = vmatpush1.msra.mxu0 0.0
    %5278 = vmatprep.subr.mxu0 0.0
    %5279 = vmatpush1.msra.mxu0 0.0
    %5280 = vmatprep.subr.mxu0 0.0
    %5281 = vmatpush1.msra.mxu0 0.0
    %5282 = vmatprep.mubr.f32.mxu0 0.0
    %5283 = vmatmul.mubr.f32.gmra.mrb[0].mxu0 %v5216
    %v5284 = vpop.f32.mrb[0].mxu0
    %v5285 = vadd.f32 0.0, %v5284
    %v5286 = vpop.f32.mrb[0].mxu0
    %5287 = vdwg.mxu0
    %v5289 = vsel %vm2964, %v3312, 0
    %5291 = vmatprep.subr.mxu0 0.0
    %5292 = vmatpush1.msra.mxu0 %v83
    %5293 = vmatprep.subr.mxu0 0.0
    %5294 = vmatpush1.msra.mxu0 0.0
    %5295 = vmatprep.subr.mxu0 0.0
    %5296 = vmatpush1.msra.mxu0 0.0
    %5297 = vmatprep.subr.mxu0 0.0
    %5298 = vmatpush1.msra.mxu0 0.0
    %5299 = vmatprep.subr.mxu0 0.0
    %5300 = vmatpush1.msra.mxu0 0.0
    %5301 = vmatprep.subr.mxu0 0.0
    %5302 = vmatpush1.msra.mxu0 0.0
    %5303 = vmatprep.subr.mxu0 0.0
    %5304 = vmatpush1.msra.mxu0 0.0
    %5305 = vmatprep.subr.mxu0 0.0
    %5306 = vmatpush1.msra.mxu0 0.0
    %5307 = vmatprep.subr.mxu0 0.0
    %5308 = vmatpush1.msra.mxu0 0.0
    %5309 = vmatprep.subr.mxu0 0.0
    %5310 = vmatpush1.msra.mxu0 0.0
    %5311 = vmatprep.subr.mxu0 0.0
    %5312 = vmatpush1.msra.mxu0 0.0
    %5313 = vmatprep.subr.mxu0 0.0
    %5314 = vmatpush1.msra.mxu0 0.0
    %5315 = vmatprep.subr.mxu0 0.0
    %5316 = vmatpush1.msra.mxu0 0.0
    %5317 = vmatprep.subr.mxu0 0.0
    %5318 = vmatpush1.msra.mxu0 0.0
    %5319 = vmatprep.subr.mxu0 0.0
    %5320 = vmatpush1.msra.mxu0 0.0
    %5321 = vmatprep.subr.mxu0 0.0
    %5322 = vmatpush1.msra.mxu0 0.0
    %5323 = vmatprep.subr.mxu0 0.0
    %5324 = vmatpush1.msra.mxu0 0.0
    %5325 = vmatprep.subr.mxu0 0.0
    %5326 = vmatpush1.msra.mxu0 0.0
    %5327 = vmatprep.subr.mxu0 0.0
    %5328 = vmatpush1.msra.mxu0 0.0
    %5329 = vmatprep.subr.mxu0 0.0
    %5330 = vmatpush1.msra.mxu0 0.0
    %5331 = vmatprep.subr.mxu0 0.0
    %5332 = vmatpush1.msra.mxu0 0.0
    %5333 = vmatprep.subr.mxu0 0.0
    %5334 = vmatpush1.msra.mxu0 0.0
    %5335 = vmatprep.subr.mxu0 0.0
    %5336 = vmatpush1.msra.mxu0 0.0
    %5337 = vmatprep.subr.mxu0 0.0
    %5338 = vmatpush1.msra.mxu0 0.0
    %5339 = vmatprep.subr.mxu0 0.0
    %5340 = vmatpush1.msra.mxu0 0.0
    %5341 = vmatprep.subr.mxu0 0.0
    %5342 = vmatpush1.msra.mxu0 0.0
    %5343 = vmatprep.subr.mxu0 0.0
    %5344 = vmatpush1.msra.mxu0 0.0
    %5345 = vmatprep.subr.mxu0 0.0
    %5346 = vmatpush1.msra.mxu0 0.0
    %5347 = vmatprep.subr.mxu0 0.0
    %5348 = vmatpush1.msra.mxu0 0.0
    %5349 = vmatprep.subr.mxu0 0.0
    %5350 = vmatpush1.msra.mxu0 0.0
    %5351 = vmatprep.subr.mxu0 0.0
    %5352 = vmatpush1.msra.mxu0 0.0
    %5353 = vmatprep.subr.mxu0 0.0
    %5354 = vmatpush1.msra.mxu0 0.0
    %5355 = vmatprep.mubr.f32.mxu0 0.0
    %5356 = vmatmul.mubr.f32.gmra.mrb[0].mxu0 %v5289
    %v5357 = vpop.f32.mrb[0].mxu0
    %v5358 = vadd.f32 0.0, %v5357
    %v5359 = vpop.f32.mrb[0].mxu0
    %5360 = vdwg.mxu0
    %v5362 = vsel %vm2964, %v3313, 0
    %5364 = vmatprep.subr.mxu0 0.0
    %5365 = vmatpush1.msra.mxu0 %v84
    %5366 = vmatprep.subr.mxu0 0.0
    %5367 = vmatpush1.msra.mxu0 0.0
    %5368 = vmatprep.subr.mxu0 0.0
    %5369 = vmatpush1.msra.mxu0 0.0
    %5370 = vmatprep.subr.mxu0 0.0
    %5371 = vmatpush1.msra.mxu0 0.0
    %5372 = vmatprep.subr.mxu0 0.0
    %5373 = vmatpush1.msra.mxu0 0.0
    %5374 = vmatprep.subr.mxu0 0.0
    %5375 = vmatpush1.msra.mxu0 0.0
    %5376 = vmatprep.subr.mxu0 0.0
    %5377 = vmatpush1.msra.mxu0 0.0
    %5378 = vmatprep.subr.mxu0 0.0
    %5379 = vmatpush1.msra.mxu0 0.0
    %5380 = vmatprep.subr.mxu0 0.0
    %5381 = vmatpush1.msra.mxu0 0.0
    %5382 = vmatprep.subr.mxu0 0.0
    %5383 = vmatpush1.msra.mxu0 0.0
    %5384 = vmatprep.subr.mxu0 0.0
    %5385 = vmatpush1.msra.mxu0 0.0
    %5386 = vmatprep.subr.mxu0 0.0
    %5387 = vmatpush1.msra.mxu0 0.0
    %5388 = vmatprep.subr.mxu0 0.0
    %5389 = vmatpush1.msra.mxu0 0.0
    %5390 = vmatprep.subr.mxu0 0.0
    %5391 = vmatpush1.msra.mxu0 0.0
    %5392 = vmatprep.subr.mxu0 0.0
    %5393 = vmatpush1.msra.mxu0 0.0
    %5394 = vmatprep.subr.mxu0 0.0
    %5395 = vmatpush1.msra.mxu0 0.0
    %5396 = vmatprep.subr.mxu0 0.0
    %5397 = vmatpush1.msra.mxu0 0.0
    %5398 = vmatprep.subr.mxu0 0.0
    %5399 = vmatpush1.msra.mxu0 0.0
    %5400 = vmatprep.subr.mxu0 0.0
    %5401 = vmatpush1.msra.mxu0 0.0
    %5402 = vmatprep.subr.mxu0 0.0
    %5403 = vmatpush1.msra.mxu0 0.0
    %5404 = vmatprep.subr.mxu0 0.0
    %5405 = vmatpush1.msra.mxu0 0.0
    %5406 = vmatprep.subr.mxu0 0.0
    %5407 = vmatpush1.msra.mxu0 0.0
    %5408 = vmatprep.subr.mxu0 0.0
    %5409 = vmatpush1.msra.mxu0 0.0
    %5410 = vmatprep.subr.mxu0 0.0
    %5411 = vmatpush1.msra.mxu0 0.0
    %5412 = vmatprep.subr.mxu0 0.0
    %5413 = vmatpush1.msra.mxu0 0.0
    %5414 = vmatprep.subr.mxu0 0.0
    %5415 = vmatpush1.msra.mxu0 0.0
    %5416 = vmatprep.subr.mxu0 0.0
    %5417 = vmatpush1.msra.mxu0 0.0
    %5418 = vmatprep.subr.mxu0 0.0
    %5419 = vmatpush1.msra.mxu0 0.0
    %5420 = vmatprep.subr.mxu0 0.0
    %5421 = vmatpush1.msra.mxu0 0.0
    %5422 = vmatprep.subr.mxu0 0.0
    %5423 = vmatpush1.msra.mxu0 0.0
    %5424 = vmatprep.subr.mxu0 0.0
    %5425 = vmatpush1.msra.mxu0 0.0
    %5426 = vmatprep.subr.mxu0 0.0
    %5427 = vmatpush1.msra.mxu0 0.0
    %5428 = vmatprep.mubr.f32.mxu0 0.0
    %5429 = vmatmul.mubr.f32.gmra.mrb[0].mxu0 %v5362
    %v5430 = vpop.f32.mrb[0].mxu0
    %v5431 = vadd.f32 0.0, %v5430
    %v5432 = vpop.f32.mrb[0].mxu0
    %5433 = vdwg.mxu0
    %v5435 = vsel %vm2964, %v3314, 0
    %5437 = vmatprep.subr.mxu0 0.0
    %5438 = vmatpush1.msra.mxu0 %v85
    %5439 = vmatprep.subr.mxu0 0.0
    %5440 = vmatpush1.msra.mxu0 0.0
    %5441 = vmatprep.subr.mxu0 0.0
    %5442 = vmatpush1.msra.mxu0 0.0
    %5443 = vmatprep.subr.mxu0 0.0
    %5444 = vmatpush1.msra.mxu0 0.0
    %5445 = vmatprep.subr.mxu0 0.0
    %5446 = vmatpush1.msra.mxu0 0.0
    %5447 = vmatprep.subr.mxu0 0.0
    %5448 = vmatpush1.msra.mxu0 0.0
    %5449 = vmatprep.subr.mxu0 0.0
    %5450 = vmatpush1.msra.mxu0 0.0
    %5451 = vmatprep.subr.mxu0 0.0
    %5452 = vmatpush1.msra.mxu0 0.0
    %5453 = vmatprep.subr.mxu0 0.0
    %5454 = vmatpush1.msra.mxu0 0.0
    %5455 = vmatprep.subr.mxu0 0.0
    %5456 = vmatpush1.msra.mxu0 0.0
    %5457 = vmatprep.subr.mxu0 0.0
    %5458 = vmatpush1.msra.mxu0 0.0
    %5459 = vmatprep.subr.mxu0 0.0
    %5460 = vmatpush1.msra.mxu0 0.0
    %5461 = vmatprep.subr.mxu0 0.0
    %5462 = vmatpush1.msra.mxu0 0.0
    %5463 = vmatprep.subr.mxu0 0.0
    %5464 = vmatpush1.msra.mxu0 0.0
    %5465 = vmatprep.subr.mxu0 0.0
    %5466 = vmatpush1.msra.mxu0 0.0
    %5467 = vmatprep.subr.mxu0 0.0
    %5468 = vmatpush1.msra.mxu0 0.0
    %5469 = vmatprep.subr.mxu0 0.0
    %5470 = vmatpush1.msra.mxu0 0.0
    %5471 = vmatprep.subr.mxu0 0.0
    %5472 = vmatpush1.msra.mxu0 0.0
    %5473 = vmatprep.subr.mxu0 0.0
    %5474 = vmatpush1.msra.mxu0 0.0
    %5475 = vmatprep.subr.mxu0 0.0
    %5476 = vmatpush1.msra.mxu0 0.0
    %5477 = vmatprep.subr.mxu0 0.0
    %5478 = vmatpush1.msra.mxu0 0.0
    %5479 = vmatprep.subr.mxu0 0.0
    %5480 = vmatpush1.msra.mxu0 0.0
    %5481 = vmatprep.subr.mxu0 0.0
    %5482 = vmatpush1.msra.mxu0 0.0
    %5483 = vmatprep.subr.mxu0 0.0
    %5484 = vmatpush1.msra.mxu0 0.0
    %5485 = vmatprep.subr.mxu0 0.0
    %5486 = vmatpush1.msra.mxu0 0.0
    %5487 = vmatprep.subr.mxu0 0.0
    %5488 = vmatpush1.msra.mxu0 0.0
    %5489 = vmatprep.subr.mxu0 0.0
    %5490 = vmatpush1.msra.mxu0 0.0
    %5491 = vmatprep.subr.mxu0 0.0
    %5492 = vmatpush1.msra.mxu0 0.0
    %5493 = vmatprep.subr.mxu0 0.0
    %5494 = vmatpush1.msra.mxu0 0.0
    %5495 = vmatprep.subr.mxu0 0.0
    %5496 = vmatpush1.msra.mxu0 0.0
    %5497 = vmatprep.subr.mxu0 0.0
    %5498 = vmatpush1.msra.mxu0 0.0
    %5499 = vmatprep.subr.mxu0 0.0
    %5500 = vmatpush1.msra.mxu0 0.0
    %5501 = vmatprep.mubr.f32.mxu0 0.0
    %5502 = vmatmul.mubr.f32.gmra.mrb[0].mxu0 %v5435
    %v5503 = vpop.f32.mrb[0].mxu0
    %v5504 = vadd.f32 0.0, %v5503
    %v5505 = vpop.f32.mrb[0].mxu0
    %5506 = vdwg.mxu0
    %v5508 = vsel %vm2964, %v3315, 0
    %5510 = vmatprep.subr.mxu0 0.0
    %5511 = vmatpush1.msra.mxu0 %v86
    %5512 = vmatprep.subr.mxu0 0.0
    %5513 = vmatpush1.msra.mxu0 0.0
    %5514 = vmatprep.subr.mxu0 0.0
    %5515 = vmatpush1.msra.mxu0 0.0
    %5516 = vmatprep.subr.mxu0 0.0
    %5517 = vmatpush1.msra.mxu0 0.0
    %5518 = vmatprep.subr.mxu0 0.0
    %5519 = vmatpush1.msra.mxu0 0.0
    %5520 = vmatprep.subr.mxu0 0.0
    %5521 = vmatpush1.msra.mxu0 0.0
    %5522 = vmatprep.subr.mxu0 0.0
    %5523 = vmatpush1.msra.mxu0 0.0
    %5524 = vmatprep.subr.mxu0 0.0
    %5525 = vmatpush1.msra.mxu0 0.0
    %5526 = vmatprep.subr.mxu0 0.0
    %5527 = vmatpush1.msra.mxu0 0.0
    %5528 = vmatprep.subr.mxu0 0.0
    %5529 = vmatpush1.msra.mxu0 0.0
    %5530 = vmatprep.subr.mxu0 0.0
    %5531 = vmatpush1.msra.mxu0 0.0
    %5532 = vmatprep.subr.mxu0 0.0
    %5533 = vmatpush1.msra.mxu0 0.0
    %5534 = vmatprep.subr.mxu0 0.0
    %5535 = vmatpush1.msra.mxu0 0.0
    %5536 = vmatprep.subr.mxu0 0.0
    %5537 = vmatpush1.msra.mxu0 0.0
    %5538 = vmatprep.subr.mxu0 0.0
    %5539 = vmatpush1.msra.mxu0 0.0
    %5540 = vmatprep.subr.mxu0 0.0
    %5541 = vmatpush1.msra.mxu0 0.0
    %5542 = vmatprep.subr.mxu0 0.0
    %5543 = vmatpush1.msra.mxu0 0.0
    %5544 = vmatprep.subr.mxu0 0.0
    %5545 = vmatpush1.msra.mxu0 0.0
    %5546 = vmatprep.subr.mxu0 0.0
    %5547 = vmatpush1.msra.mxu0 0.0
    %5548 = vmatprep.subr.mxu0 0.0
    %5549 = vmatpush1.msra.mxu0 0.0
    %5550 = vmatprep.subr.mxu0 0.0
    %5551 = vmatpush1.msra.mxu0 0.0
    %5552 = vmatprep.subr.mxu0 0.0
    %5553 = vmatpush1.msra.mxu0 0.0
    %5554 = vmatprep.subr.mxu0 0.0
    %5555 = vmatpush1.msra.mxu0 0.0
    %5556 = vmatprep.subr.mxu0 0.0
    %5557 = vmatpush1.msra.mxu0 0.0
    %5558 = vmatprep.subr.mxu0 0.0
    %5559 = vmatpush1.msra.mxu0 0.0
    %5560 = vmatprep.subr.mxu0 0.0
    %5561 = vmatpush1.msra.mxu0 0.0
    %5562 = vmatprep.subr.mxu0 0.0
    %5563 = vmatpush1.msra.mxu0 0.0
    %5564 = vmatprep.subr.mxu0 0.0
    %5565 = vmatpush1.msra.mxu0 0.0
    %5566 = vmatprep.subr.mxu0 0.0
    %5567 = vmatpush1.msra.mxu0 0.0
    %5568 = vmatprep.subr.mxu0 0.0
    %5569 = vmatpush1.msra.mxu0 0.0
    %5570 = vmatprep.subr.mxu0 0.0
    %5571 = vmatpush1.msra.mxu0 0.0
    %5572 = vmatprep.subr.mxu0 0.0
    %5573 = vmatpush1.msra.mxu0 0.0
    %5574 = vmatprep.mubr.f32.mxu0 0.0
    %5575 = vmatmul.mubr.f32.gmra.mrb[0].mxu0 %v5508
    %v5576 = vpop.f32.mrb[0].mxu0
    %v5577 = vadd.f32 0.0, %v5576
    %v5578 = vpop.f32.mrb[0].mxu0
    %5579 = vdwg.mxu0
    %v5581 = vsel %vm2964, %v3316, 0
    %5583 = vmatprep.subr.mxu0 0.0
    %5584 = vmatpush1.msra.mxu0 %v87
    %5585 = vmatprep.subr.mxu0 0.0
    %5586 = vmatpush1.msra.mxu0 0.0
    %5587 = vmatprep.subr.mxu0 0.0
    %5588 = vmatpush1.msra.mxu0 0.0
    %5589 = vmatprep.subr.mxu0 0.0
    %5590 = vmatpush1.msra.mxu0 0.0
    %5591 = vmatprep.subr.mxu0 0.0
    %5592 = vmatpush1.msra.mxu0 0.0
    %5593 = vmatprep.subr.mxu0 0.0
    %5594 = vmatpush1.msra.mxu0 0.0
    %5595 = vmatprep.subr.mxu0 0.0
    %5596 = vmatpush1.msra.mxu0 0.0
    %5597 = vmatprep.subr.mxu0 0.0
    %5598 = vmatpush1.msra.mxu0 0.0
    %5599 = vmatprep.subr.mxu0 0.0
    %5600 = vmatpush1.msra.mxu0 0.0
    %5601 = vmatprep.subr.mxu0 0.0
    %5602 = vmatpush1.msra.mxu0 0.0
    %5603 = vmatprep.subr.mxu0 0.0
    %5604 = vmatpush1.msra.mxu0 0.0
    %5605 = vmatprep.subr.mxu0 0.0
    %5606 = vmatpush1.msra.mxu0 0.0
    %5607 = vmatprep.subr.mxu0 0.0
    %5608 = vmatpush1.msra.mxu0 0.0
    %5609 = vmatprep.subr.mxu0 0.0
    %5610 = vmatpush1.msra.mxu0 0.0
    %5611 = vmatprep.subr.mxu0 0.0
    %5612 = vmatpush1.msra.mxu0 0.0
    %5613 = vmatprep.subr.mxu0 0.0
    %5614 = vmatpush1.msra.mxu0 0.0
    %5615 = vmatprep.subr.mxu0 0.0
    %5616 = vmatpush1.msra.mxu0 0.0
    %5617 = vmatprep.subr.mxu0 0.0
    %5618 = vmatpush1.msra.mxu0 0.0
    %5619 = vmatprep.subr.mxu0 0.0
    %5620 = vmatpush1.msra.mxu0 0.0
    %5621 = vmatprep.subr.mxu0 0.0
    %5622 = vmatpush1.msra.mxu0 0.0
    %5623 = vmatprep.subr.mxu0 0.0
    %5624 = vmatpush1.msra.mxu0 0.0
    %5625 = vmatprep.subr.mxu0 0.0
    %5626 = vmatpush1.msra.mxu0 0.0
    %5627 = vmatprep.subr.mxu0 0.0
    %5628 = vmatpush1.msra.mxu0 0.0
    %5629 = vmatprep.subr.mxu0 0.0
    %5630 = vmatpush1.msra.mxu0 0.0
    %5631 = vmatprep.subr.mxu0 0.0
    %5632 = vmatpush1.msra.mxu0 0.0
    %5633 = vmatprep.subr.mxu0 0.0
    %5634 = vmatpush1.msra.mxu0 0.0
    %5635 = vmatprep.subr.mxu0 0.0
    %5636 = vmatpush1.msra.mxu0 0.0
    %5637 = vmatprep.subr.mxu0 0.0
    %5638 = vmatpush1.msra.mxu0 0.0
    %5639 = vmatprep.subr.mxu0 0.0
    %5640 = vmatpush1.msra.mxu0 0.0
    %5641 = vmatprep.subr.mxu0 0.0
    %5642 = vmatpush1.msra.mxu0 0.0
    %5643 = vmatprep.subr.mxu0 0.0
    %5644 = vmatpush1.msra.mxu0 0.0
    %5645 = vmatprep.subr.mxu0 0.0
    %5646 = vmatpush1.msra.mxu0 0.0
    %5647 = vmatprep.mubr.f32.mxu0 0.0
    %5648 = vmatmul.mubr.f32.gmra.mrb[0].mxu0 %v5581
    %v5649 = vpop.f32.mrb[0].mxu0
    %v5650 = vadd.f32 0.0, %v5649
    %v5651 = vpop.f32.mrb[0].mxu0
    %5652 = vdwg.mxu0
    %5653 = vst.msk [vmem:[#allocation10] sm:$0xff] %vm105, %v3387
    %5654 = vst.msk [vmem:[#allocation10 + $0x8] sm:$0xff] %vm105, %v3460
    %5655 = vst.msk [vmem:[#allocation10 + $0x10] sm:$0xff] %vm105, %v3533
    %5656 = vst.msk [vmem:[#allocation10 + $0x18] sm:$0xff] %vm105, %v3606
    %5657 = vst.msk [vmem:[#allocation10 + $0x20] sm:$0xff] %vm105, %v3679
    %5658 = vst.msk [vmem:[#allocation10 + $0x28] sm:$0xff] %vm105, %v3752
    %5659 = vst.msk [vmem:[#allocation10 + $0x30] sm:$0xff] %vm105, %v3825
    %5660 = vst.msk [vmem:[#allocation10 + $0x38] sm:$0xff] %vm105, %v3898
    %5661 = vst.msk [vmem:[#allocation10 + $0x40] sm:$0xff] %vm105, %v3971
    %5662 = vst.msk [vmem:[#allocation10 + $0x48] sm:$0xff] %vm105, %v4044
    %5663 = vst.msk [vmem:[#allocation10 + $0x50] sm:$0xff] %vm105, %v4117
    %5664 = vst.msk [vmem:[#allocation10 + $0x58] sm:$0xff] %vm105, %v4190
    %5665 = vst.msk [vmem:[#allocation10 + $0x60] sm:$0xff] %vm105, %v4263
    %5666 = vst.msk [vmem:[#allocation10 + $0x68] sm:$0xff] %vm105, %v4336
    %5667 = vst.msk [vmem:[#allocation10 + $0x70] sm:$0xff] %vm105, %v4409
    %5668 = vst.msk [vmem:[#allocation10 + $0x78] sm:$0xff] %vm105, %v4482
    %5669 = vst.msk [vmem:[#allocation11] sm:$0xff] %vm105, %v4555
    %5670 = vst.msk [vmem:[#allocation11 + $0x8] sm:$0xff] %vm105, %v4628
    %5671 = vst.msk [vmem:[#allocation11 + $0x10] sm:$0xff] %vm105, %v4701
    %5672 = vst.msk [vmem:[#allocation11 + $0x18] sm:$0xff] %vm105, %v4774
    %5673 = vst.msk [vmem:[#allocation11 + $0x20] sm:$0xff] %vm105, %v4847
    %5674 = vst.msk [vmem:[#allocation11 + $0x28] sm:$0xff] %vm105, %v4920
    %5675 = vst.msk [vmem:[#allocation11 + $0x30] sm:$0xff] %vm105, %v4993
    %5676 = vst.msk [vmem:[#allocation11 + $0x38] sm:$0xff] %vm105, %v5066
    %5677 = vst.msk [vmem:[#allocation11 + $0x40] sm:$0xff] %vm105, %v5139
    %5678 = vst.msk [vmem:[#allocation11 + $0x48] sm:$0xff] %vm105, %v5212
    %5679 = vst.msk [vmem:[#allocation11 + $0x50] sm:$0xff] %vm105, %v5285
    %5680 = vst.msk [vmem:[#allocation11 + $0x58] sm:$0xff] %vm105, %v5358
    %5681 = vst.msk [vmem:[#allocation11 + $0x60] sm:$0xff] %vm105, %v5431
    %5682 = vst.msk [vmem:[#allocation11 + $0x68] sm:$0xff] %vm105, %v5504
    %5683 = vst.msk [vmem:[#allocation11 + $0x70] sm:$0xff] %vm105, %v5577
    %5684 = vst.msk [vmem:[#allocation11 + $0x78] sm:$0xff] %vm105, %v5650
    // Predicated region
    $region34: #{tpu_custom_call.1} parent=1 // pred_check
      _
    $region35: #{tpu_custom_call.1} parent=1 // pred_check_branch
      %5686 = sbr.rel (0) target = $region37
    $region36: #{tpu_custom_call.1} parent=1 // pred_region
      %s5688 = ssub.s32 2048, 2048
      %5689 = vsyncadd [#allocation4], %s5688
      %s5690 = sshll.u32 [#allocation10], 4
      %s5691 = int_to_ptr.vmem [resolvable:$true] %s5690
      %5696 = dma.vmem_to_hbm [thread:$0]  %s5691, 2048, %s4, [#allocation4], 128, 128, 8
    $region37: #{tpu_custom_call.1} parent=1 // pred_fallthru
      _
    // Predicated region
    $region38: #{tpu_custom_call.1} parent=1 // pred_check
      _
    $region39: #{tpu_custom_call.1} parent=1 // pred_check_branch
      %5698 = sbr.rel (0) target = $region41
    $region40: #{tpu_custom_call.1} parent=1 // pred_region
      %s5700 = ssub.s32 2048, 2048
      %5701 = vsyncadd [#allocation12], %s5700
      %s5702 = sshll.u32 [#allocation11], 4
      %s5703 = int_to_ptr.vmem [resolvable:$true] %s5702
      %5708 = dma.vmem_to_hbm [thread:$0]  %s5703, 2048, %s5, [#allocation12], 128, 128, 8
    $region41: #{tpu_custom_call.1} parent=1 // pred_fallthru
      _
    // Predicated region
    $region42: #{tpu_custom_call.1} parent=1 // pred_check
      _
    $region43: #{tpu_custom_call.1} parent=1 // pred_check_branch
      %5710 = sbr.rel (0) target = $region45
    $region44: #{tpu_custom_call.1} parent=1 // pred_region
      %5711 = dma.done [#allocation4], 2048
    $region45: #{tpu_custom_call.1} parent=1 // pred_fallthru
      _
    // Predicated region
    $region46: #{tpu_custom_call.1} parent=1 // pred_check
      _
    $region47: #{tpu_custom_call.1} parent=1 // pred_check_branch
      %5713 = sbr.rel (0) target = $region49
    $region48: #{tpu_custom_call.1} parent=1 // pred_region
      %5714 = dma.done [#allocation12], 2048
    $region49: #{tpu_custom_call.1} parent=1 // pred_fallthru
      _
    %5715 = vsyncpa [#allocation3], 1
    %5716 = vsyncpa [#allocation6], 1
    %5717 = vsyncpa [#allocation9], 1
    %5718 = vsyncpa [#allocation4], 1
    %5719 = vsyncpa [#allocation12], 1

</llo_original>
